<compile_context>
chip_gen: v7x
topology: tpu7x:2x2x1
jax: 0.10.0
libtpu: 0.0.40
codegen_flags: <defaults>
</compile_context>

<pallas_src>
import math
import functools

import jax
import jax.numpy as jnp
from jax.experimental import pallas as pl
from jax.experimental.pallas import tpu as pltpu

EDGE = 256                        # pad dims to multiples of 256 (fills v6e/v7x MXU)
VMEM_LIMIT = 48 * 1024 * 1024     # scoped VMEM limit (<= ~48 MiB: safe on v7x)
AGG_VMEM_BUDGET = 40 * 1024 * 1024
XW_VMEM_BUDGET = 40 * 1024 * 1024


def _pad_up(n, m):
    return ((n + m - 1) // m) * m


def _pick_tile(dim, cap):
    """Largest multiple of EDGE that divides `dim` (a multiple of EDGE) and is <= cap."""
    t = min(dim, (cap // EDGE) * EDGE)
    while dim % t:
        t -= EDGE
    return t


# ---------------------------------------------------------------------------
# Kernel A (resident-weight path): xw = x @ [W*s | W_self*s], single pass.
# The whole weight sits in VMEM; x streams through once, no accumulator scratch.
# ---------------------------------------------------------------------------
def _xw_resident_kernel(x_ref, w_ref, out_ref):
    out_ref[...] = jnp.dot(x_ref[...], w_ref[...],
                           preferred_element_type=jnp.float32).astype(out_ref.dtype)


# Kernel A (fallback path): k-tiled matmul with f32 accumulator (large weights only).
def _matmul_acc_kernel(a_ref, b_ref, out_ref, acc_ref):
    k = pl.program_id(2)

    @pl.when(k == 0)
    def _():
        acc_ref[...] = jnp.zeros_like(acc_ref)

    acc_ref[...] += jnp.dot(a_ref[...], b_ref[...],
                            preferred_element_type=jnp.float32)

    @pl.when(k == pl.num_programs(2) - 1)
    def _():
        out_ref[...] = acc_ref[...].astype(out_ref.dtype)


def fused_xw_matmul(x_bf16, w_cat_bf16):
    """xw = x @ [W*s | W_self*s] : one MXU pass over x for both GCN terms (bf16 out)."""
    n, f = x_bf16.shape
    f2, h2 = w_cat_bf16.shape
    assert f == f2
    cost = pl.CostEstimate(flops=2 * n * f * h2, transcendentals=0,
                           bytes_accessed=2 * (n * f + f * h2 + n * h2))

    w_bytes = f * h2 * 2
    if w_bytes <= XW_VMEM_BUDGET // 3:
        # Resident-weight streaming matmul.
        tm = _pick_tile(n, 512)
        if n // tm == 1 and tm > 128:
            tm //= 2                     # keep >= 2 parallel blocks (v7x dual TC)
        # shrink tm if double-buffered x/out tiles + resident weight overflow budget
        while tm > 128 and (2 * (tm * f * 2 + tm * h2 * 2) + 2 * w_bytes) > XW_VMEM_BUDGET:
            tm //= 2
        return pl.pallas_call(
            _xw_resident_kernel,
            out_shape=jax.ShapeDtypeStruct((n, h2), jnp.bfloat16),
            grid_spec=pltpu.PrefetchScalarGridSpec(
                num_scalar_prefetch=0,
                grid=(n // tm,),
                in_specs=[
                    pl.BlockSpec((tm, f), lambda i: (i, 0)),     # x tile
                    pl.BlockSpec((f, h2), lambda i: (0, 0)),     # resident [W | W_self]
                ],
                out_specs=pl.BlockSpec((tm, h2), lambda i: (i, 0)),
            ),
            compiler_params=pltpu.CompilerParams(
                dimension_semantics=("parallel",),
                vmem_limit_bytes=VMEM_LIMIT,
            ),
            cost_estimate=cost,
        )(x_bf16, w_cat_bf16)

    # Fallback: tiled over (i, j, k) with an accumulator (only for very large weights).
    tm = _pick_tile(n, 512)
    tn = _pick_tile(h2, 1024)
    tk = _pick_tile(f, 512)
    return pl.pallas_call(
        _matmul_acc_kernel,
        out_shape=jax.ShapeDtypeStruct((n, h2), jnp.bfloat16),
        grid_spec=pltpu.PrefetchScalarGridSpec(
            num_scalar_prefetch=0,
            grid=(n // tm, h2 // tn, f // tk),
            in_specs=[
                pl.BlockSpec((tm, tk), lambda i, j, k: (i, k)),
                pl.BlockSpec((tk, tn), lambda i, j, k: (k, j)),
            ],
            out_specs=pl.BlockSpec((tm, tn), lambda i, j, k: (i, j)),
            scratch_shapes=[pltpu.VMEM((tm, tn), jnp.float32)],
        ),
        compiler_params=pltpu.CompilerParams(
            dimension_semantics=("parallel", "parallel", "arbitrary"),
            vmem_limit_bytes=VMEM_LIMIT,
        ),
        cost_estimate=cost,
    )(x_bf16, w_cat_bf16)


# ---------------------------------------------------------------------------
# Kernel B: tiled aggregation + epilogue
#   out = relu( adj @ xw[:, :H]  +  xw[:, H:]  +  shift )     (bf16 output)
# xw is passed twice with different index_maps: the support half streams along
# the reduction axis k, the self-loop half is consumed only in the epilogue.
# ---------------------------------------------------------------------------
def _aggregate_kernel(adj_ref, sup_ref, self_ref, shift_ref, out_ref, acc_ref):
    k = pl.program_id(2)

    @pl.when(k == 0)
    def _():
        acc_ref[...] = jnp.zeros_like(acc_ref)

    acc_ref[...] += jnp.dot(adj_ref[...], sup_ref[...],
                            preferred_element_type=jnp.float32)

    @pl.when(k == pl.num_programs(2) - 1)
    def _():
        # f32 epilogue (v5e has no bf16 VPU): self-loop term + folded BN shift, ReLU.
        y = acc_ref[...] + self_ref[...].astype(jnp.float32) + shift_ref[...]
        out_ref[...] = jnp.maximum(y, 0.0).astype(out_ref.dtype)


def _agg_tiles(np_, hp):
    tm = _pick_tile(np_, 512)
    if np_ // tm == 1 and tm > 128:
        tm //= 2                          # >= 2 blocks on the parallel i axis (v7x 2 TCs)
    tk = _pick_tile(np_, 512)
    tn = _pick_tile(hp, 2048)             # tn -> Hp: stream adj ~once per layer

    def vmem_bytes(tm, tk, tn):
        dbuf = 2 * (tm * tk * 2 + tk * tn * 2 + tm * tn * 2 + tn * 4   # inputs
                    + tm * tn * 2)                                      # bf16 output
        return dbuf + tm * tn * 4                                       # f32 acc scratch

    while vmem_bytes(tm, tk, tn) > AGG_VMEM_BUDGET and tn > 256:
        tn //= 2
    while vmem_bytes(tm, tk, tn) > AGG_VMEM_BUDGET and tk > 256:
        tk //= 2
    return tm, tk, tn


def aggregate_layer(adj_bf16, xw_bf16, shift, hp):
    n = adj_bf16.shape[0]
    assert xw_bf16.shape == (n, 2 * hp)
    tm, tk, tn = _agg_tiles(n, hp)
    n_h_blocks = hp // tn                 # block offset of the self-loop half of xw
    grid = (n // tm, n_h_blocks, n // tk)
    cost = pl.CostEstimate(
        flops=2 * n * n * hp + 3 * n * hp,
        transcendentals=0,
        bytes_accessed=n * n * 2 + n * 2 * hp * 2 + n * hp * 2 + hp * 4,
    )
    return pl.pallas_call(
        _aggregate_kernel,
        out_shape=jax.ShapeDtypeStruct((n, hp), jnp.bfloat16),
        grid_spec=pltpu.PrefetchScalarGridSpec(
            num_scalar_prefetch=0,
            grid=grid,
            in_specs=[
                pl.BlockSpec((tm, tk), lambda i, j, k: (i, k)),                # adj tile
                pl.BlockSpec((tk, tn), lambda i, j, k: (k, j)),                # support half
                pl.BlockSpec((tm, tn), lambda i, j, k: (i, j + n_h_blocks)),   # self half
                pl.BlockSpec((1, tn), lambda i, j, k: (0, j)),                 # shift
            ],
            out_specs=pl.BlockSpec((tm, tn), lambda i, j, k: (i, j)),
            scratch_shapes=[pltpu.VMEM((tm, tn), jnp.float32)],
        ),
        compiler_params=pltpu.CompilerParams(
            dimension_semantics=("parallel", "parallel", "arbitrary"),
            vmem_limit_bytes=VMEM_LIMIT,
        ),
        cost_estimate=cost,
    )(adj_bf16, xw_bf16, xw_bf16, shift)


# ---------------------------------------------------------------------------
# Parameter construction (mirrors GraphConvolutionBS.__init__, eval-mode BN folded)
# ---------------------------------------------------------------------------
def glorot_init(key, fan_in, fan_out):
    stdv = math.sqrt(6.0 / (fan_in + fan_out))
    return jax.random.uniform(key, (fan_in, fan_out), dtype=jnp.float32,
                              minval=-stdv, maxval=stdv)


def make_multilayer_gcn_params(key, in_features, hidden, nbaselayer):
    """Returns (kernel_params, raw_params).

    kernel_params[l] = (w_cat bf16 (Finp_l, 2*Hp),  shift f32 (1, Hp))
      - BN(eval) scale is folded into the weight columns, bias/mean/beta into shift.
      - Feature dims zero-padded to multiples of 256 (lane-dense, MXU-filling tiles).
    raw_params[l]    = unpadded f32 parameters for the pure-JAX reference.
    """
    eps = 1e-5
    hp = _pad_up(hidden, EDGE)
    kernel_params, raw_params = [], []
    fin = in_features
    for _ in range(nbaselayer):
        key, k1, k2 = jax.random.split(key, 3)
        w = glorot_init(k1, fin, hidden)
        # NOTE(deviation): the reference reset_parameters glorots `weight` twice and
        # never initializes self_weight; we glorot-init it deterministically instead.
        w_self = glorot_init(k2, fin, hidden)
        bias = jnp.zeros((hidden,), jnp.float32)
        gamma = jnp.ones((hidden,), jnp.float32)
        beta = jnp.zeros((hidden,), jnp.float32)
        running_mean = jnp.zeros((hidden,), jnp.float32)
        running_var = jnp.ones((hidden,), jnp.float32)

        # Fold bias + eval-mode BN:  BN(y + b) = (y + b - mu) * g/sqrt(v+eps) + beta
        bn_scale = gamma / jnp.sqrt(running_var + eps)            # (H,)
        shift = (bias - running_mean) * bn_scale + beta           # (H,)

        finp = _pad_up(fin, EDGE)

        def pad2(m):
            return jnp.pad(m, ((0, finp - m.shape[0]), (0, hp - m.shape[1])))

        w_cat = jnp.concatenate([pad2(w * bn_scale), pad2(w_self * bn_scale)], axis=1)
        shift_p = jnp.pad(shift, (0, hp - hidden)).reshape(1, hp)

        kernel_params.append((w_cat.astype(jnp.bfloat16), shift_p.astype(jnp.float32)))
        raw_params.append((w, w_self, bias, gamma, beta, running_mean, running_var))
        fin = hidden
    return kernel_params, raw_params


def prepare_adjacency(adj):
    """Pad + cast the (constant-per-graph) adjacency once; reuse across calls/layers."""
    n = adj.shape[0]
    np_ = _pad_up(n, EDGE)
    return jnp.pad(adj, ((0, np_ - n), (0, np_ - n))).astype(jnp.bfloat16)


# ---------------------------------------------------------------------------
# MultiLayerGCNBlock forward (GraphBaseBlock aggrmethod='nores', dense=False, eval)
# ---------------------------------------------------------------------------
@functools.partial(jax.jit, static_argnames=("hidden", "aggrmethod"))
def multilayer_gcn_forward(x, adj_p, kernel_params, hidden, aggrmethod="nores"):
    n, fin = x.shape
    np_ = adj_p.shape[0]

    finp0 = kernel_params[0][0].shape[0]
    h = jnp.pad(x, ((0, np_ - n), (0, finp0 - fin))).astype(jnp.bfloat16)   # (Np, Finp0)

    for (w_cat, shift) in kernel_params:
        hp = shift.shape[1]
        xw = fused_xw_matmul(h, w_cat)            # (Np, 2*Hp) bf16
        h = aggregate_layer(adj_p, xw, shift, hp)  # (Np, Hp)   bf16

    out = h[:n, :hidden].astype(jnp.float32)       # strip padding

    # GraphBaseBlock._doconcat(x, input): MultiLayerGCNBlock always uses 'nores'.
    if aggrmethod == "nores":
        return out
    elif aggrmethod == "concat":
        return jnp.concatenate((out, x), axis=1)
    elif aggrmethod == "add":
        return out + x
    else:
        raise NotImplementedError(aggrmethod)


# ---------------------------------------------------------------------------
# Pure-JAX f32 reference (eval-mode semantics of the PyTorch module)
# ---------------------------------------------------------------------------
def reference_forward(x, adj, raw_params):
    eps = 1e-5
    h = x
    for (w, w_self, bias, gamma, beta, mean, var) in raw_params:
        support = h @ w
        out = adj @ support + h @ w_self + bias
        out = (out - mean) / jnp.sqrt(var + eps) * gamma + beta
        h = jnp.maximum(out, 0.0)
    return h   # aggrmethod='nores' -> last layer's activations


if __name__ == "__main__":
    # Small deterministic example: N nodes = 8, in_features = 16, hidden = 32, 2 layers.
    N, FIN, HID, NLAYER = 8, 16, 32, 2

    root = jax.random.PRNGKey(0)
    kx, kadj, kparams = jax.random.split(root, 3)

    x = jax.random.normal(kx, (N, FIN), dtype=jnp.float32)

    # symmetric row-normalized dense adjacency with self-loops
    a = (jax.random.uniform(kadj, (N, N)) > 0.5).astype(jnp.float32)
    a = jnp.maximum(a, a.T) + jnp.eye(N, dtype=jnp.float32)
    adj = a / jnp.sum(a, axis=1, keepdims=True)

    kernel_params, raw_params = make_multilayer_gcn_params(kparams, FIN, HID, NLAYER)

    adj_p = prepare_adjacency(adj)                       # once per graph, outside the jit
    out = multilayer_gcn_forward(x, adj_p, tuple(kernel_params), hidden=HID)
    out = jax.block_until_ready(out)

    assert out.shape == (N, HID), out.shape
    assert bool(jnp.all(jnp.isfinite(out)))

    # Correctness vs. f32 reference (bf16 matmul inputs / outputs -> loose tolerance).
    ref = reference_forward(x, adj, raw_params)
    max_err = float(jnp.max(jnp.abs(out - ref)))
    assert max_err < 1e-1, f"max abs error {max_err}"

    print("KERNEL_OK")
</pallas_src>

<mosaic_0001>
module attributes {stable_mosaic.version = 11 : i64} {
  func.func @_xw_resident_kernel(%arg0: i32, %arg1: memref<128x256xbf16, #tpu.memory_space<vmem>>, %arg2: memref<256x512xbf16, #tpu.memory_space<vmem>>, %arg3: memref<128x512xbf16, #tpu.memory_space<vmem>>) attributes {dimension_semantics = [#tpu.dimension_semantics<parallel>], iteration_bounds = array<i64: 2>, scalar_prefetch = 0 : i64, scratch_operands = 0 : i64, tpu.core_type = #tpu.core_type<tc>, window_params = [{transform_indices = @transform_0, window_bounds = array<i64: 128, 256>}, {pipeline_mode = #tpu.pipeline_mode<synchronous>, transform_indices = @transform_1, window_bounds = array<i64: 256, 512>}, {transform_indices = @transform_2, window_bounds = array<i64: 128, 512>}]} {
    %c0 = arith.constant 0 : index
    %c0_0 = arith.constant 0 : index
    %0 = vector.load %arg1[%c0, %c0_0] : memref<128x256xbf16, #tpu.memory_space<vmem>>, vector<128x256xbf16>
    %c0_1 = arith.constant 0 : index
    %c0_2 = arith.constant 0 : index
    %1 = vector.load %arg2[%c0_1, %c0_2] : memref<256x512xbf16, #tpu.memory_space<vmem>>, vector<256x512xbf16>
    %cst = arith.constant dense<0.000000e+00> : vector<128x512xf32>
    %2 = tpu.matmul %0, %1, %cst {dimension_numbers = #tpu.dot_dimension_numbers<[1], [0], [0], [1], [0, 0, 1, 1], [], []>} : vector<128x256xbf16>, vector<256x512xbf16>, vector<128x512xf32> -> vector<128x512xf32>
    %3 = arith.truncf %2 : vector<128x512xf32> to vector<128x512xbf16>
    %c0_3 = arith.constant 0 : index
    %c0_4 = arith.constant 0 : index
    %4 = vector.load %arg3[%c0_3, %c0_4] : memref<128x512xbf16, #tpu.memory_space<vmem>>, vector<128x512xbf16>
    tpu.vector_store %arg3[%c0_3, %c0_4], %3 {strides = array<i32>} : memref<128x512xbf16, #tpu.memory_space<vmem>>, vector<128x512xbf16>,
    return
  }
  func.func @transform_0(%arg0: i32) -> (i32, i32) {
    %c0_i32 = arith.constant 0 : i32
    %c0_i32_0 = arith.constant 0 : i32
    return %arg0, %c0_i32 : i32, i32
  }
  func.func @transform_1(%arg0: i32) -> (i32, i32) {
    %c0_i32 = arith.constant 0 : i32
    %c0_i32_0 = arith.constant 0 : i32
    %c0_i32_1 = arith.constant 0 : i32
    return %c0_i32, %c0_i32_0 : i32, i32
  }
  func.func @transform_2(%arg0: i32) -> (i32, i32) {
    %c0_i32 = arith.constant 0 : i32
    %c0_i32_0 = arith.constant 0 : i32
    return %arg0, %c0_i32 : i32, i32
  }
}

module attributes {stable_mosaic.version = 11 : i64} {
  func.func @_aggregate_kernel(%arg0: i32, %arg1: i32, %arg2: i32, %arg3: memref<128x256xbf16, #tpu.memory_space<vmem>>, %arg4: memref<256x256xbf16, #tpu.memory_space<vmem>>, %arg5: memref<128x256xbf16, #tpu.memory_space<vmem>>, %arg6: memref<1x256xf32, #tpu.memory_space<vmem>>, %arg7: memref<128x256xbf16, #tpu.memory_space<vmem>>, %arg8: memref<128x256xf32, #tpu.memory_space<vmem>>) attributes {dimension_semantics = [#tpu.dimension_semantics<parallel>, #tpu.dimension_semantics<parallel>, #tpu.dimension_semantics<arbitrary>], iteration_bounds = array<i64: 2, 1, 1>, scalar_prefetch = 0 : i64, scratch_operands = 1 : i64, tpu.core_type = #tpu.core_type<tc>, window_params = [{transform_indices = @transform_0, window_bounds = array<i64: 128, 256>}, {transform_indices = @transform_1, window_bounds = array<i64: 256, 256>}, {transform_indices = @transform_2, window_bounds = array<i64: 128, 256>}, {transform_indices = @transform_3, window_bounds = array<i64: 1, 256>}, {transform_indices = @transform_4, window_bounds = array<i64: 128, 256>}]} {
    %c0_i32 = arith.constant 0 : i32
    %0 = arith.cmpi eq, %arg2, %c0_i32 : i32
    %1 = arith.extui %0 : i1 to i32
    %c0_i32_0 = arith.constant 0 : i32
    %2 = arith.cmpi ne, %1, %c0_i32_0 : i32
    scf.if %2 {
      %cst_10 = arith.constant 0.000000e+00 : f32
      %12 = vector.broadcast %cst_10 : f32 to vector<128x256xf32>
      %c0_11 = arith.constant 0 : index
      %c0_12 = arith.constant 0 : index
      %13 = vector.load %arg8[%c0_11, %c0_12] : memref<128x256xf32, #tpu.memory_space<vmem>>, vector<128x256xf32>
      tpu.vector_store %arg8[%c0_11, %c0_12], %12 {strides = array<i32>} : memref<128x256xf32, #tpu.memory_space<vmem>>, vector<128x256xf32>,
    } else {
    }
    %c0 = arith.constant 0 : index
    %c0_1 = arith.constant 0 : index
    %3 = vector.load %arg8[%c0, %c0_1] : memref<128x256xf32, #tpu.memory_space<vmem>>, vector<128x256xf32>
    %c0_2 = arith.constant 0 : index
    %c0_3 = arith.constant 0 : index
    %4 = vector.load %arg3[%c0_2, %c0_3] : memref<128x256xbf16, #tpu.memory_space<vmem>>, vector<128x256xbf16>
    %c0_4 = arith.constant 0 : index
    %c0_5 = arith.constant 0 : index
    %5 = vector.load %arg4[%c0_4, %c0_5] : memref<256x256xbf16, #tpu.memory_space<vmem>>, vector<256x256xbf16>
    %cst = arith.constant dense<0.000000e+00> : vector<128x256xf32>
    %6 = tpu.matmul %4, %5, %cst {dimension_numbers = #tpu.dot_dimension_numbers<[1], [0], [0], [1], [0, 0, 1, 1], [], []>} : vector<128x256xbf16>, vector<256x256xbf16>, vector<128x256xf32> -> vector<128x256xf32>
    %7 = arith.addf %3, %6 : vector<128x256xf32>
    %c0_6 = arith.constant 0 : index
    %c0_7 = arith.constant 0 : index
    %8 = vector.load %arg8[%c0_6, %c0_7] : memref<128x256xf32, #tpu.memory_space<vmem>>, vector<128x256xf32>
    tpu.vector_store %arg8[%c0_6, %c0_7], %7 {strides = array<i32>} : memref<128x256xf32, #tpu.memory_space<vmem>>, vector<128x256xf32>,
    %c0_i32_8 = arith.constant 0 : i32
    %9 = arith.cmpi eq, %arg2, %c0_i32_8 : i32
    %10 = arith.extui %9 : i1 to i32
    %c0_i32_9 = arith.constant 0 : i32
    %11 = arith.cmpi ne, %10, %c0_i32_9 : i32
    scf.if %11 {
      %c0_10 = arith.constant 0 : index
      %c0_11 = arith.constant 0 : index
      %12 = vector.load %arg8[%c0_10, %c0_11] : memref<128x256xf32, #tpu.memory_space<vmem>>, vector<128x256xf32>
      %c0_12 = arith.constant 0 : index
      %c0_13 = arith.constant 0 : index
      %13 = vector.load %arg5[%c0_12, %c0_13] : memref<128x256xbf16, #tpu.memory_space<vmem>>, vector<128x256xbf16>
      %14 = arith.extf %13 : vector<128x256xbf16> to vector<128x256xf32>
      %15 = arith.addf %12, %14 : vector<128x256xf32>
      %c0_14 = arith.constant 0 : index
      %c0_15 = arith.constant 0 : index
      %16 = vector.load %arg6[%c0_14, %c0_15] : memref<1x256xf32, #tpu.memory_space<vmem>>, vector<1x256xf32>
      %17 = vector.broadcast %16 : vector<1x256xf32> to vector<128x256xf32>
      %18 = arith.addf %15, %17 : vector<128x256xf32>
      %cst_16 = arith.constant 0.000000e+00 : f32
      %19 = vector.broadcast %cst_16 : f32 to vector<128x256xf32>
      %20 = arith.maximumf %18, %19 : vector<128x256xf32>
      %21 = arith.truncf %20 : vector<128x256xf32> to vector<128x256xbf16>
      %c0_17 = arith.constant 0 : index
      %c0_18 = arith.constant 0 : index
      %22 = vector.load %arg7[%c0_17, %c0_18] : memref<128x256xbf16, #tpu.memory_space<vmem>>, vector<128x256xbf16>
      tpu.vector_store %arg7[%c0_17, %c0_18], %21 {strides = array<i32>} : memref<128x256xbf16, #tpu.memory_space<vmem>>, vector<128x256xbf16>,
    } else {
    }
    return
  }
  func.func @transform_0(%arg0: i32, %arg1: i32, %arg2: i32) -> (i32, i32) {
    %c0_i32 = arith.constant 0 : i32
    return %arg0, %arg2 : i32, i32
  }
  func.func @transform_1(%arg0: i32, %arg1: i32, %arg2: i32) -> (i32, i32) {
    %c0_i32 = arith.constant 0 : i32
    return %arg2, %arg1 : i32, i32
  }
  func.func @transform_2(%arg0: i32, %arg1: i32, %arg2: i32) -> (i32, i32) {
    %c1_i32 = arith.constant 1 : i32
    %0 = arith.addi %arg1, %c1_i32 : i32
    %c0_i32 = arith.constant 0 : i32
    return %arg0, %0 : i32, i32
  }
  func.func @transform_3(%arg0: i32, %arg1: i32, %arg2: i32) -> (i32, i32) {
    %c0_i32 = arith.constant 0 : i32
    %c0_i32_0 = arith.constant 0 : i32
    return %c0_i32, %arg1 : i32, i32
  }
  func.func @transform_4(%arg0: i32, %arg1: i32, %arg2: i32) -> (i32, i32) {
    %c0_i32 = arith.constant 0 : i32
    return %arg0, %arg1 : i32, i32
  }
}

module attributes {stable_mosaic.version = 11 : i64} {
  func.func @_xw_resident_kernel(%arg0: i32, %arg1: memref<128x256xbf16, #tpu.memory_space<vmem>>, %arg2: memref<256x512xbf16, #tpu.memory_space<vmem>>, %arg3: memref<128x512xbf16, #tpu.memory_space<vmem>>) attributes {dimension_semantics = [#tpu.dimension_semantics<parallel>], iteration_bounds = array<i64: 2>, scalar_prefetch = 0 : i64, scratch_operands = 0 : i64, tpu.core_type = #tpu.core_type<tc>, window_params = [{transform_indices = @transform_0, window_bounds = array<i64: 128, 256>}, {pipeline_mode = #tpu.pipeline_mode<synchronous>, transform_indices = @transform_1, window_bounds = array<i64: 256, 512>}, {transform_indices = @transform_2, window_bounds = array<i64: 128, 512>}]} {
    %c0 = arith.constant 0 : index
    %c0_0 = arith.constant 0 : index
    %0 = vector.load %arg1[%c0, %c0_0] : memref<128x256xbf16, #tpu.memory_space<vmem>>, vector<128x256xbf16>
    %c0_1 = arith.constant 0 : index
    %c0_2 = arith.constant 0 : index
    %1 = vector.load %arg2[%c0_1, %c0_2] : memref<256x512xbf16, #tpu.memory_space<vmem>>, vector<256x512xbf16>
    %cst = arith.constant dense<0.000000e+00> : vector<128x512xf32>
    %2 = tpu.matmul %0, %1, %cst {dimension_numbers = #tpu.dot_dimension_numbers<[1], [0], [0], [1], [0, 0, 1, 1], [], []>} : vector<128x256xbf16>, vector<256x512xbf16>, vector<128x512xf32> -> vector<128x512xf32>
    %3 = arith.truncf %2 : vector<128x512xf32> to vector<128x512xbf16>
    %c0_3 = arith.constant 0 : index
    %c0_4 = arith.constant 0 : index
    %4 = vector.load %arg3[%c0_3, %c0_4] : memref<128x512xbf16, #tpu.memory_space<vmem>>, vector<128x512xbf16>
    tpu.vector_store %arg3[%c0_3, %c0_4], %3 {strides = array<i32>} : memref<128x512xbf16, #tpu.memory_space<vmem>>, vector<128x512xbf16>,
    return
  }
  func.func @transform_0(%arg0: i32) -> (i32, i32) {
    %c0_i32 = arith.constant 0 : i32
    %c0_i32_0 = arith.constant 0 : i32
    return %arg0, %c0_i32 : i32, i32
  }
  func.func @transform_1(%arg0: i32) -> (i32, i32) {
    %c0_i32 = arith.constant 0 : i32
    %c0_i32_0 = arith.constant 0 : i32
    %c0_i32_1 = arith.constant 0 : i32
    return %c0_i32, %c0_i32_0 : i32, i32
  }
  func.func @transform_2(%arg0: i32) -> (i32, i32) {
    %c0_i32 = arith.constant 0 : i32
    %c0_i32_0 = arith.constant 0 : i32
    return %arg0, %c0_i32 : i32, i32
  }
}

</mosaic_0001>

<llo_original>
// kernel: multilayer_gcn_forward.4
$region0: #{multilayer_gcn_forward.4}
  #allocation0 [shape = 'u32[]', space=smem, size = 0x4, offset = 0x4, fixed_abs, tag = 'smem constant byte address 0x4 - core index']
  #allocation1 [shape = 'u32[144,128]{1,0:T(1,128)}', space=vmem, size = 0x12000, scoped, tag = 'internal scratch']
  %s0 = inlined_call_operand.vmem [shape: bf16[256,256], index: 0, kind: input, shape index: {}]
  %s1 = inlined_call_operand.hbm [shape: bf16[256,512], index: 1, kind: input, shape index: {}]
  %s2 = inlined_call_operand.vmem [shape: bf16[256,512], index: 2, kind: output, shape index: {}]
  %s3 = sld [smem:[#allocation0]]
  $region45: #{multilayer_gcn_forward.4} parent=0
    _
  %s5 = ssub.s32 1, %s3
  %s6 = scalar_select 0, %s5, %s3
  $region1: #{multilayer_gcn_forward.4} parent=0
    #allocation2 [shape = 'u8[262144]{0}', space=vmem, size = 0x40000, scoped, tag = 'input window, operand 1, single buffered']
    #allocation3 [shape = 's32[2]{0}', space=sflag, size = 0x8, scoped, tag = 'scoped memory for multilayer_gcn_forward.4']
    %7 = vsyncpa [#allocation3], 0
    loop: start=0, step=1, limit=4
    $region2: #{multilayer_gcn_forward.4} parent=1 // loop_pre_header
      _
    $region3: #{multilayer_gcn_forward.4} parent=1 // loop_header
      %s9 = sphi 0, %s13
      %p10 = scmp.ge.s32.totalorder %s9, 4
      %s19 = sphi 0, %s21
      %s22 = sphi 0, %s19
      %s23 = sphi 0, %s22
      %s39 = sphi 0, %s23
      %s43 = sphi 0, %s43
      %s45 = sphi 0, %s43
      %s46 = sphi 0, %s45
      %s60 = sphi 0, %s46
      %s66 = sphi 0, %s68
      %s69 = sphi 0, %s66
      %s70 = sphi 0, %s69
      %s86 = sphi 0, %s70
    $region4: #{multilayer_gcn_forward.4} parent=1 // loop_header_branch
      %12 = sbr.rel (%p10) target = $region8
    $region5: #{multilayer_gcn_forward.4} parent=1 // loop_body
      %s14 = ssub.s32 %s9, 1
      %s15 = ssub.s32 %s9, 2
      %s16 = sadd.s32 %s9, 1
      %s17 = ssub.s32 %s9, %s16
      %p18 = scmp.eq.s32.totalorder %s17, 0
      %s20 = sadd.s32 %s19, 1
      %s21 = scalar_select %p18, %s19, %s20
      %p24 = pneg %p18
      %p25 = scmp.eq.s32.totalorder %s9, 1
      %p26 = por %p24, %p25
      %p27 = scmp.ne.s32.totalorder %s19, %s22
      %p28 = scmp.eq.s32.totalorder %s9, 0
      %p29 = por %p27, %p28
      %p30 = scmp.ne.s32.totalorder %s19, %s22
      %p31 = scmp.eq.s32.totalorder %s14, 1
      %p32 = por %p30, %p31
      %p33 = scmp.ne.s32.totalorder %s22, %s23
      %p34 = scmp.eq.s32.totalorder %s14, 0
      %p35 = por %p33, %p34
      %p36 = scmp.ne.s32.totalorder %s22, %s23
      %p37 = scmp.eq.s32.totalorder %s15, 1
      %p38 = por %p36, %p37
      %p40 = scmp.ne.s32.totalorder %s23, %s39
      %p41 = scmp.eq.s32.totalorder %s15, 0
      %p42 = por %p40, %p41
      %s44 = sadd.s32 %s43, 1
      %p47 = scmp.eq.s32.totalorder %s9, 1
      %p48 = scmp.ne.s32.totalorder %s43, %s45
      %p49 = scmp.eq.s32.totalorder %s9, 0
      %p50 = por %p48, %p49
      %p51 = scmp.ne.s32.totalorder %s43, %s45
      %p52 = scmp.eq.s32.totalorder %s14, 1
      %p53 = por %p51, %p52
      %p54 = scmp.ne.s32.totalorder %s45, %s46
      %p55 = scmp.eq.s32.totalorder %s14, 0
      %p56 = por %p54, %p55
      %p57 = scmp.ne.s32.totalorder %s45, %s46
      %p58 = scmp.eq.s32.totalorder %s15, 1
      %p59 = por %p57, %p58
      %p61 = scmp.ne.s32.totalorder %s46, %s60
      %p62 = scmp.eq.s32.totalorder %s15, 0
      %p63 = por %p61, %p62
      %s64 = ssub.s32 %s9, %s16
      %p65 = scmp.eq.s32.totalorder %s64, 0
      %s67 = sadd.s32 %s66, 1
      %s68 = scalar_select %p65, %s66, %s67
      %p71 = pneg %p65
      %p72 = scmp.eq.s32.totalorder %s9, 1
      %p73 = por %p71, %p72
      %p74 = scmp.ne.s32.totalorder %s66, %s69
      %p75 = scmp.eq.s32.totalorder %s9, 0
      %p76 = por %p74, %p75
      %p77 = scmp.ne.s32.totalorder %s66, %s69
      %p78 = scmp.eq.s32.totalorder %s14, 1
      %p79 = por %p77, %p78
      %p80 = scmp.ne.s32.totalorder %s69, %s70
      %p81 = scmp.eq.s32.totalorder %s14, 0
      %p82 = por %p80, %p81
      %p83 = scmp.ne.s32.totalorder %s69, %s70
      %p84 = scmp.eq.s32.totalorder %s15, 1
      %p85 = por %p83, %p84
      %p87 = scmp.ne.s32.totalorder %s70, %s86
      %p88 = scmp.eq.s32.totalorder %s15, 0
      %p89 = por %p87, %p88
      %p90 = scmp.le.s32.totalorder 1, %s9
      %p91 = scmp.lt.s32.totalorder %s9, 3
      %p92 = pnand %p90, %p91
      %p93 = pneg %p92
      // Predicated region
      $region9: #{multilayer_gcn_forward.4} parent=5 // pred_check
        _
      $region10: #{multilayer_gcn_forward.4} parent=5 // pred_check_branch
        %95 = sbr.rel (%p92) target = $region12
      $region11: #{multilayer_gcn_forward.4} parent=5 // pred_region
        %s96 = ssub.s32 %s9, 1
        // Predicated region
        $region13: #{multilayer_gcn_forward.4} parent=11 // pred_check
          %p97 = pneg %p56
        $region14: #{multilayer_gcn_forward.4} parent=11 // pred_check_branch
          %99 = sbr.rel (%p97) target = $region16
        $region15: #{multilayer_gcn_forward.4} parent=11 // pred_region
          %s101 = ssub.s32 8192, 8192
          %102 = vsyncadd [#allocation3], %s101
          %s103 = sshll.u32 [#allocation2], 4
          %s104 = int_to_ptr.vmem [resolvable:$true] %s103
          %109 = dma.hbm_to_vmem [thread:$0]  %s1, 8192, %s104, [#allocation3], 256, 256, 16
        $region16: #{multilayer_gcn_forward.4} parent=11 // pred_fallthru
          _
      $region12: #{multilayer_gcn_forward.4} parent=5 // pred_fallthru
        _
      %p110 = scmp.lt.s32.totalorder %s9, 2
      // Predicated region
      $region17: #{multilayer_gcn_forward.4} parent=5 // pred_check
        %p111 = pneg %p110
      $region18: #{multilayer_gcn_forward.4} parent=5 // pred_check_branch
        %113 = sbr.rel (%p111) target = $region20
      $region19: #{multilayer_gcn_forward.4} parent=5 // pred_region
        // Predicated region
        $region21: #{multilayer_gcn_forward.4} parent=19 // pred_check
          %p114 = pneg %p29
        $region22: #{multilayer_gcn_forward.4} parent=19 // pred_check_branch
          %116 = sbr.rel (%p114) target = $region24
        $region23: #{multilayer_gcn_forward.4} parent=19 // pred_region
          %s117 = smul.u32 16, %s9
          %p118 = scmp.lt.s32.totalorder %s117, 31
          %s119 = scalar_select %p118, %s117, 31
          %s120 = smul.addr %s119, 2
          %s121 = smul.addr %s120, 4
          %s122 = scalar_lea.vmem %s0, %s121
          %s123 = smul.u32 16, %s9
        $region24: #{multilayer_gcn_forward.4} parent=19 // pred_fallthru
          _
      $region20: #{multilayer_gcn_forward.4} parent=5 // pred_fallthru
        _
      %p124 = scmp.le.s32.totalorder 1, %s9
      %p125 = scmp.lt.s32.totalorder %s9, 3
      %p126 = pnand %p124, %p125
      %p127 = pneg %p126
      // Predicated region
      $region25: #{multilayer_gcn_forward.4} parent=5 // pred_check
        _
      $region26: #{multilayer_gcn_forward.4} parent=5 // pred_check_branch
        %129 = sbr.rel (%p126) target = $region28
      $region27: #{multilayer_gcn_forward.4} parent=5 // pred_region
        %s130 = ssub.s32 %s9, 1
        // Predicated region
        $region29: #{multilayer_gcn_forward.4} parent=27 // pred_check
          %p131 = pneg %p56
        $region30: #{multilayer_gcn_forward.4} parent=27 // pred_check_branch
          %133 = sbr.rel (%p131) target = $region32
        $region31: #{multilayer_gcn_forward.4} parent=27 // pred_region
          %134 = dma.done [#allocation3], 8192
        $region32: #{multilayer_gcn_forward.4} parent=27 // pred_fallthru
          _
        %s135 = smul.u32 16, %s14
        %p136 = scmp.lt.s32.totalorder %s135, 31
        %s137 = scalar_select %p136, %s135, 31
        %s138 = smul.addr %s137, 2
        %s139 = smul.addr %s138, 4
        %s140 = scalar_lea.vmem %s0, %s139
        %p141 = pneg %p35
        %p142 = pneg %p32
        %p143 = pneg %p56
        %p144 = pneg %p53
        %p145 = pneg %p82
        %p146 = pneg %p79
        %s147 = smul.u32 16, %s14
        %p148 = scmp.lt.s32.totalorder %s147, 31
        %s149 = scalar_select %p148, %s147, 31
        %s150 = smul.addr %s149, 4
        %s151 = smul.addr %s150, 4
        %s152 = scalar_lea.vmem %s2, %s151
        %s153 = smul.u32 16, %s14
        %p154 = scmp.lt.s32.totalorder %s153, 31
        %s155 = scalar_select %p154, %s153, 31
        %s156 = smul.addr %s155, 2
        %s157 = smul.addr %s156, 4
        %s158 = scalar_lea.vmem %s0, %s157
        %s159 = smul.u32 16, %s14
        %s160 = smul.u32 16, %s14
        %p161 = scmp.lt.s32.totalorder %s160, 31
        %s162 = scalar_select %p161, %s160, 31
        %s163 = smul.addr %s162, 4
        %s164 = smul.addr %s163, 4
        %s165 = scalar_lea.vmem %s2, %s164
        %s166 = smul.u32 16, %s14
        %v167 = vld [vmem:[%s158] sm:$0xff]
        %v168 = vld [vmem:[%s158 + $0x8] sm:$0xff]
        %v169 = vld [vmem:[%s158 + $0x10] sm:$0xff]
        %v170 = vld [vmem:[%s158 + $0x18] sm:$0xff]
        %v171 = vld [vmem:[%s158 + $0x20] sm:$0xff]
        %v172 = vld [vmem:[%s158 + $0x28] sm:$0xff]
        %v173 = vld [vmem:[%s158 + $0x30] sm:$0xff]
        %v174 = vld [vmem:[%s158 + $0x38] sm:$0xff]
        %v175 = vld [vmem:[%s158 + $0x40] sm:$0xff]
        %v176 = vld [vmem:[%s158 + $0x48] sm:$0xff]
        %v177 = vld [vmem:[%s158 + $0x50] sm:$0xff]
        %v178 = vld [vmem:[%s158 + $0x58] sm:$0xff]
        %v179 = vld [vmem:[%s158 + $0x60] sm:$0xff]
        %v180 = vld [vmem:[%s158 + $0x68] sm:$0xff]
        %v181 = vld [vmem:[%s158 + $0x70] sm:$0xff]
        %v182 = vld [vmem:[%s158 + $0x78] sm:$0xff]
        %v183 = vld [vmem:[#allocation2] sm:$0xff]
        %v184 = vld [vmem:[#allocation2 + $0x8] sm:$0xff]
        %v185 = vld [vmem:[#allocation2 + $0x10] sm:$0xff]
        %v186 = vld [vmem:[#allocation2 + $0x18] sm:$0xff]
        %v187 = vld [vmem:[#allocation2 + $0x20] sm:$0xff]
        %v188 = vld [vmem:[#allocation2 + $0x28] sm:$0xff]
        %v189 = vld [vmem:[#allocation2 + $0x30] sm:$0xff]
        %v190 = vld [vmem:[#allocation2 + $0x38] sm:$0xff]
        %v191 = vld [vmem:[#allocation2 + $0x40] sm:$0xff]
        %v192 = vld [vmem:[#allocation2 + $0x48] sm:$0xff]
        %v193 = vld [vmem:[#allocation2 + $0x50] sm:$0xff]
        %v194 = vld [vmem:[#allocation2 + $0x58] sm:$0xff]
        %v195 = vld [vmem:[#allocation2 + $0x60] sm:$0xff]
        %v196 = vld [vmem:[#allocation2 + $0x68] sm:$0xff]
        %v197 = vld [vmem:[#allocation2 + $0x70] sm:$0xff]
        %v198 = vld [vmem:[#allocation2 + $0x78] sm:$0xff]
        %v199 = vld [vmem:[#allocation2 + $0x80] sm:$0xff]
        %v200 = vld [vmem:[#allocation2 + $0x88] sm:$0xff]
        %v201 = vld [vmem:[#allocation2 + $0x90] sm:$0xff]
        %v202 = vld [vmem:[#allocation2 + $0x98] sm:$0xff]
        %v203 = vld [vmem:[#allocation2 + $0xa0] sm:$0xff]
        %v204 = vld [vmem:[#allocation2 + $0xa8] sm:$0xff]
        %v205 = vld [vmem:[#allocation2 + $0xb0] sm:$0xff]
        %v206 = vld [vmem:[#allocation2 + $0xb8] sm:$0xff]
        %v207 = vld [vmem:[#allocation2 + $0xc0] sm:$0xff]
        %v208 = vld [vmem:[#allocation2 + $0xc8] sm:$0xff]
        %v209 = vld [vmem:[#allocation2 + $0xd0] sm:$0xff]
        %v210 = vld [vmem:[#allocation2 + $0xd8] sm:$0xff]
        %v211 = vld [vmem:[#allocation2 + $0xe0] sm:$0xff]
        %v212 = vld [vmem:[#allocation2 + $0xe8] sm:$0xff]
        %v213 = vld [vmem:[#allocation2 + $0xf0] sm:$0xff]
        %v214 = vld [vmem:[#allocation2 + $0xf8] sm:$0xff]
        %v215 = vld [vmem:[#allocation2 + $0x100] sm:$0xff]
        %v216 = vld [vmem:[#allocation2 + $0x108] sm:$0xff]
        %v217 = vld [vmem:[#allocation2 + $0x110] sm:$0xff]
        %v218 = vld [vmem:[#allocation2 + $0x118] sm:$0xff]
        %v219 = vld [vmem:[#allocation2 + $0x120] sm:$0xff]
        %v220 = vld [vmem:[#allocation2 + $0x128] sm:$0xff]
        %v221 = vld [vmem:[#allocation2 + $0x130] sm:$0xff]
        %v222 = vld [vmem:[#allocation2 + $0x138] sm:$0xff]
        %v223 = vld [vmem:[#allocation2 + $0x140] sm:$0xff]
        %v224 = vld [vmem:[#allocation2 + $0x148] sm:$0xff]
        %v225 = vld [vmem:[#allocation2 + $0x150] sm:$0xff]
        %v226 = vld [vmem:[#allocation2 + $0x158] sm:$0xff]
        %v227 = vld [vmem:[#allocation2 + $0x160] sm:$0xff]
        %v228 = vld [vmem:[#allocation2 + $0x168] sm:$0xff]
        %v229 = vld [vmem:[#allocation2 + $0x170] sm:$0xff]
        %v230 = vld [vmem:[#allocation2 + $0x178] sm:$0xff]
        %v231 = vld [vmem:[#allocation2 + $0x180] sm:$0xff]
        %v232 = vld [vmem:[#allocation2 + $0x188] sm:$0xff]
        %v233 = vld [vmem:[#allocation2 + $0x190] sm:$0xff]
        %v234 = vld [vmem:[#allocation2 + $0x198] sm:$0xff]
        %v235 = vld [vmem:[#allocation2 + $0x1a0] sm:$0xff]
        %v236 = vld [vmem:[#allocation2 + $0x1a8] sm:$0xff]
        %v237 = vld [vmem:[#allocation2 + $0x1b0] sm:$0xff]
        %v238 = vld [vmem:[#allocation2 + $0x1b8] sm:$0xff]
        %v239 = vld [vmem:[#allocation2 + $0x1c0] sm:$0xff]
        %v240 = vld [vmem:[#allocation2 + $0x1c8] sm:$0xff]
        %v241 = vld [vmem:[#allocation2 + $0x1d0] sm:$0xff]
        %v242 = vld [vmem:[#allocation2 + $0x1d8] sm:$0xff]
        %v243 = vld [vmem:[#allocation2 + $0x1e0] sm:$0xff]
        %v244 = vld [vmem:[#allocation2 + $0x1e8] sm:$0xff]
        %v245 = vld [vmem:[#allocation2 + $0x1f0] sm:$0xff]
        %v246 = vld [vmem:[#allocation2 + $0x1f8] sm:$0xff]
        %v263 = vunpack.c.l.b16 %v167
        %v264 = vunpack.c.h.b16 %v167
        %v265 = vunpack.c.l.b16 %v168
        %v266 = vunpack.c.h.b16 %v168
        %v267 = vunpack.c.l.b16 %v169
        %v268 = vunpack.c.h.b16 %v169
        %v269 = vunpack.c.l.b16 %v170
        %v270 = vunpack.c.h.b16 %v170
        %v271 = vunpack.c.l.b16 %v171
        %v272 = vunpack.c.h.b16 %v171
        %v273 = vunpack.c.l.b16 %v172
        %v274 = vunpack.c.h.b16 %v172
        %v275 = vunpack.c.l.b16 %v173
        %v276 = vunpack.c.h.b16 %v173
        %v277 = vunpack.c.l.b16 %v174
        %v278 = vunpack.c.h.b16 %v174
        %v279 = vunpack.c.l.b16 %v175
        %v280 = vunpack.c.h.b16 %v175
        %v281 = vunpack.c.l.b16 %v176
        %v282 = vunpack.c.h.b16 %v176
        %v283 = vunpack.c.l.b16 %v177
        %v284 = vunpack.c.h.b16 %v177
        %v285 = vunpack.c.l.b16 %v178
        %v286 = vunpack.c.h.b16 %v178
        %v287 = vunpack.c.l.b16 %v179
        %v288 = vunpack.c.h.b16 %v179
        %v289 = vunpack.c.l.b16 %v180
        %v290 = vunpack.c.h.b16 %v180
        %v291 = vunpack.c.l.b16 %v181
        %v292 = vunpack.c.h.b16 %v181
        %v293 = vunpack.c.l.b16 %v182
        %v294 = vunpack.c.h.b16 %v182
        %v295 = vpack.c.b16 %v265, %v263
        %v296 = vpack.c.b16 %v266, %v264
        %v297 = vpack.c.b16 %v269, %v267
        %v298 = vpack.c.b16 %v270, %v268
        %v299 = vpack.c.b16 %v273, %v271
        %v300 = vpack.c.b16 %v274, %v272
        %v301 = vpack.c.b16 %v277, %v275
        %v302 = vpack.c.b16 %v278, %v276
        %v303 = vpack.c.b16 %v281, %v279
        %v304 = vpack.c.b16 %v282, %v280
        %v305 = vpack.c.b16 %v285, %v283
        %v306 = vpack.c.b16 %v286, %v284
        %v307 = vpack.c.b16 %v289, %v287
        %v308 = vpack.c.b16 %v290, %v288
        %v309 = vpack.c.b16 %v293, %v291
        %v310 = vpack.c.b16 %v294, %v292
        %v391 = vunpack.c.l.b16 %v183
        %v392 = vunpack.c.h.b16 %v183
        %v393 = vunpack.c.l.b16 %v184
        %v394 = vunpack.c.h.b16 %v184
        %v395 = vunpack.c.l.b16 %v185
        %v396 = vunpack.c.h.b16 %v185
        %v397 = vunpack.c.l.b16 %v186
        %v398 = vunpack.c.h.b16 %v186
        %v399 = vunpack.c.l.b16 %v187
        %v400 = vunpack.c.h.b16 %v187
        %v401 = vunpack.c.l.b16 %v188
        %v402 = vunpack.c.h.b16 %v188
        %v403 = vunpack.c.l.b16 %v189
        %v404 = vunpack.c.h.b16 %v189
        %v405 = vunpack.c.l.b16 %v190
        %v406 = vunpack.c.h.b16 %v190
        %v407 = vunpack.c.l.b16 %v191
        %v408 = vunpack.c.h.b16 %v191
        %v409 = vunpack.c.l.b16 %v192
        %v410 = vunpack.c.h.b16 %v192
        %v411 = vunpack.c.l.b16 %v193
        %v412 = vunpack.c.h.b16 %v193
        %v413 = vunpack.c.l.b16 %v194
        %v414 = vunpack.c.h.b16 %v194
        %v415 = vunpack.c.l.b16 %v195
        %v416 = vunpack.c.h.b16 %v195
        %v417 = vunpack.c.l.b16 %v196
        %v418 = vunpack.c.h.b16 %v196
        %v419 = vunpack.c.l.b16 %v197
        %v420 = vunpack.c.h.b16 %v197
        %v421 = vunpack.c.l.b16 %v198
        %v422 = vunpack.c.h.b16 %v198
        %v423 = vunpack.c.l.b16 %v199
        %v424 = vunpack.c.h.b16 %v199
        %v425 = vunpack.c.l.b16 %v200
        %v426 = vunpack.c.h.b16 %v200
        %v427 = vunpack.c.l.b16 %v201
        %v428 = vunpack.c.h.b16 %v201
        %v429 = vunpack.c.l.b16 %v202
        %v430 = vunpack.c.h.b16 %v202
        %v431 = vunpack.c.l.b16 %v203
        %v432 = vunpack.c.h.b16 %v203
        %v433 = vunpack.c.l.b16 %v204
        %v434 = vunpack.c.h.b16 %v204
        %v435 = vunpack.c.l.b16 %v205
        %v436 = vunpack.c.h.b16 %v205
        %v437 = vunpack.c.l.b16 %v206
        %v438 = vunpack.c.h.b16 %v206
        %v439 = vunpack.c.l.b16 %v207
        %v440 = vunpack.c.h.b16 %v207
        %v441 = vunpack.c.l.b16 %v208
        %v442 = vunpack.c.h.b16 %v208
        %v443 = vunpack.c.l.b16 %v209
        %v444 = vunpack.c.h.b16 %v209
        %v445 = vunpack.c.l.b16 %v210
        %v446 = vunpack.c.h.b16 %v210
        %v447 = vunpack.c.l.b16 %v211
        %v448 = vunpack.c.h.b16 %v211
        %v449 = vunpack.c.l.b16 %v212
        %v450 = vunpack.c.h.b16 %v212
        %v451 = vunpack.c.l.b16 %v213
        %v452 = vunpack.c.h.b16 %v213
        %v453 = vunpack.c.l.b16 %v214
        %v454 = vunpack.c.h.b16 %v214
        %v455 = vunpack.c.l.b16 %v215
        %v456 = vunpack.c.h.b16 %v215
        %v457 = vunpack.c.l.b16 %v216
        %v458 = vunpack.c.h.b16 %v216
        %v459 = vunpack.c.l.b16 %v217
        %v460 = vunpack.c.h.b16 %v217
        %v461 = vunpack.c.l.b16 %v218
        %v462 = vunpack.c.h.b16 %v218
        %v463 = vunpack.c.l.b16 %v219
        %v464 = vunpack.c.h.b16 %v219
        %v465 = vunpack.c.l.b16 %v220
        %v466 = vunpack.c.h.b16 %v220
        %v467 = vunpack.c.l.b16 %v221
        %v468 = vunpack.c.h.b16 %v221
        %v469 = vunpack.c.l.b16 %v222
        %v470 = vunpack.c.h.b16 %v222
        %v471 = vunpack.c.l.b16 %v223
        %v472 = vunpack.c.h.b16 %v223
        %v473 = vunpack.c.l.b16 %v224
        %v474 = vunpack.c.h.b16 %v224
        %v475 = vunpack.c.l.b16 %v225
        %v476 = vunpack.c.h.b16 %v225
        %v477 = vunpack.c.l.b16 %v226
        %v478 = vunpack.c.h.b16 %v226
        %v479 = vunpack.c.l.b16 %v227
        %v480 = vunpack.c.h.b16 %v227
        %v481 = vunpack.c.l.b16 %v228
        %v482 = vunpack.c.h.b16 %v228
        %v483 = vunpack.c.l.b16 %v229
        %v484 = vunpack.c.h.b16 %v229
        %v485 = vunpack.c.l.b16 %v230
        %v486 = vunpack.c.h.b16 %v230
        %v487 = vunpack.c.l.b16 %v231
        %v488 = vunpack.c.h.b16 %v231
        %v489 = vunpack.c.l.b16 %v232
        %v490 = vunpack.c.h.b16 %v232
        %v491 = vunpack.c.l.b16 %v233
        %v492 = vunpack.c.h.b16 %v233
        %v493 = vunpack.c.l.b16 %v234
        %v494 = vunpack.c.h.b16 %v234
        %v495 = vunpack.c.l.b16 %v235
        %v496 = vunpack.c.h.b16 %v235
        %v497 = vunpack.c.l.b16 %v236
        %v498 = vunpack.c.h.b16 %v236
        %v499 = vunpack.c.l.b16 %v237
        %v500 = vunpack.c.h.b16 %v237
        %v501 = vunpack.c.l.b16 %v238
        %v502 = vunpack.c.h.b16 %v238
        %v503 = vunpack.c.l.b16 %v239
        %v504 = vunpack.c.h.b16 %v239
        %v505 = vunpack.c.l.b16 %v240
        %v506 = vunpack.c.h.b16 %v240
        %v507 = vunpack.c.l.b16 %v241
        %v508 = vunpack.c.h.b16 %v241
        %v509 = vunpack.c.l.b16 %v242
        %v510 = vunpack.c.h.b16 %v242
        %v511 = vunpack.c.l.b16 %v243
        %v512 = vunpack.c.h.b16 %v243
        %v513 = vunpack.c.l.b16 %v244
        %v514 = vunpack.c.h.b16 %v244
        %v515 = vunpack.c.l.b16 %v245
        %v516 = vunpack.c.h.b16 %v245
        %v517 = vunpack.c.l.b16 %v246
        %v518 = vunpack.c.h.b16 %v246
        %v519 = vpack.c.b16 %v395, %v391
        %v520 = vpack.c.b16 %v396, %v392
        %v521 = vpack.c.b16 %v397, %v393
        %v522 = vpack.c.b16 %v398, %v394
        %v523 = vpack.c.b16 %v403, %v399
        %v524 = vpack.c.b16 %v404, %v400
        %v525 = vpack.c.b16 %v405, %v401
        %v526 = vpack.c.b16 %v406, %v402
        %v527 = vpack.c.b16 %v411, %v407
        %v528 = vpack.c.b16 %v412, %v408
        %v529 = vpack.c.b16 %v413, %v409
        %v530 = vpack.c.b16 %v414, %v410
        %v531 = vpack.c.b16 %v419, %v415
        %v532 = vpack.c.b16 %v420, %v416
        %v533 = vpack.c.b16 %v421, %v417
        %v534 = vpack.c.b16 %v422, %v418
        %v535 = vpack.c.b16 %v427, %v423
        %v536 = vpack.c.b16 %v428, %v424
        %v537 = vpack.c.b16 %v429, %v425
        %v538 = vpack.c.b16 %v430, %v426
        %v539 = vpack.c.b16 %v435, %v431
        %v540 = vpack.c.b16 %v436, %v432
        %v541 = vpack.c.b16 %v437, %v433
        %v542 = vpack.c.b16 %v438, %v434
        %v543 = vpack.c.b16 %v443, %v439
        %v544 = vpack.c.b16 %v444, %v440
        %v545 = vpack.c.b16 %v445, %v441
        %v546 = vpack.c.b16 %v446, %v442
        %v547 = vpack.c.b16 %v451, %v447
        %v548 = vpack.c.b16 %v452, %v448
        %v549 = vpack.c.b16 %v453, %v449
        %v550 = vpack.c.b16 %v454, %v450
        %v551 = vpack.c.b16 %v459, %v455
        %v552 = vpack.c.b16 %v460, %v456
        %v553 = vpack.c.b16 %v461, %v457
        %v554 = vpack.c.b16 %v462, %v458
        %v555 = vpack.c.b16 %v467, %v463
        %v556 = vpack.c.b16 %v468, %v464
        %v557 = vpack.c.b16 %v469, %v465
        %v558 = vpack.c.b16 %v470, %v466
        %v559 = vpack.c.b16 %v475, %v471
        %v560 = vpack.c.b16 %v476, %v472
        %v561 = vpack.c.b16 %v477, %v473
        %v562 = vpack.c.b16 %v478, %v474
        %v563 = vpack.c.b16 %v483, %v479
        %v564 = vpack.c.b16 %v484, %v480
        %v565 = vpack.c.b16 %v485, %v481
        %v566 = vpack.c.b16 %v486, %v482
        %v567 = vpack.c.b16 %v491, %v487
        %v568 = vpack.c.b16 %v492, %v488
        %v569 = vpack.c.b16 %v493, %v489
        %v570 = vpack.c.b16 %v494, %v490
        %v571 = vpack.c.b16 %v499, %v495
        %v572 = vpack.c.b16 %v500, %v496
        %v573 = vpack.c.b16 %v501, %v497
        %v574 = vpack.c.b16 %v502, %v498
        %v575 = vpack.c.b16 %v507, %v503
        %v576 = vpack.c.b16 %v508, %v504
        %v577 = vpack.c.b16 %v509, %v505
        %v578 = vpack.c.b16 %v510, %v506
        %v579 = vpack.c.b16 %v515, %v511
        %v580 = vpack.c.b16 %v516, %v512
        %v581 = vpack.c.b16 %v517, %v513
        %v582 = vpack.c.b16 %v518, %v514
        %647 = vmatprep.subr.bf16.mxu0 %v520
        %648 = vmatpush1.bf16.msra.mxu0 %v519
        %649 = vmatprep.subr.bf16.mxu0 %v524
        %650 = vmatpush1.bf16.msra.mxu0 %v523
        %651 = vmatprep.subr.bf16.mxu0 %v528
        %652 = vmatpush1.bf16.msra.mxu0 %v527
        %653 = vmatprep.subr.bf16.mxu0 %v532
        %654 = vmatpush1.bf16.msra.mxu0 %v531
        %655 = vmatprep.subr.bf16.mxu0 %v536
        %656 = vmatpush1.bf16.msra.mxu0 %v535
        %657 = vmatprep.subr.bf16.mxu0 %v540
        %658 = vmatpush1.bf16.msra.mxu0 %v539
        %659 = vmatprep.subr.bf16.mxu0 %v544
        %660 = vmatpush1.bf16.msra.mxu0 %v543
        %661 = vmatprep.subr.bf16.mxu0 %v548
        %662 = vmatpush1.bf16.msra.mxu0 %v547
        %663 = vmatprep.subr.bf16.mxu0 %v552
        %664 = vmatpush1.bf16.msra.mxu0 %v551
        %665 = vmatprep.subr.bf16.mxu0 %v556
        %666 = vmatpush1.bf16.msra.mxu0 %v555
        %667 = vmatprep.subr.bf16.mxu0 %v560
        %668 = vmatpush1.bf16.msra.mxu0 %v559
        %669 = vmatprep.subr.bf16.mxu0 %v564
        %670 = vmatpush1.bf16.msra.mxu0 %v563
        %671 = vmatprep.subr.bf16.mxu0 %v568
        %672 = vmatpush1.bf16.msra.mxu0 %v567
        %673 = vmatprep.subr.bf16.mxu0 %v572
        %674 = vmatpush1.bf16.msra.mxu0 %v571
        %675 = vmatprep.subr.bf16.mxu0 %v576
        %676 = vmatpush1.bf16.msra.mxu0 %v575
        %677 = vmatprep.subr.bf16.mxu0 %v580
        %678 = vmatpush1.bf16.msra.mxu0 %v579
        %679 = vmatprep.mubr.bf16.mxu0 %v296
        %680 = vmatmul.mubr.bf16.gmra.mrb[0].mxu0 %v295
        %v681 = vpop.f32.mrb[0].mxu0
        %v682 = vadd.f32 0.0, %v681
        %v683 = vpop.f32.mrb[0].mxu0
        %v684 = vadd.f32 0.0, %v683
        %v685 = vpop.f32.mrb[0].mxu0
        %v686 = vadd.f32 0.0, %v685
        %v687 = vpop.f32.mrb[0].mxu0
        %v688 = vadd.f32 0.0, %v687
        %689 = vmatprep.mubr.bf16.mxu0 %v298
        %690 = vmatmul.mubr.bf16.gmra.mrb[0].mxu0 %v297
        %v691 = vpop.f32.mrb[0].mxu0
        %v692 = vadd.f32 0.0, %v691
        %v693 = vpop.f32.mrb[0].mxu0
        %v694 = vadd.f32 0.0, %v693
        %v695 = vpop.f32.mrb[0].mxu0
        %v696 = vadd.f32 0.0, %v695
        %v697 = vpop.f32.mrb[0].mxu0
        %v698 = vadd.f32 0.0, %v697
        %699 = vmatprep.mubr.bf16.mxu0 %v300
        %700 = vmatmul.mubr.bf16.gmra.mrb[0].mxu0 %v299
        %v701 = vpop.f32.mrb[0].mxu0
        %v702 = vadd.f32 0.0, %v701
        %v703 = vpop.f32.mrb[0].mxu0
        %v704 = vadd.f32 0.0, %v703
        %v705 = vpop.f32.mrb[0].mxu0
        %v706 = vadd.f32 0.0, %v705
        %v707 = vpop.f32.mrb[0].mxu0
        %v708 = vadd.f32 0.0, %v707
        %709 = vmatprep.mubr.bf16.mxu0 %v302
        %710 = vmatmul.mubr.bf16.gmra.mrb[0].mxu0 %v301
        %v711 = vpop.f32.mrb[0].mxu0
        %v712 = vadd.f32 0.0, %v711
        %v713 = vpop.f32.mrb[0].mxu0
        %v714 = vadd.f32 0.0, %v713
        %v715 = vpop.f32.mrb[0].mxu0
        %v716 = vadd.f32 0.0, %v715
        %v717 = vpop.f32.mrb[0].mxu0
        %v718 = vadd.f32 0.0, %v717
        %719 = vmatprep.mubr.bf16.mxu0 %v304
        %720 = vmatmul.mubr.bf16.gmra.mrb[0].mxu0 %v303
        %v721 = vpop.f32.mrb[0].mxu0
        %v722 = vadd.f32 0.0, %v721
        %v723 = vpop.f32.mrb[0].mxu0
        %v724 = vadd.f32 0.0, %v723
        %v725 = vpop.f32.mrb[0].mxu0
        %v726 = vadd.f32 0.0, %v725
        %v727 = vpop.f32.mrb[0].mxu0
        %v728 = vadd.f32 0.0, %v727
        %729 = vmatprep.mubr.bf16.mxu0 %v306
        %730 = vmatmul.mubr.bf16.gmra.mrb[0].mxu0 %v305
        %v731 = vpop.f32.mrb[0].mxu0
        %v732 = vadd.f32 0.0, %v731
        %v733 = vpop.f32.mrb[0].mxu0
        %v734 = vadd.f32 0.0, %v733
        %v735 = vpop.f32.mrb[0].mxu0
        %v736 = vadd.f32 0.0, %v735
        %v737 = vpop.f32.mrb[0].mxu0
        %v738 = vadd.f32 0.0, %v737
        %739 = vmatprep.mubr.bf16.mxu0 %v308
        %740 = vmatmul.mubr.bf16.gmra.mrb[0].mxu0 %v307
        %v741 = vpop.f32.mrb[0].mxu0
        %v742 = vadd.f32 0.0, %v741
        %v743 = vpop.f32.mrb[0].mxu0
        %v744 = vadd.f32 0.0, %v743
        %v745 = vpop.f32.mrb[0].mxu0
        %v746 = vadd.f32 0.0, %v745
        %v747 = vpop.f32.mrb[0].mxu0
        %v748 = vadd.f32 0.0, %v747
        %749 = vmatprep.mubr.bf16.mxu0 %v310
        %750 = vmatmul.mubr.bf16.gmra.mrb[0].mxu0 %v309
        %v751 = vpop.f32.mrb[0].mxu0
        %v752 = vadd.f32 0.0, %v751
        %v753 = vpop.f32.mrb[0].mxu0
        %v754 = vadd.f32 0.0, %v753
        %v755 = vpop.f32.mrb[0].mxu0
        %v756 = vadd.f32 0.0, %v755
        %v757 = vpop.f32.mrb[0].mxu0
        %v758 = vadd.f32 0.0, %v757
        %759 = vdwg.mxu0
        %760 = vmatprep.subr.bf16.mxu0 %v522
        %761 = vmatpush1.bf16.msra.mxu0 %v521
        %762 = vmatprep.subr.bf16.mxu0 %v526
        %763 = vmatpush1.bf16.msra.mxu0 %v525
        %764 = vmatprep.subr.bf16.mxu0 %v530
        %765 = vmatpush1.bf16.msra.mxu0 %v529
        %766 = vmatprep.subr.bf16.mxu0 %v534
        %767 = vmatpush1.bf16.msra.mxu0 %v533
        %768 = vmatprep.subr.bf16.mxu0 %v538
        %769 = vmatpush1.bf16.msra.mxu0 %v537
        %770 = vmatprep.subr.bf16.mxu0 %v542
        %771 = vmatpush1.bf16.msra.mxu0 %v541
        %772 = vmatprep.subr.bf16.mxu0 %v546
        %773 = vmatpush1.bf16.msra.mxu0 %v545
        %774 = vmatprep.subr.bf16.mxu0 %v550
        %775 = vmatpush1.bf16.msra.mxu0 %v549
        %776 = vmatprep.subr.bf16.mxu0 %v554
        %777 = vmatpush1.bf16.msra.mxu0 %v553
        %778 = vmatprep.subr.bf16.mxu0 %v558
        %779 = vmatpush1.bf16.msra.mxu0 %v557
        %780 = vmatprep.subr.bf16.mxu0 %v562
        %781 = vmatpush1.bf16.msra.mxu0 %v561
        %782 = vmatprep.subr.bf16.mxu0 %v566
        %783 = vmatpush1.bf16.msra.mxu0 %v565
        %784 = vmatprep.subr.bf16.mxu0 %v570
        %785 = vmatpush1.bf16.msra.mxu0 %v569
        %786 = vmatprep.subr.bf16.mxu0 %v574
        %787 = vmatpush1.bf16.msra.mxu0 %v573
        %788 = vmatprep.subr.bf16.mxu0 %v578
        %789 = vmatpush1.bf16.msra.mxu0 %v577
        %790 = vmatprep.subr.bf16.mxu0 %v582
        %791 = vmatpush1.bf16.msra.mxu0 %v581
        %792 = vmatprep.mubr.bf16.mxu0 %v296
        %793 = vmatmul.mubr.bf16.gmra.mrb[0].mxu0 %v295
        %v794 = vpop.f32.mrb[0].mxu0
        %v795 = vadd.f32 0.0, %v794
        %v796 = vpop.f32.mrb[0].mxu0
        %v797 = vadd.f32 0.0, %v796
        %v798 = vpop.f32.mrb[0].mxu0
        %v799 = vadd.f32 0.0, %v798
        %v800 = vpop.f32.mrb[0].mxu0
        %v801 = vadd.f32 0.0, %v800
        %802 = vmatprep.mubr.bf16.mxu0 %v298
        %803 = vmatmul.mubr.bf16.gmra.mrb[0].mxu0 %v297
        %v804 = vpop.f32.mrb[0].mxu0
        %v805 = vadd.f32 0.0, %v804
        %v806 = vpop.f32.mrb[0].mxu0
        %v807 = vadd.f32 0.0, %v806
        %v808 = vpop.f32.mrb[0].mxu0
        %v809 = vadd.f32 0.0, %v808
        %v810 = vpop.f32.mrb[0].mxu0
        %v811 = vadd.f32 0.0, %v810
        %812 = vmatprep.mubr.bf16.mxu0 %v300
        %813 = vmatmul.mubr.bf16.gmra.mrb[0].mxu0 %v299
        %v814 = vpop.f32.mrb[0].mxu0
        %v815 = vadd.f32 0.0, %v814
        %v816 = vpop.f32.mrb[0].mxu0
        %v817 = vadd.f32 0.0, %v816
        %v818 = vpop.f32.mrb[0].mxu0
        %v819 = vadd.f32 0.0, %v818
        %v820 = vpop.f32.mrb[0].mxu0
        %v821 = vadd.f32 0.0, %v820
        %822 = vmatprep.mubr.bf16.mxu0 %v302
        %823 = vmatmul.mubr.bf16.gmra.mrb[0].mxu0 %v301
        %v824 = vpop.f32.mrb[0].mxu0
        %v825 = vadd.f32 0.0, %v824
        %v826 = vpop.f32.mrb[0].mxu0
        %v827 = vadd.f32 0.0, %v826
        %v828 = vpop.f32.mrb[0].mxu0
        %v829 = vadd.f32 0.0, %v828
        %v830 = vpop.f32.mrb[0].mxu0
        %v831 = vadd.f32 0.0, %v830
        %832 = vmatprep.mubr.bf16.mxu0 %v304
        %833 = vmatmul.mubr.bf16.gmra.mrb[0].mxu0 %v303
        %v834 = vpop.f32.mrb[0].mxu0
        %v835 = vadd.f32 0.0, %v834
        %v836 = vpop.f32.mrb[0].mxu0
        %v837 = vadd.f32 0.0, %v836
        %v838 = vpop.f32.mrb[0].mxu0
        %v839 = vadd.f32 0.0, %v838
        %v840 = vpop.f32.mrb[0].mxu0
        %v841 = vadd.f32 0.0, %v840
        %842 = vmatprep.mubr.bf16.mxu0 %v306
        %843 = vmatmul.mubr.bf16.gmra.mrb[0].mxu0 %v305
        %v844 = vpop.f32.mrb[0].mxu0
        %v845 = vadd.f32 0.0, %v844
        %v846 = vpop.f32.mrb[0].mxu0
        %v847 = vadd.f32 0.0, %v846
        %v848 = vpop.f32.mrb[0].mxu0
        %v849 = vadd.f32 0.0, %v848
        %v850 = vpop.f32.mrb[0].mxu0
        %v851 = vadd.f32 0.0, %v850
        %852 = vmatprep.mubr.bf16.mxu0 %v308
        %853 = vmatmul.mubr.bf16.gmra.mrb[0].mxu0 %v307
        %v854 = vpop.f32.mrb[0].mxu0
        %v855 = vadd.f32 0.0, %v854
        %v856 = vpop.f32.mrb[0].mxu0
        %v857 = vadd.f32 0.0, %v856
        %v858 = vpop.f32.mrb[0].mxu0
        %v859 = vadd.f32 0.0, %v858
        %v860 = vpop.f32.mrb[0].mxu0
        %v861 = vadd.f32 0.0, %v860
        %862 = vmatprep.mubr.bf16.mxu0 %v310
        %863 = vmatmul.mubr.bf16.gmra.mrb[0].mxu0 %v309
        %v864 = vpop.f32.mrb[0].mxu0
        %v865 = vadd.f32 0.0, %v864
        %v866 = vpop.f32.mrb[0].mxu0
        %v867 = vadd.f32 0.0, %v866
        %v868 = vpop.f32.mrb[0].mxu0
        %v869 = vadd.f32 0.0, %v868
        %v870 = vpop.f32.mrb[0].mxu0
        %v871 = vadd.f32 0.0, %v870
        %872 = vdwg.mxu0
        %v873 = vpack.c.bf16 %v686, %v682
        %v874 = vpack.c.bf16 %v688, %v684
        %v875 = vpack.c.bf16 %v799, %v795
        %v876 = vpack.c.bf16 %v801, %v797
        %v877 = vpack.c.bf16 %v696, %v692
        %v878 = vpack.c.bf16 %v698, %v694
        %v879 = vpack.c.bf16 %v809, %v805
        %v880 = vpack.c.bf16 %v811, %v807
        %v881 = vpack.c.bf16 %v706, %v702
        %v882 = vpack.c.bf16 %v708, %v704
        %v883 = vpack.c.bf16 %v819, %v815
        %v884 = vpack.c.bf16 %v821, %v817
        %v885 = vpack.c.bf16 %v716, %v712
        %v886 = vpack.c.bf16 %v718, %v714
        %v887 = vpack.c.bf16 %v829, %v825
        %v888 = vpack.c.bf16 %v831, %v827
        %v889 = vpack.c.bf16 %v726, %v722
        %v890 = vpack.c.bf16 %v728, %v724
        %v891 = vpack.c.bf16 %v839, %v835
        %v892 = vpack.c.bf16 %v841, %v837
        %v893 = vpack.c.bf16 %v736, %v732
        %v894 = vpack.c.bf16 %v738, %v734
        %v895 = vpack.c.bf16 %v849, %v845
        %v896 = vpack.c.bf16 %v851, %v847
        %v897 = vpack.c.bf16 %v746, %v742
        %v898 = vpack.c.bf16 %v748, %v744
        %v899 = vpack.c.bf16 %v859, %v855
        %v900 = vpack.c.bf16 %v861, %v857
        %v901 = vpack.c.bf16 %v756, %v752
        %v902 = vpack.c.bf16 %v758, %v754
        %v903 = vpack.c.bf16 %v869, %v865
        %v904 = vpack.c.bf16 %v871, %v867
        %v937 = vunpack.c.l.b16 %v873
        %v938 = vunpack.c.l.b16 %v874
        %v939 = vunpack.c.l.b16 %v875
        %v940 = vunpack.c.l.b16 %v876
        %v941 = vunpack.c.h.b16 %v873
        %v942 = vunpack.c.h.b16 %v874
        %v943 = vunpack.c.h.b16 %v875
        %v944 = vunpack.c.h.b16 %v876
        %v945 = vunpack.c.l.b16 %v877
        %v946 = vunpack.c.l.b16 %v878
        %v947 = vunpack.c.l.b16 %v879
        %v948 = vunpack.c.l.b16 %v880
        %v949 = vunpack.c.h.b16 %v877
        %v950 = vunpack.c.h.b16 %v878
        %v951 = vunpack.c.h.b16 %v879
        %v952 = vunpack.c.h.b16 %v880
        %v953 = vunpack.c.l.b16 %v881
        %v954 = vunpack.c.l.b16 %v882
        %v955 = vunpack.c.l.b16 %v883
        %v956 = vunpack.c.l.b16 %v884
        %v957 = vunpack.c.h.b16 %v881
        %v958 = vunpack.c.h.b16 %v882
        %v959 = vunpack.c.h.b16 %v883
        %v960 = vunpack.c.h.b16 %v884
        %v961 = vunpack.c.l.b16 %v885
        %v962 = vunpack.c.l.b16 %v886
        %v963 = vunpack.c.l.b16 %v887
        %v964 = vunpack.c.l.b16 %v888
        %v965 = vunpack.c.h.b16 %v885
        %v966 = vunpack.c.h.b16 %v886
        %v967 = vunpack.c.h.b16 %v887
        %v968 = vunpack.c.h.b16 %v888
        %v969 = vunpack.c.l.b16 %v889
        %v970 = vunpack.c.l.b16 %v890
        %v971 = vunpack.c.l.b16 %v891
        %v972 = vunpack.c.l.b16 %v892
        %v973 = vunpack.c.h.b16 %v889
        %v974 = vunpack.c.h.b16 %v890
        %v975 = vunpack.c.h.b16 %v891
        %v976 = vunpack.c.h.b16 %v892
        %v977 = vunpack.c.l.b16 %v893
        %v978 = vunpack.c.l.b16 %v894
        %v979 = vunpack.c.l.b16 %v895
        %v980 = vunpack.c.l.b16 %v896
        %v981 = vunpack.c.h.b16 %v893
        %v982 = vunpack.c.h.b16 %v894
        %v983 = vunpack.c.h.b16 %v895
        %v984 = vunpack.c.h.b16 %v896
        %v985 = vunpack.c.l.b16 %v897
        %v986 = vunpack.c.l.b16 %v898
        %v987 = vunpack.c.l.b16 %v899
        %v988 = vunpack.c.l.b16 %v900
        %v989 = vunpack.c.h.b16 %v897
        %v990 = vunpack.c.h.b16 %v898
        %v991 = vunpack.c.h.b16 %v899
        %v992 = vunpack.c.h.b16 %v900
        %v993 = vunpack.c.l.b16 %v901
        %v994 = vunpack.c.l.b16 %v902
        %v995 = vunpack.c.l.b16 %v903
        %v996 = vunpack.c.l.b16 %v904
        %v997 = vunpack.c.h.b16 %v901
        %v998 = vunpack.c.h.b16 %v902
        %v999 = vunpack.c.h.b16 %v903
        %v1000 = vunpack.c.h.b16 %v904
        %v1001 = vpack.c.b16 %v938, %v937
        %v1002 = vpack.c.b16 %v940, %v939
        %v1003 = vpack.c.b16 %v942, %v941
        %v1004 = vpack.c.b16 %v944, %v943
        %v1005 = vpack.c.b16 %v946, %v945
        %v1006 = vpack.c.b16 %v948, %v947
        %v1007 = vpack.c.b16 %v950, %v949
        %v1008 = vpack.c.b16 %v952, %v951
        %v1009 = vpack.c.b16 %v954, %v953
        %v1010 = vpack.c.b16 %v956, %v955
        %v1011 = vpack.c.b16 %v958, %v957
        %v1012 = vpack.c.b16 %v960, %v959
        %v1013 = vpack.c.b16 %v962, %v961
        %v1014 = vpack.c.b16 %v964, %v963
        %v1015 = vpack.c.b16 %v966, %v965
        %v1016 = vpack.c.b16 %v968, %v967
        %v1017 = vpack.c.b16 %v970, %v969
        %v1018 = vpack.c.b16 %v972, %v971
        %v1019 = vpack.c.b16 %v974, %v973
        %v1020 = vpack.c.b16 %v976, %v975
        %v1021 = vpack.c.b16 %v978, %v977
        %v1022 = vpack.c.b16 %v980, %v979
        %v1023 = vpack.c.b16 %v982, %v981
        %v1024 = vpack.c.b16 %v984, %v983
        %v1025 = vpack.c.b16 %v986, %v985
        %v1026 = vpack.c.b16 %v988, %v987
        %v1027 = vpack.c.b16 %v990, %v989
        %v1028 = vpack.c.b16 %v992, %v991
        %v1029 = vpack.c.b16 %v994, %v993
        %v1030 = vpack.c.b16 %v996, %v995
        %v1031 = vpack.c.b16 %v998, %v997
        %v1032 = vpack.c.b16 %v1000, %v999
        %1065 = vst [vmem:[%s165] sm:$0xff] %v1001
        %1066 = vst [vmem:[%s165 + $0x8] sm:$0xff] %v1002
        %1067 = vst [vmem:[%s165 + $0x10] sm:$0xff] %v1003
        %1068 = vst [vmem:[%s165 + $0x18] sm:$0xff] %v1004
        %1069 = vst [vmem:[%s165 + $0x20] sm:$0xff] %v1005
        %1070 = vst [vmem:[%s165 + $0x28] sm:$0xff] %v1006
        %1071 = vst [vmem:[%s165 + $0x30] sm:$0xff] %v1007
        %1072 = vst [vmem:[%s165 + $0x38] sm:$0xff] %v1008
        %1073 = vst [vmem:[%s165 + $0x40] sm:$0xff] %v1009
        %1074 = vst [vmem:[%s165 + $0x48] sm:$0xff] %v1010
        %1075 = vst [vmem:[%s165 + $0x50] sm:$0xff] %v1011
        %1076 = vst [vmem:[%s165 + $0x58] sm:$0xff] %v1012
        %1077 = vst [vmem:[%s165 + $0x60] sm:$0xff] %v1013
        %1078 = vst [vmem:[%s165 + $0x68] sm:$0xff] %v1014
        %1079 = vst [vmem:[%s165 + $0x70] sm:$0xff] %v1015
        %1080 = vst [vmem:[%s165 + $0x78] sm:$0xff] %v1016
        %1081 = vst [vmem:[%s165 + $0x80] sm:$0xff] %v1017
        %1082 = vst [vmem:[%s165 + $0x88] sm:$0xff] %v1018
        %1083 = vst [vmem:[%s165 + $0x90] sm:$0xff] %v1019
        %1084 = vst [vmem:[%s165 + $0x98] sm:$0xff] %v1020
        %1085 = vst [vmem:[%s165 + $0xa0] sm:$0xff] %v1021
        %1086 = vst [vmem:[%s165 + $0xa8] sm:$0xff] %v1022
        %1087 = vst [vmem:[%s165 + $0xb0] sm:$0xff] %v1023
        %1088 = vst [vmem:[%s165 + $0xb8] sm:$0xff] %v1024
        %1089 = vst [vmem:[%s165 + $0xc0] sm:$0xff] %v1025
        %1090 = vst [vmem:[%s165 + $0xc8] sm:$0xff] %v1026
        %1091 = vst [vmem:[%s165 + $0xd0] sm:$0xff] %v1027
        %1092 = vst [vmem:[%s165 + $0xd8] sm:$0xff] %v1028
        %1093 = vst [vmem:[%s165 + $0xe0] sm:$0xff] %v1029
        %1094 = vst [vmem:[%s165 + $0xe8] sm:$0xff] %v1030
        %1095 = vst [vmem:[%s165 + $0xf0] sm:$0xff] %v1031
        %1096 = vst [vmem:[%s165 + $0xf8] sm:$0xff] %v1032
        %s1097 = smul.u32 16, %s14
        %p1098 = scmp.lt.s32.totalorder %s1097, 31
        %s1099 = scalar_select %p1098, %s1097, 31
        %s1100 = smul.addr %s1099, 4
        %s1101 = smul.addr %s1100, 4
        %s1102 = scalar_lea.vmem %s2, %s1101
        // Predicated region
        $region33: #{multilayer_gcn_forward.4} parent=27 // pred_check
          %p1103 = pneg %p79
        $region34: #{multilayer_gcn_forward.4} parent=27 // pred_check_branch
          %1105 = sbr.rel (%p1103) target = $region36
        $region35: #{multilayer_gcn_forward.4} parent=27 // pred_region
          %s1106 = smul.u32 16, %s14
        $region36: #{multilayer_gcn_forward.4} parent=27 // pred_fallthru
          _
      $region28: #{multilayer_gcn_forward.4} parent=5 // pred_fallthru
        _
      %p1107 = scmp.le.s32.totalorder 2, %s9
      // Predicated region
      $region37: #{multilayer_gcn_forward.4} parent=5 // pred_check
        %p1108 = pneg %p1107
      $region38: #{multilayer_gcn_forward.4} parent=5 // pred_check_branch
        %1110 = sbr.rel (%p1108) target = $region40
      $region39: #{multilayer_gcn_forward.4} parent=5 // pred_region
        %s1111 = ssub.s32 %s9, 2
        // Predicated region
        $region41: #{multilayer_gcn_forward.4} parent=39 // pred_check
          %p1112 = pneg %p85
        $region42: #{multilayer_gcn_forward.4} parent=39 // pred_check_branch
          %1114 = sbr.rel (%p1112) target = $region44
        $region43: #{multilayer_gcn_forward.4} parent=39 // pred_region
          %s1115 = smul.u32 16, %s15
          %p1116 = scmp.lt.s32.totalorder %s1115, 31
          %s1117 = scalar_select %p1116, %s1115, 31
          %s1118 = smul.addr %s1117, 4
          %s1119 = smul.addr %s1118, 4
          %s1120 = scalar_lea.vmem %s2, %s1119
        $region44: #{multilayer_gcn_forward.4} parent=39 // pred_fallthru
          _
      $region40: #{multilayer_gcn_forward.4} parent=5 // pred_fallthru
        _
    $region6: #{multilayer_gcn_forward.4} parent=1 // loop_footer
      %s13 = sadd.s32 1, %s9
    $region7: #{multilayer_gcn_forward.4} parent=1 // loop_footer_branch
      %8 = sbr.rel target = $region3
    $region8: #{multilayer_gcn_forward.4} parent=1 // loop_exit
      _
    %1121 = vsyncpa [#allocation3], 1
    %s1122 = scalar_lea.sflag [#allocation3], 1
    %1123 = vsyncpa %s1122, 1

// kernel: multilayer_gcn_forward.5
$region0: #{multilayer_gcn_forward.5}
  #allocation0 [shape = 'u32[]', space=smem, size = 0x4, offset = 0x4, fixed_abs, tag = 'smem constant byte address 0x4 - core index']
  #allocation1 [shape = 'u32[144,128]{1,0:T(1,128)}', space=vmem, size = 0x12000, scoped, tag = 'internal scratch']
  #allocation2 [shape = 'f32[128,256]{1,0:T(8,128)}', space=vmem, size = 0x20000, scoped, tag = 'scratch operand']
  %s0 = inlined_call_operand.vmem [shape: bf16[256,256], index: 0, kind: input, shape index: {}]
  %s1 = inlined_call_operand.vmem [shape: bf16[256,512], index: 1, kind: input, shape index: {}, may-alias: {1,2}]
  %s2 = inlined_call_operand.vmem [shape: bf16[256,512], index: 2, kind: input, shape index: {}, may-alias: {1,2}]
  %s3 = inlined_call_operand.vmem [shape: f32[1,256], index: 3, kind: input, shape index: {}]
  %s4 = inlined_call_operand.vmem [shape: bf16[256,256], index: 4, kind: output, shape index: {}]
  %s5 = sld [smem:[#allocation0]]
  $region133: #{multilayer_gcn_forward.5} parent=0
    _
  %s7 = ssub.s32 1, %s5
  %s8 = scalar_select 0, %s7, %s5
  $region1: #{multilayer_gcn_forward.5} parent=0
    #allocation3 [shape = 'u8[131072]{0}', space=vmem, size = 0x20000, scoped, tag = 'input window, operand 1, single buffered']
    #allocation4 [shape = 'u8[131072]{0}', space=vmem, size = 0x20000, scoped, tag = 'input window, operand 2']
    loop: start=0, step=1, limit=4
    $region2: #{multilayer_gcn_forward.5} parent=1 // loop_pre_header
      _
    $region3: #{multilayer_gcn_forward.5} parent=1 // loop_header
      %s10 = sphi 0, %s14
      %p11 = scmp.ge.s32.totalorder %s10, 4
      %s17 = sphi 0, %s36
      %s18 = sphi 0, %s32
      %s19 = sphi 0, %s28
      %s20 = sphi 0, %s17
      %s21 = sphi 0, %s18
      %s22 = sphi 0, %s19
      %s23 = sphi 0, %s20
      %s24 = sphi 0, %s21
      %s25 = sphi 0, %s22
      %s41 = sphi 0, %s43
      %s44 = sphi 0, %s41
      %s45 = sphi 0, %s44
      %s61 = sphi 0, %s45
      %s69 = sphi 0, %s71
      %s72 = sphi 0, %s69
      %s73 = sphi 0, %s72
      %s89 = sphi 0, %s73
      %s99 = sphi 0, %s101
      %s102 = sphi 0, %s99
      %s103 = sphi 0, %s102
      %s119 = sphi 0, %s103
      %s125 = sphi 0, %s127
      %s128 = sphi 0, %s125
      %s129 = sphi 0, %s128
      %s145 = sphi 0, %s129
      %s153 = sphi 0, %s155
      %s156 = sphi 0, %s153
      %s157 = sphi 0, %s156
      %s173 = sphi 0, %s157
    $region4: #{multilayer_gcn_forward.5} parent=1 // loop_header_branch
      %13 = sbr.rel (%p11) target = $region8
    $region5: #{multilayer_gcn_forward.5} parent=1 // loop_body
      %s15 = ssub.s32 %s10, 1
      %s16 = ssub.s32 %s10, 2
      %s26 = sadd.s32 1, %s19
      %p27 = scmp.ge.s32.totalorder %s26, 1
      %s28 = scalar_select %p27, 0, %s26
      %s29 = sadd.s32 1, %s18
      %s30 = scalar_select %p27, %s29, %s18
      %p31 = scmp.ge.s32.totalorder %s30, 1
      %s32 = scalar_select %p31, 0, %s30
      %s33 = sadd.s32 1, %s17
      %s34 = scalar_select %p31, %s33, %s17
      %p35 = scmp.ge.s32.totalorder %s34, 2
      %s36 = scalar_select %p35, 0, %s34
      %s37 = ssub.s32 %s17, %s36
      %s38 = ssub.s32 %s19, %s28
      %s39 = sor.u32 %s37, %s38
      %p40 = scmp.eq.s32.totalorder %s39, 0
      %s42 = sadd.s32 %s41, 1
      %s43 = scalar_select %p40, %s41, %s42
      %p46 = pneg %p40
      %p47 = scmp.eq.s32.totalorder %s10, 1
      %p48 = por %p46, %p47
      %p49 = scmp.ne.s32.totalorder %s41, %s44
      %p50 = scmp.eq.s32.totalorder %s10, 0
      %p51 = por %p49, %p50
      %p52 = scmp.ne.s32.totalorder %s41, %s44
      %p53 = scmp.eq.s32.totalorder %s15, 1
      %p54 = por %p52, %p53
      %p55 = scmp.ne.s32.totalorder %s44, %s45
      %p56 = scmp.eq.s32.totalorder %s15, 0
      %p57 = por %p55, %p56
      %p58 = scmp.ne.s32.totalorder %s44, %s45
      %p59 = scmp.eq.s32.totalorder %s16, 1
      %p60 = por %p58, %p59
      %p62 = scmp.ne.s32.totalorder %s45, %s61
      %p63 = scmp.eq.s32.totalorder %s16, 0
      %p64 = por %p62, %p63
      %s65 = ssub.s32 %s19, %s28
      %s66 = ssub.s32 %s18, %s32
      %s67 = sor.u32 %s65, %s66
      %p68 = scmp.eq.s32.totalorder %s67, 0
      %s70 = sadd.s32 %s69, 1
      %s71 = scalar_select %p68, %s69, %s70
      %p74 = pneg %p68
      %p75 = scmp.eq.s32.totalorder %s10, 1
      %p76 = por %p74, %p75
      %p77 = scmp.ne.s32.totalorder %s69, %s72
      %p78 = scmp.eq.s32.totalorder %s10, 0
      %p79 = por %p77, %p78
      %p80 = scmp.ne.s32.totalorder %s69, %s72
      %p81 = scmp.eq.s32.totalorder %s15, 1
      %p82 = por %p80, %p81
      %p83 = scmp.ne.s32.totalorder %s72, %s73
      %p84 = scmp.eq.s32.totalorder %s15, 0
      %p85 = por %p83, %p84
      %p86 = scmp.ne.s32.totalorder %s72, %s73
      %p87 = scmp.eq.s32.totalorder %s16, 1
      %p88 = por %p86, %p87
      %p90 = scmp.ne.s32.totalorder %s73, %s89
      %p91 = scmp.eq.s32.totalorder %s16, 0
      %p92 = por %p90, %p91
      %s93 = sadd.s32 %s18, 1
      %s94 = sadd.s32 %s32, 1
      %s95 = ssub.s32 %s17, %s36
      %s96 = ssub.s32 %s93, %s94
      %s97 = sor.u32 %s95, %s96
      %p98 = scmp.eq.s32.totalorder %s97, 0
      %s100 = sadd.s32 %s99, 1
      %s101 = scalar_select %p98, %s99, %s100
      %p104 = pneg %p98
      %p105 = scmp.eq.s32.totalorder %s10, 1
      %p106 = por %p104, %p105
      %p107 = scmp.ne.s32.totalorder %s99, %s102
      %p108 = scmp.eq.s32.totalorder %s10, 0
      %p109 = por %p107, %p108
      %p110 = scmp.ne.s32.totalorder %s99, %s102
      %p111 = scmp.eq.s32.totalorder %s15, 1
      %p112 = por %p110, %p111
      %p113 = scmp.ne.s32.totalorder %s102, %s103
      %p114 = scmp.eq.s32.totalorder %s15, 0
      %p115 = por %p113, %p114
      %p116 = scmp.ne.s32.totalorder %s102, %s103
      %p117 = scmp.eq.s32.totalorder %s16, 1
      %p118 = por %p116, %p117
      %p120 = scmp.ne.s32.totalorder %s103, %s119
      %p121 = scmp.eq.s32.totalorder %s16, 0
      %p122 = por %p120, %p121
      %s123 = ssub.s32 %s18, %s32
      %p124 = scmp.eq.s32.totalorder %s123, 0
      %s126 = sadd.s32 %s125, 1
      %s127 = scalar_select %p124, %s125, %s126
      %p130 = pneg %p124
      %p131 = scmp.eq.s32.totalorder %s10, 1
      %p132 = por %p130, %p131
      %p133 = scmp.ne.s32.totalorder %s125, %s128
      %p134 = scmp.eq.s32.totalorder %s10, 0
      %p135 = por %p133, %p134
      %p136 = scmp.ne.s32.totalorder %s125, %s128
      %p137 = scmp.eq.s32.totalorder %s15, 1
      %p138 = por %p136, %p137
      %p139 = scmp.ne.s32.totalorder %s128, %s129
      %p140 = scmp.eq.s32.totalorder %s15, 0
      %p141 = por %p139, %p140
      %p142 = scmp.ne.s32.totalorder %s128, %s129
      %p143 = scmp.eq.s32.totalorder %s16, 1
      %p144 = por %p142, %p143
      %p146 = scmp.ne.s32.totalorder %s129, %s145
      %p147 = scmp.eq.s32.totalorder %s16, 0
      %p148 = por %p146, %p147
      %s149 = ssub.s32 %s17, %s36
      %s150 = ssub.s32 %s18, %s32
      %s151 = sor.u32 %s149, %s150
      %p152 = scmp.eq.s32.totalorder %s151, 0
      %s154 = sadd.s32 %s153, 1
      %s155 = scalar_select %p152, %s153, %s154
      %p158 = pneg %p152
      %p159 = scmp.eq.s32.totalorder %s10, 1
      %p160 = por %p158, %p159
      %p161 = scmp.ne.s32.totalorder %s153, %s156
      %p162 = scmp.eq.s32.totalorder %s10, 0
      %p163 = por %p161, %p162
      %p164 = scmp.ne.s32.totalorder %s153, %s156
      %p165 = scmp.eq.s32.totalorder %s15, 1
      %p166 = por %p164, %p165
      %p167 = scmp.ne.s32.totalorder %s156, %s157
      %p168 = scmp.eq.s32.totalorder %s15, 0
      %p169 = por %p167, %p168
      %p170 = scmp.ne.s32.totalorder %s156, %s157
      %p171 = scmp.eq.s32.totalorder %s16, 1
      %p172 = por %p170, %p171
      %p174 = scmp.ne.s32.totalorder %s157, %s173
      %p175 = scmp.eq.s32.totalorder %s16, 0
      %p176 = por %p174, %p175
      %p177 = scmp.le.s32.totalorder 1, %s10
      %p178 = scmp.lt.s32.totalorder %s10, 3
      %p179 = pnand %p177, %p178
      %p180 = pneg %p179
      // Predicated region
      $region9: #{multilayer_gcn_forward.5} parent=5 // pred_check
        _
      $region10: #{multilayer_gcn_forward.5} parent=5 // pred_check_branch
        %182 = sbr.rel (%p179) target = $region12
      $region11: #{multilayer_gcn_forward.5} parent=5 // pred_region
        %s183 = ssub.s32 %s10, 1
        // Predicated region
        $region13: #{multilayer_gcn_forward.5} parent=11 // pred_check
          %p184 = pneg %p85
        $region14: #{multilayer_gcn_forward.5} parent=11 // pred_check_branch
          %186 = sbr.rel (%p184) target = $region16
        $region15: #{multilayer_gcn_forward.5} parent=11 // pred_region
          %s187 = smul.u32 32, %s22
          %s188 = smul.u32 2, %s21
          %s189 = smul.addr %s187, 4
          %s190 = sadd.s32 %s188, %s189
          %s191 = smul.addr %s190, 4
          %s192 = scalar_lea.vmem %s1, %s191
          // Predicated region
          $region17: #{multilayer_gcn_forward.5} parent=15 // pred_check
            _
          $region18: #{multilayer_gcn_forward.5} parent=15 // pred_check_branch
            %194 = sbr.rel (0) target = $region20
          $region19: #{multilayer_gcn_forward.5} parent=15 // pred_region
            // Predicated region
            $region21: #{multilayer_gcn_forward.5} parent=19 // pred_check
              _
            $region22: #{multilayer_gcn_forward.5} parent=19 // pred_check_branch
              %196 = sbr.rel (0) target = $region24
            $region23: #{multilayer_gcn_forward.5} parent=19 // pred_region
              // Predicated region
              $region36: #{multilayer_gcn_forward.5} parent=23 // pred_check
                _
              $region37: #{multilayer_gcn_forward.5} parent=23 // pred_check_branch
                %273 = sbr.rel (0) target = $region39
              $region38: #{multilayer_gcn_forward.5} parent=23 // pred_region
                loop: start=0, step=1, limit=1
                $region40: #{multilayer_gcn_forward.5} parent=38 // loop_pre_header
                  _
                $region41: #{multilayer_gcn_forward.5} parent=38 // loop_header
                  %s275 = sphi 0, %s279
                  %p276 = scmp.ge.s32.totalorder %s275, 1
                  %s280 = sphi %s192, %s192
                  %s281 = sphi [#allocation3], [#allocation3]
                $region42: #{multilayer_gcn_forward.5} parent=38 // loop_header_branch
                  %278 = sbr.rel (%p276) target = $region46
                $region43: #{multilayer_gcn_forward.5} parent=38 // loop_body
                  %v282 = vld [vmem:[%s280] sm:$0xff]
                  %283 = vst [vmem:[%s281] sm:$0xff] %v282
                  %v284 = vld [vmem:[%s280 + $0x10] sm:$0xff]
                  %285 = vst [vmem:[%s281 + $0x8] sm:$0xff] %v284
                  %v286 = vld [vmem:[%s280 + $0x20] sm:$0xff]
                  %287 = vst [vmem:[%s281 + $0x10] sm:$0xff] %v286
                  %v288 = vld [vmem:[%s280 + $0x30] sm:$0xff]
                  %289 = vst [vmem:[%s281 + $0x18] sm:$0xff] %v288
                  %v290 = vld [vmem:[%s280 + $0x40] sm:$0xff]
                  %291 = vst [vmem:[%s281 + $0x20] sm:$0xff] %v290
                  %v292 = vld [vmem:[%s280 + $0x50] sm:$0xff]
                  %293 = vst [vmem:[%s281 + $0x28] sm:$0xff] %v292
                  %v294 = vld [vmem:[%s280 + $0x60] sm:$0xff]
                  %295 = vst [vmem:[%s281 + $0x30] sm:$0xff] %v294
                  %v296 = vld [vmem:[%s280 + $0x70] sm:$0xff]
                  %297 = vst [vmem:[%s281 + $0x38] sm:$0xff] %v296
                  %v298 = vld [vmem:[%s280 + $0x80] sm:$0xff]
                  %299 = vst [vmem:[%s281 + $0x40] sm:$0xff] %v298
                  %v300 = vld [vmem:[%s280 + $0x90] sm:$0xff]
                  %301 = vst [vmem:[%s281 + $0x48] sm:$0xff] %v300
                  %v302 = vld [vmem:[%s280 + $0xa0] sm:$0xff]
                  %303 = vst [vmem:[%s281 + $0x50] sm:$0xff] %v302
                  %v304 = vld [vmem:[%s280 + $0xb0] sm:$0xff]
                  %305 = vst [vmem:[%s281 + $0x58] sm:$0xff] %v304
                  %v306 = vld [vmem:[%s280 + $0xc0] sm:$0xff]
                  %307 = vst [vmem:[%s281 + $0x60] sm:$0xff] %v306
                  %v308 = vld [vmem:[%s280 + $0xd0] sm:$0xff]
                  %309 = vst [vmem:[%s281 + $0x68] sm:$0xff] %v308
                  %v310 = vld [vmem:[%s280 + $0xe0] sm:$0xff]
                  %311 = vst [vmem:[%s281 + $0x70] sm:$0xff] %v310
                  %v312 = vld [vmem:[%s280 + $0xf0] sm:$0xff]
                  %313 = vst [vmem:[%s281 + $0x78] sm:$0xff] %v312
                  %v314 = vld [vmem:[%s280 + $0x100] sm:$0xff]
                  %315 = vst [vmem:[%s281 + $0x80] sm:$0xff] %v314
                  %v316 = vld [vmem:[%s280 + $0x110] sm:$0xff]
                  %317 = vst [vmem:[%s281 + $0x88] sm:$0xff] %v316
                  %v318 = vld [vmem:[%s280 + $0x120] sm:$0xff]
                  %319 = vst [vmem:[%s281 + $0x90] sm:$0xff] %v318
                  %v320 = vld [vmem:[%s280 + $0x130] sm:$0xff]
                  %321 = vst [vmem:[%s281 + $0x98] sm:$0xff] %v320
                  %v322 = vld [vmem:[%s280 + $0x140] sm:$0xff]
                  %323 = vst [vmem:[%s281 + $0xa0] sm:$0xff] %v322
                  %v324 = vld [vmem:[%s280 + $0x150] sm:$0xff]
                  %325 = vst [vmem:[%s281 + $0xa8] sm:$0xff] %v324
                  %v326 = vld [vmem:[%s280 + $0x160] sm:$0xff]
                  %327 = vst [vmem:[%s281 + $0xb0] sm:$0xff] %v326
                  %v328 = vld [vmem:[%s280 + $0x170] sm:$0xff]
                  %329 = vst [vmem:[%s281 + $0xb8] sm:$0xff] %v328
                  %v330 = vld [vmem:[%s280 + $0x180] sm:$0xff]
                  %331 = vst [vmem:[%s281 + $0xc0] sm:$0xff] %v330
                  %v332 = vld [vmem:[%s280 + $0x190] sm:$0xff]
                  %333 = vst [vmem:[%s281 + $0xc8] sm:$0xff] %v332
                  %v334 = vld [vmem:[%s280 + $0x1a0] sm:$0xff]
                  %335 = vst [vmem:[%s281 + $0xd0] sm:$0xff] %v334
                  %v336 = vld [vmem:[%s280 + $0x1b0] sm:$0xff]
                  %337 = vst [vmem:[%s281 + $0xd8] sm:$0xff] %v336
                  %v338 = vld [vmem:[%s280 + $0x1c0] sm:$0xff]
                  %339 = vst [vmem:[%s281 + $0xe0] sm:$0xff] %v338
                  %v340 = vld [vmem:[%s280 + $0x1d0] sm:$0xff]
                  %341 = vst [vmem:[%s281 + $0xe8] sm:$0xff] %v340
                  %v342 = vld [vmem:[%s280 + $0x1e0] sm:$0xff]
                  %343 = vst [vmem:[%s281 + $0xf0] sm:$0xff] %v342
                  %v344 = vld [vmem:[%s280 + $0x1f0] sm:$0xff]
                  %345 = vst [vmem:[%s281 + $0xf8] sm:$0xff] %v344
                $region44: #{multilayer_gcn_forward.5} parent=38 // loop_footer
                  %s279 = sadd.s32 1, %s275
                $region45: #{multilayer_gcn_forward.5} parent=38 // loop_footer_branch
                  %274 = sbr.rel target = $region41
                $region46: #{multilayer_gcn_forward.5} parent=38 // loop_exit
                  _
              $region39: #{multilayer_gcn_forward.5} parent=23 // pred_fallthru
                _
              // Predicated region
              $region47: #{multilayer_gcn_forward.5} parent=23 // pred_check
                _
              $region48: #{multilayer_gcn_forward.5} parent=23 // pred_check_branch
                %347 = sbr.rel target = $region50
              $region49: #{multilayer_gcn_forward.5} parent=23 // pred_region
                _
              $region50: #{multilayer_gcn_forward.5} parent=23 // pred_fallthru
                _
            $region24: #{multilayer_gcn_forward.5} parent=19 // pred_fallthru
              _
            // Predicated region
            $region25: #{multilayer_gcn_forward.5} parent=19 // pred_check
              _
            $region26: #{multilayer_gcn_forward.5} parent=19 // pred_check_branch
              %198 = sbr.rel target = $region28
            $region27: #{multilayer_gcn_forward.5} parent=19 // pred_region
              loop: start=0, step=1, limit=1
              $region29: #{multilayer_gcn_forward.5} parent=27 // loop_pre_header
                _
              $region30: #{multilayer_gcn_forward.5} parent=27 // loop_header
                %s201 = sphi 0, %s205
                %p202 = scmp.ge.s32.totalorder %s201, 1
                %s206 = sphi %s192, %s192
                %s207 = sphi [#allocation3], [#allocation3]
              $region31: #{multilayer_gcn_forward.5} parent=27 // loop_header_branch
                %204 = sbr.rel (%p202) target = $region35
              $region32: #{multilayer_gcn_forward.5} parent=27 // loop_body
                %v208 = vld [vmem:[%s206] sm:$0xff]
                %209 = vst [vmem:[%s207] sm:$0xff] %v208
                %v210 = vld [vmem:[%s206 + $0x10] sm:$0xff]
                %211 = vst [vmem:[%s207 + $0x8] sm:$0xff] %v210
                %v212 = vld [vmem:[%s206 + $0x20] sm:$0xff]
                %213 = vst [vmem:[%s207 + $0x10] sm:$0xff] %v212
                %v214 = vld [vmem:[%s206 + $0x30] sm:$0xff]
                %215 = vst [vmem:[%s207 + $0x18] sm:$0xff] %v214
                %v216 = vld [vmem:[%s206 + $0x40] sm:$0xff]
                %217 = vst [vmem:[%s207 + $0x20] sm:$0xff] %v216
                %v218 = vld [vmem:[%s206 + $0x50] sm:$0xff]
                %219 = vst [vmem:[%s207 + $0x28] sm:$0xff] %v218
                %v220 = vld [vmem:[%s206 + $0x60] sm:$0xff]
                %221 = vst [vmem:[%s207 + $0x30] sm:$0xff] %v220
                %v222 = vld [vmem:[%s206 + $0x70] sm:$0xff]
                %223 = vst [vmem:[%s207 + $0x38] sm:$0xff] %v222
                %v224 = vld [vmem:[%s206 + $0x80] sm:$0xff]
                %225 = vst [vmem:[%s207 + $0x40] sm:$0xff] %v224
                %v226 = vld [vmem:[%s206 + $0x90] sm:$0xff]
                %227 = vst [vmem:[%s207 + $0x48] sm:$0xff] %v226
                %v228 = vld [vmem:[%s206 + $0xa0] sm:$0xff]
                %229 = vst [vmem:[%s207 + $0x50] sm:$0xff] %v228
                %v230 = vld [vmem:[%s206 + $0xb0] sm:$0xff]
                %231 = vst [vmem:[%s207 + $0x58] sm:$0xff] %v230
                %v232 = vld [vmem:[%s206 + $0xc0] sm:$0xff]
                %233 = vst [vmem:[%s207 + $0x60] sm:$0xff] %v232
                %v234 = vld [vmem:[%s206 + $0xd0] sm:$0xff]
                %235 = vst [vmem:[%s207 + $0x68] sm:$0xff] %v234
                %v236 = vld [vmem:[%s206 + $0xe0] sm:$0xff]
                %237 = vst [vmem:[%s207 + $0x70] sm:$0xff] %v236
                %v238 = vld [vmem:[%s206 + $0xf0] sm:$0xff]
                %239 = vst [vmem:[%s207 + $0x78] sm:$0xff] %v238
                %v240 = vld [vmem:[%s206 + $0x100] sm:$0xff]
                %241 = vst [vmem:[%s207 + $0x80] sm:$0xff] %v240
                %v242 = vld [vmem:[%s206 + $0x110] sm:$0xff]
                %243 = vst [vmem:[%s207 + $0x88] sm:$0xff] %v242
                %v244 = vld [vmem:[%s206 + $0x120] sm:$0xff]
                %245 = vst [vmem:[%s207 + $0x90] sm:$0xff] %v244
                %v246 = vld [vmem:[%s206 + $0x130] sm:$0xff]
                %247 = vst [vmem:[%s207 + $0x98] sm:$0xff] %v246
                %v248 = vld [vmem:[%s206 + $0x140] sm:$0xff]
                %249 = vst [vmem:[%s207 + $0xa0] sm:$0xff] %v248
                %v250 = vld [vmem:[%s206 + $0x150] sm:$0xff]
                %251 = vst [vmem:[%s207 + $0xa8] sm:$0xff] %v250
                %v252 = vld [vmem:[%s206 + $0x160] sm:$0xff]
                %253 = vst [vmem:[%s207 + $0xb0] sm:$0xff] %v252
                %v254 = vld [vmem:[%s206 + $0x170] sm:$0xff]
                %255 = vst [vmem:[%s207 + $0xb8] sm:$0xff] %v254
                %v256 = vld [vmem:[%s206 + $0x180] sm:$0xff]
                %257 = vst [vmem:[%s207 + $0xc0] sm:$0xff] %v256
                %v258 = vld [vmem:[%s206 + $0x190] sm:$0xff]
                %259 = vst [vmem:[%s207 + $0xc8] sm:$0xff] %v258
                %v260 = vld [vmem:[%s206 + $0x1a0] sm:$0xff]
                %261 = vst [vmem:[%s207 + $0xd0] sm:$0xff] %v260
                %v262 = vld [vmem:[%s206 + $0x1b0] sm:$0xff]
                %263 = vst [vmem:[%s207 + $0xd8] sm:$0xff] %v262
                %v264 = vld [vmem:[%s206 + $0x1c0] sm:$0xff]
                %265 = vst [vmem:[%s207 + $0xe0] sm:$0xff] %v264
                %v266 = vld [vmem:[%s206 + $0x1d0] sm:$0xff]
                %267 = vst [vmem:[%s207 + $0xe8] sm:$0xff] %v266
                %v268 = vld [vmem:[%s206 + $0x1e0] sm:$0xff]
                %269 = vst [vmem:[%s207 + $0xf0] sm:$0xff] %v268
                %v270 = vld [vmem:[%s206 + $0x1f0] sm:$0xff]
                %271 = vst [vmem:[%s207 + $0xf8] sm:$0xff] %v270
              $region33: #{multilayer_gcn_forward.5} parent=27 // loop_footer
                %s205 = sadd.s32 1, %s201
              $region34: #{multilayer_gcn_forward.5} parent=27 // loop_footer_branch
                %200 = sbr.rel target = $region30
              $region35: #{multilayer_gcn_forward.5} parent=27 // loop_exit
                _
            $region28: #{multilayer_gcn_forward.5} parent=19 // pred_fallthru
              _
          $region20: #{multilayer_gcn_forward.5} parent=15 // pred_fallthru
            _
          %348 = vnop
        $region16: #{multilayer_gcn_forward.5} parent=11 // pred_fallthru
          _
        // Predicated region
        $region51: #{multilayer_gcn_forward.5} parent=11 // pred_check
          %p349 = pneg %p141
        $region52: #{multilayer_gcn_forward.5} parent=11 // pred_check_branch
          %351 = sbr.rel (%p349) target = $region54
        $region53: #{multilayer_gcn_forward.5} parent=11 // pred_region
          %s352 = smul.u32 2, %s21
          %p353 = scmp.lt.s32.totalorder %s352, 1
          %s354 = scalar_select %p353, %s352, 1
          %s355 = scalar_lea.vmem %s3, %s354
          %s356 = smul.u32 2, %s21
        $region54: #{multilayer_gcn_forward.5} parent=11 // pred_fallthru
          _
      $region12: #{multilayer_gcn_forward.5} parent=5 // pred_fallthru
        _
      %p357 = scmp.lt.s32.totalorder %s10, 2
      // Predicated region
      $region55: #{multilayer_gcn_forward.5} parent=5 // pred_check
        %p358 = pneg %p357
      $region56: #{multilayer_gcn_forward.5} parent=5 // pred_check_branch
        %360 = sbr.rel (%p358) target = $region58
      $region57: #{multilayer_gcn_forward.5} parent=5 // pred_region
        // Predicated region
        $region59: #{multilayer_gcn_forward.5} parent=57 // pred_check
          %p361 = pneg %p51
        $region60: #{multilayer_gcn_forward.5} parent=57 // pred_check_branch
          %363 = sbr.rel (%p361) target = $region62
        $region61: #{multilayer_gcn_forward.5} parent=57 // pred_region
          %s364 = smul.u32 16, %s17
          %s365 = smul.u32 2, %s19
          %p366 = scmp.lt.s32.totalorder %s364, 31
          %s367 = scalar_select %p366, %s364, 31
          %p368 = scmp.lt.s32.totalorder %s365, 1
          %s369 = scalar_select %p368, %s365, 1
          %s370 = smul.addr %s367, 2
          %s371 = sadd.s32 %s369, %s370
          %s372 = smul.addr %s371, 4
          %s373 = scalar_lea.vmem %s0, %s372
          %s374 = smul.u32 16, %s17
          %s375 = smul.u32 2, %s19
        $region62: #{multilayer_gcn_forward.5} parent=57 // pred_fallthru
          _
        // Predicated region
        $region63: #{multilayer_gcn_forward.5} parent=57 // pred_check
          %p376 = pneg %p109
        $region64: #{multilayer_gcn_forward.5} parent=57 // pred_check_branch
          %378 = sbr.rel (%p376) target = $region66
        $region65: #{multilayer_gcn_forward.5} parent=57 // pred_region
          %s379 = sand.u32 %s99, 1
          %s380 = sand.u32 %s99, 1
          %s381 = smul.addr %s380, 128
          %s382 = scalar_lea.vmem [#allocation4], %s381
          %s383 = sadd.s32 %s18, 1
          %s384 = smul.u32 16, %s17
          %s385 = smul.u32 2, %s383
          %s386 = smul.addr %s384, 4
          %s387 = sadd.s32 %s385, %s386
          %s388 = smul.addr %s387, 4
          %s389 = scalar_lea.vmem %s2, %s388
          // Predicated region
          $region67: #{multilayer_gcn_forward.5} parent=65 // pred_check
            _
          $region68: #{multilayer_gcn_forward.5} parent=65 // pred_check_branch
            %391 = sbr.rel (0) target = $region70
          $region69: #{multilayer_gcn_forward.5} parent=65 // pred_region
            // Predicated region
            $region71: #{multilayer_gcn_forward.5} parent=69 // pred_check
              _
            $region72: #{multilayer_gcn_forward.5} parent=69 // pred_check_branch
              %393 = sbr.rel (0) target = $region74
            $region73: #{multilayer_gcn_forward.5} parent=69 // pred_region
              // Predicated region
              $region86: #{multilayer_gcn_forward.5} parent=73 // pred_check
                _
              $region87: #{multilayer_gcn_forward.5} parent=73 // pred_check_branch
                %438 = sbr.rel (0) target = $region89
              $region88: #{multilayer_gcn_forward.5} parent=73 // pred_region
                loop: start=0, step=1, limit=1
                $region90: #{multilayer_gcn_forward.5} parent=88 // loop_pre_header
                  _
                $region91: #{multilayer_gcn_forward.5} parent=88 // loop_header
                  %s440 = sphi 0, %s444
                  %p441 = scmp.ge.s32.totalorder %s440, 1
                  %s445 = sphi %s389, %s389
                  %s446 = sphi %s382, %s382
                $region92: #{multilayer_gcn_forward.5} parent=88 // loop_header_branch
                  %443 = sbr.rel (%p441) target = $region96
                $region93: #{multilayer_gcn_forward.5} parent=88 // loop_body
                  %v447 = vld [vmem:[%s445] sm:$0xff]
                  %448 = vst [vmem:[%s446] sm:$0xff] %v447
                  %v449 = vld [vmem:[%s445 + $0x10] sm:$0xff]
                  %450 = vst [vmem:[%s446 + $0x8] sm:$0xff] %v449
                  %v451 = vld [vmem:[%s445 + $0x20] sm:$0xff]
                  %452 = vst [vmem:[%s446 + $0x10] sm:$0xff] %v451
                  %v453 = vld [vmem:[%s445 + $0x30] sm:$0xff]
                  %454 = vst [vmem:[%s446 + $0x18] sm:$0xff] %v453
                  %v455 = vld [vmem:[%s445 + $0x40] sm:$0xff]
                  %456 = vst [vmem:[%s446 + $0x20] sm:$0xff] %v455
                  %v457 = vld [vmem:[%s445 + $0x50] sm:$0xff]
                  %458 = vst [vmem:[%s446 + $0x28] sm:$0xff] %v457
                  %v459 = vld [vmem:[%s445 + $0x60] sm:$0xff]
                  %460 = vst [vmem:[%s446 + $0x30] sm:$0xff] %v459
                  %v461 = vld [vmem:[%s445 + $0x70] sm:$0xff]
                  %462 = vst [vmem:[%s446 + $0x38] sm:$0xff] %v461
                  %v463 = vld [vmem:[%s445 + $0x80] sm:$0xff]
                  %464 = vst [vmem:[%s446 + $0x40] sm:$0xff] %v463
                  %v465 = vld [vmem:[%s445 + $0x90] sm:$0xff]
                  %466 = vst [vmem:[%s446 + $0x48] sm:$0xff] %v465
                  %v467 = vld [vmem:[%s445 + $0xa0] sm:$0xff]
                  %468 = vst [vmem:[%s446 + $0x50] sm:$0xff] %v467
                  %v469 = vld [vmem:[%s445 + $0xb0] sm:$0xff]
                  %470 = vst [vmem:[%s446 + $0x58] sm:$0xff] %v469
                  %v471 = vld [vmem:[%s445 + $0xc0] sm:$0xff]
                  %472 = vst [vmem:[%s446 + $0x60] sm:$0xff] %v471
                  %v473 = vld [vmem:[%s445 + $0xd0] sm:$0xff]
                  %474 = vst [vmem:[%s446 + $0x68] sm:$0xff] %v473
                  %v475 = vld [vmem:[%s445 + $0xe0] sm:$0xff]
                  %476 = vst [vmem:[%s446 + $0x70] sm:$0xff] %v475
                  %v477 = vld [vmem:[%s445 + $0xf0] sm:$0xff]
                  %478 = vst [vmem:[%s446 + $0x78] sm:$0xff] %v477
                $region94: #{multilayer_gcn_forward.5} parent=88 // loop_footer
                  %s444 = sadd.s32 1, %s440
                $region95: #{multilayer_gcn_forward.5} parent=88 // loop_footer_branch
                  %439 = sbr.rel target = $region91
                $region96: #{multilayer_gcn_forward.5} parent=88 // loop_exit
                  _
              $region89: #{multilayer_gcn_forward.5} parent=73 // pred_fallthru
                _
              // Predicated region
              $region97: #{multilayer_gcn_forward.5} parent=73 // pred_check
                _
              $region98: #{multilayer_gcn_forward.5} parent=73 // pred_check_branch
                %480 = sbr.rel target = $region100
              $region99: #{multilayer_gcn_forward.5} parent=73 // pred_region
                _
              $region100: #{multilayer_gcn_forward.5} parent=73 // pred_fallthru
                _
            $region74: #{multilayer_gcn_forward.5} parent=69 // pred_fallthru
              _
            // Predicated region
            $region75: #{multilayer_gcn_forward.5} parent=69 // pred_check
              _
            $region76: #{multilayer_gcn_forward.5} parent=69 // pred_check_branch
              %395 = sbr.rel target = $region78
            $region77: #{multilayer_gcn_forward.5} parent=69 // pred_region
              loop: start=0, step=1, limit=1
              $region79: #{multilayer_gcn_forward.5} parent=77 // loop_pre_header
                _
              $region80: #{multilayer_gcn_forward.5} parent=77 // loop_header
                %s398 = sphi 0, %s402
                %p399 = scmp.ge.s32.totalorder %s398, 1
                %s403 = sphi %s389, %s389
                %s404 = sphi %s382, %s382
              $region81: #{multilayer_gcn_forward.5} parent=77 // loop_header_branch
                %401 = sbr.rel (%p399) target = $region85
              $region82: #{multilayer_gcn_forward.5} parent=77 // loop_body
                %v405 = vld [vmem:[%s403] sm:$0xff]
                %406 = vst [vmem:[%s404] sm:$0xff] %v405
                %v407 = vld [vmem:[%s403 + $0x10] sm:$0xff]
                %408 = vst [vmem:[%s404 + $0x8] sm:$0xff] %v407
                %v409 = vld [vmem:[%s403 + $0x20] sm:$0xff]
                %410 = vst [vmem:[%s404 + $0x10] sm:$0xff] %v409
                %v411 = vld [vmem:[%s403 + $0x30] sm:$0xff]
                %412 = vst [vmem:[%s404 + $0x18] sm:$0xff] %v411
                %v413 = vld [vmem:[%s403 + $0x40] sm:$0xff]
                %414 = vst [vmem:[%s404 + $0x20] sm:$0xff] %v413
                %v415 = vld [vmem:[%s403 + $0x50] sm:$0xff]
                %416 = vst [vmem:[%s404 + $0x28] sm:$0xff] %v415
                %v417 = vld [vmem:[%s403 + $0x60] sm:$0xff]
                %418 = vst [vmem:[%s404 + $0x30] sm:$0xff] %v417
                %v419 = vld [vmem:[%s403 + $0x70] sm:$0xff]
                %420 = vst [vmem:[%s404 + $0x38] sm:$0xff] %v419
                %v421 = vld [vmem:[%s403 + $0x80] sm:$0xff]
                %422 = vst [vmem:[%s404 + $0x40] sm:$0xff] %v421
                %v423 = vld [vmem:[%s403 + $0x90] sm:$0xff]
                %424 = vst [vmem:[%s404 + $0x48] sm:$0xff] %v423
                %v425 = vld [vmem:[%s403 + $0xa0] sm:$0xff]
                %426 = vst [vmem:[%s404 + $0x50] sm:$0xff] %v425
                %v427 = vld [vmem:[%s403 + $0xb0] sm:$0xff]
                %428 = vst [vmem:[%s404 + $0x58] sm:$0xff] %v427
                %v429 = vld [vmem:[%s403 + $0xc0] sm:$0xff]
                %430 = vst [vmem:[%s404 + $0x60] sm:$0xff] %v429
                %v431 = vld [vmem:[%s403 + $0xd0] sm:$0xff]
                %432 = vst [vmem:[%s404 + $0x68] sm:$0xff] %v431
                %v433 = vld [vmem:[%s403 + $0xe0] sm:$0xff]
                %434 = vst [vmem:[%s404 + $0x70] sm:$0xff] %v433
                %v435 = vld [vmem:[%s403 + $0xf0] sm:$0xff]
                %436 = vst [vmem:[%s404 + $0x78] sm:$0xff] %v435
              $region83: #{multilayer_gcn_forward.5} parent=77 // loop_footer
                %s402 = sadd.s32 1, %s398
              $region84: #{multilayer_gcn_forward.5} parent=77 // loop_footer_branch
                %397 = sbr.rel target = $region80
              $region85: #{multilayer_gcn_forward.5} parent=77 // loop_exit
                _
            $region78: #{multilayer_gcn_forward.5} parent=69 // pred_fallthru
              _
          $region70: #{multilayer_gcn_forward.5} parent=65 // pred_fallthru
            _
          %481 = vnop
        $region66: #{multilayer_gcn_forward.5} parent=57 // pred_fallthru
          _
      $region58: #{multilayer_gcn_forward.5} parent=5 // pred_fallthru
        _
      %p482 = scmp.le.s32.totalorder 1, %s10
      %p483 = scmp.lt.s32.totalorder %s10, 3
      %p484 = pnand %p482, %p483
      %p485 = pneg %p484
      // Predicated region
      $region101: #{multilayer_gcn_forward.5} parent=5 // pred_check
        _
      $region102: #{multilayer_gcn_forward.5} parent=5 // pred_check_branch
        %487 = sbr.rel (%p484) target = $region104
      $region103: #{multilayer_gcn_forward.5} parent=5 // pred_region
        %s488 = ssub.s32 %s10, 1
        // Predicated region
        $region105: #{multilayer_gcn_forward.5} parent=103 // pred_check
          %p489 = pneg %p85
        $region106: #{multilayer_gcn_forward.5} parent=103 // pred_check_branch
          %491 = sbr.rel (%p489) target = $region108
        $region107: #{multilayer_gcn_forward.5} parent=103 // pred_region
          _
        $region108: #{multilayer_gcn_forward.5} parent=103 // pred_fallthru
          _
        %s492 = sand.u32 %s102, 1
        %s493 = sand.u32 %s102, 1
        %s494 = smul.addr %s493, 128
        %s495 = scalar_lea.vmem [#allocation4], %s494
        // Predicated region
        $region109: #{multilayer_gcn_forward.5} parent=103 // pred_check
          %p496 = pneg %p115
        $region110: #{multilayer_gcn_forward.5} parent=103 // pred_check_branch
          %498 = sbr.rel (%p496) target = $region112
        $region111: #{multilayer_gcn_forward.5} parent=103 // pred_region
          _
        $region112: #{multilayer_gcn_forward.5} parent=103 // pred_fallthru
          _
        %s499 = smul.u32 16, %s20
        %s500 = smul.u32 2, %s22
        %p501 = scmp.lt.s32.totalorder %s499, 31
        %s502 = scalar_select %p501, %s499, 31
        %p503 = scmp.lt.s32.totalorder %s500, 1
        %s504 = scalar_select %p503, %s500, 1
        %s505 = smul.addr %s502, 2
        %s506 = sadd.s32 %s504, %s505
        %s507 = smul.addr %s506, 4
        %s508 = scalar_lea.vmem %s0, %s507
        %p509 = pneg %p57
        %p510 = pneg %p54
        %p511 = pneg %p85
        %p512 = pneg %p82
        %s513 = sand.u32 %s102, 1
        %s514 = sand.u32 %s102, 1
        %s515 = smul.addr %s514, 128
        %s516 = scalar_lea.vmem [#allocation4], %s515
        %p517 = pneg %p115
        %p518 = pneg %p112
        %s519 = smul.u32 2, %s21
        %p520 = scmp.lt.s32.totalorder %s519, 1
        %s521 = scalar_select %p520, %s519, 1
        %s522 = scalar_lea.vmem %s3, %s521
        %p523 = pneg %p141
        %p524 = pneg %p138
        %p525 = pneg %p169
        %p526 = pneg %p166
        %s527 = smul.u32 16, %s20
        %s528 = smul.u32 2, %s21
        %p529 = scmp.lt.s32.totalorder %s527, 31
        %s530 = scalar_select %p529, %s527, 31
        %p531 = scmp.lt.s32.totalorder %s528, 1
        %s532 = scalar_select %p531, %s528, 1
        %s533 = smul.addr %s530, 2
        %s534 = sadd.s32 %s532, %s533
        %s535 = smul.addr %s534, 4
        %s536 = scalar_lea.vmem %s4, %s535
        %s537 = smul.u32 16, %s20
        %s538 = smul.u32 2, %s22
        %p539 = scmp.lt.s32.totalorder %s537, 31
        %s540 = scalar_select %p539, %s537, 31
        %p541 = scmp.lt.s32.totalorder %s538, 1
        %s542 = scalar_select %p541, %s538, 1
        %s543 = smul.addr %s540, 2
        %s544 = sadd.s32 %s542, %s543
        %s545 = smul.addr %s544, 4
        %s546 = scalar_lea.vmem %s0, %s545
        %s547 = smul.u32 16, %s20
        %s548 = smul.u32 2, %s22
        %s549 = smul.u32 32, %s22
        %s550 = smul.u32 2, %s21
        %s551 = sadd.s32 %s21, 1
        %s552 = smul.u32 16, %s20
        %s553 = smul.u32 2, %s551
        %s554 = smul.u32 2, %s21
        %p555 = scmp.lt.s32.totalorder %s554, 1
        %s556 = scalar_select %p555, %s554, 1
        %s557 = scalar_lea.vmem %s3, %s556
        %s558 = smul.u32 2, %s21
        %s559 = smul.u32 16, %s20
        %s560 = smul.u32 2, %s21
        %p561 = scmp.lt.s32.totalorder %s559, 31
        %s562 = scalar_select %p561, %s559, 31
        %p563 = scmp.lt.s32.totalorder %s560, 1
        %s564 = scalar_select %p563, %s560, 1
        %s565 = smul.addr %s562, 2
        %s566 = sadd.s32 %s564, %s565
        %s567 = smul.addr %s566, 4
        %s568 = scalar_lea.vmem %s4, %s567
        %s569 = smul.u32 16, %s20
        %s570 = smul.u32 2, %s21
        %p571 = scmp.eq.s32.totalorder %s22, 0
        // Predicated region
        $region113: #{multilayer_gcn_forward.5} parent=103 // pred_check
          %p572 = pneg %p571
        $region114: #{multilayer_gcn_forward.5} parent=103 // pred_check_branch
          %574 = sbr.rel (%p572) target = $region116
        $region115: #{multilayer_gcn_forward.5} parent=103 // pred_region
          %575 = vst [vmem:[#allocation2] sm:$0xff] 0.0
          %576 = vst [vmem:[#allocation2 + $0x8] sm:$0xff] 0.0
          %577 = vst [vmem:[#allocation2 + $0x10] sm:$0xff] 0.0
          %578 = vst [vmem:[#allocation2 + $0x18] sm:$0xff] 0.0
          %579 = vst [vmem:[#allocation2 + $0x20] sm:$0xff] 0.0
          %580 = vst [vmem:[#allocation2 + $0x28] sm:$0xff] 0.0
          %581 = vst [vmem:[#allocation2 + $0x30] sm:$0xff] 0.0
          %582 = vst [vmem:[#allocation2 + $0x38] sm:$0xff] 0.0
          %583 = vst [vmem:[#allocation2 + $0x40] sm:$0xff] 0.0
          %584 = vst [vmem:[#allocation2 + $0x48] sm:$0xff] 0.0
          %585 = vst [vmem:[#allocation2 + $0x50] sm:$0xff] 0.0
          %586 = vst [vmem:[#allocation2 + $0x58] sm:$0xff] 0.0
          %587 = vst [vmem:[#allocation2 + $0x60] sm:$0xff] 0.0
          %588 = vst [vmem:[#allocation2 + $0x68] sm:$0xff] 0.0
          %589 = vst [vmem:[#allocation2 + $0x70] sm:$0xff] 0.0
          %590 = vst [vmem:[#allocation2 + $0x78] sm:$0xff] 0.0
          %591 = vst [vmem:[#allocation2 + $0x80] sm:$0xff] 0.0
          %592 = vst [vmem:[#allocation2 + $0x88] sm:$0xff] 0.0
          %593 = vst [vmem:[#allocation2 + $0x90] sm:$0xff] 0.0
          %594 = vst [vmem:[#allocation2 + $0x98] sm:$0xff] 0.0
          %595 = vst [vmem:[#allocation2 + $0xa0] sm:$0xff] 0.0
          %596 = vst [vmem:[#allocation2 + $0xa8] sm:$0xff] 0.0
          %597 = vst [vmem:[#allocation2 + $0xb0] sm:$0xff] 0.0
          %598 = vst [vmem:[#allocation2 + $0xb8] sm:$0xff] 0.0
          %599 = vst [vmem:[#allocation2 + $0xc0] sm:$0xff] 0.0
          %600 = vst [vmem:[#allocation2 + $0xc8] sm:$0xff] 0.0
          %601 = vst [vmem:[#allocation2 + $0xd0] sm:$0xff] 0.0
          %602 = vst [vmem:[#allocation2 + $0xd8] sm:$0xff] 0.0
          %603 = vst [vmem:[#allocation2 + $0xe0] sm:$0xff] 0.0
          %604 = vst [vmem:[#allocation2 + $0xe8] sm:$0xff] 0.0
          %605 = vst [vmem:[#allocation2 + $0xf0] sm:$0xff] 0.0
          %606 = vst [vmem:[#allocation2 + $0xf8] sm:$0xff] 0.0
        $region116: #{multilayer_gcn_forward.5} parent=103 // pred_fallthru
          _
        %v607 = vld [vmem:[#allocation2] sm:$0xff]
        %v608 = vld [vmem:[#allocation2 + $0x8] sm:$0xff]
        %v609 = vld [vmem:[#allocation2 + $0x10] sm:$0xff]
        %v610 = vld [vmem:[#allocation2 + $0x18] sm:$0xff]
        %v611 = vld [vmem:[#allocation2 + $0x20] sm:$0xff]
        %v612 = vld [vmem:[#allocation2 + $0x28] sm:$0xff]
        %v613 = vld [vmem:[#allocation2 + $0x30] sm:$0xff]
        %v614 = vld [vmem:[#allocation2 + $0x38] sm:$0xff]
        %v615 = vld [vmem:[#allocation2 + $0x40] sm:$0xff]
        %v616 = vld [vmem:[#allocation2 + $0x48] sm:$0xff]
        %v617 = vld [vmem:[#allocation2 + $0x50] sm:$0xff]
        %v618 = vld [vmem:[#allocation2 + $0x58] sm:$0xff]
        %v619 = vld [vmem:[#allocation2 + $0x60] sm:$0xff]
        %v620 = vld [vmem:[#allocation2 + $0x68] sm:$0xff]
        %v621 = vld [vmem:[#allocation2 + $0x70] sm:$0xff]
        %v622 = vld [vmem:[#allocation2 + $0x78] sm:$0xff]
        %v623 = vld [vmem:[#allocation2 + $0x80] sm:$0xff]
        %v624 = vld [vmem:[#allocation2 + $0x88] sm:$0xff]
        %v625 = vld [vmem:[#allocation2 + $0x90] sm:$0xff]
        %v626 = vld [vmem:[#allocation2 + $0x98] sm:$0xff]
        %v627 = vld [vmem:[#allocation2 + $0xa0] sm:$0xff]
        %v628 = vld [vmem:[#allocation2 + $0xa8] sm:$0xff]
        %v629 = vld [vmem:[#allocation2 + $0xb0] sm:$0xff]
        %v630 = vld [vmem:[#allocation2 + $0xb8] sm:$0xff]
        %v631 = vld [vmem:[#allocation2 + $0xc0] sm:$0xff]
        %v632 = vld [vmem:[#allocation2 + $0xc8] sm:$0xff]
        %v633 = vld [vmem:[#allocation2 + $0xd0] sm:$0xff]
        %v634 = vld [vmem:[#allocation2 + $0xd8] sm:$0xff]
        %v635 = vld [vmem:[#allocation2 + $0xe0] sm:$0xff]
        %v636 = vld [vmem:[#allocation2 + $0xe8] sm:$0xff]
        %v637 = vld [vmem:[#allocation2 + $0xf0] sm:$0xff]
        %v638 = vld [vmem:[#allocation2 + $0xf8] sm:$0xff]
        %v639 = vld [vmem:[%s546] sm:$0xff]
        %v640 = vld [vmem:[%s546 + $0x8] sm:$0xff]
        %v641 = vld [vmem:[%s546 + $0x10] sm:$0xff]
        %v642 = vld [vmem:[%s546 + $0x18] sm:$0xff]
        %v643 = vld [vmem:[%s546 + $0x20] sm:$0xff]
        %v644 = vld [vmem:[%s546 + $0x28] sm:$0xff]
        %v645 = vld [vmem:[%s546 + $0x30] sm:$0xff]
        %v646 = vld [vmem:[%s546 + $0x38] sm:$0xff]
        %v647 = vld [vmem:[%s546 + $0x40] sm:$0xff]
        %v648 = vld [vmem:[%s546 + $0x48] sm:$0xff]
        %v649 = vld [vmem:[%s546 + $0x50] sm:$0xff]
        %v650 = vld [vmem:[%s546 + $0x58] sm:$0xff]
        %v651 = vld [vmem:[%s546 + $0x60] sm:$0xff]
        %v652 = vld [vmem:[%s546 + $0x68] sm:$0xff]
        %v653 = vld [vmem:[%s546 + $0x70] sm:$0xff]
        %v654 = vld [vmem:[%s546 + $0x78] sm:$0xff]
        %v655 = vld [vmem:[#allocation3] sm:$0xff]
        %v656 = vld [vmem:[#allocation3 + $0x8] sm:$0xff]
        %v657 = vld [vmem:[#allocation3 + $0x10] sm:$0xff]
        %v658 = vld [vmem:[#allocation3 + $0x18] sm:$0xff]
        %v659 = vld [vmem:[#allocation3 + $0x20] sm:$0xff]
        %v660 = vld [vmem:[#allocation3 + $0x28] sm:$0xff]
        %v661 = vld [vmem:[#allocation3 + $0x30] sm:$0xff]
        %v662 = vld [vmem:[#allocation3 + $0x38] sm:$0xff]
        %v663 = vld [vmem:[#allocation3 + $0x40] sm:$0xff]
        %v664 = vld [vmem:[#allocation3 + $0x48] sm:$0xff]
        %v665 = vld [vmem:[#allocation3 + $0x50] sm:$0xff]
        %v666 = vld [vmem:[#allocation3 + $0x58] sm:$0xff]
        %v667 = vld [vmem:[#allocation3 + $0x60] sm:$0xff]
        %v668 = vld [vmem:[#allocation3 + $0x68] sm:$0xff]
        %v669 = vld [vmem:[#allocation3 + $0x70] sm:$0xff]
        %v670 = vld [vmem:[#allocation3 + $0x78] sm:$0xff]
        %v671 = vld [vmem:[#allocation3 + $0x80] sm:$0xff]
        %v672 = vld [vmem:[#allocation3 + $0x88] sm:$0xff]
        %v673 = vld [vmem:[#allocation3 + $0x90] sm:$0xff]
        %v674 = vld [vmem:[#allocation3 + $0x98] sm:$0xff]
        %v675 = vld [vmem:[#allocation3 + $0xa0] sm:$0xff]
        %v676 = vld [vmem:[#allocation3 + $0xa8] sm:$0xff]
        %v677 = vld [vmem:[#allocation3 + $0xb0] sm:$0xff]
        %v678 = vld [vmem:[#allocation3 + $0xb8] sm:$0xff]
        %v679 = vld [vmem:[#allocation3 + $0xc0] sm:$0xff]
        %v680 = vld [vmem:[#allocation3 + $0xc8] sm:$0xff]
        %v681 = vld [vmem:[#allocation3 + $0xd0] sm:$0xff]
        %v682 = vld [vmem:[#allocation3 + $0xd8] sm:$0xff]
        %v683 = vld [vmem:[#allocation3 + $0xe0] sm:$0xff]
        %v684 = vld [vmem:[#allocation3 + $0xe8] sm:$0xff]
        %v685 = vld [vmem:[#allocation3 + $0xf0] sm:$0xff]
        %v686 = vld [vmem:[#allocation3 + $0xf8] sm:$0xff]
        %v703 = vunpack.c.l.b16 %v639
        %v704 = vunpack.c.h.b16 %v639
        %v705 = vunpack.c.l.b16 %v640
        %v706 = vunpack.c.h.b16 %v640
        %v707 = vunpack.c.l.b16 %v641
        %v708 = vunpack.c.h.b16 %v641
        %v709 = vunpack.c.l.b16 %v642
        %v710 = vunpack.c.h.b16 %v642
        %v711 = vunpack.c.l.b16 %v643
        %v712 = vunpack.c.h.b16 %v643
        %v713 = vunpack.c.l.b16 %v644
        %v714 = vunpack.c.h.b16 %v644
        %v715 = vunpack.c.l.b16 %v645
        %v716 = vunpack.c.h.b16 %v645
        %v717 = vunpack.c.l.b16 %v646
        %v718 = vunpack.c.h.b16 %v646
        %v719 = vunpack.c.l.b16 %v647
        %v720 = vunpack.c.h.b16 %v647
        %v721 = vunpack.c.l.b16 %v648
        %v722 = vunpack.c.h.b16 %v648
        %v723 = vunpack.c.l.b16 %v649
        %v724 = vunpack.c.h.b16 %v649
        %v725 = vunpack.c.l.b16 %v650
        %v726 = vunpack.c.h.b16 %v650
        %v727 = vunpack.c.l.b16 %v651
        %v728 = vunpack.c.h.b16 %v651
        %v729 = vunpack.c.l.b16 %v652
        %v730 = vunpack.c.h.b16 %v652
        %v731 = vunpack.c.l.b16 %v653
        %v732 = vunpack.c.h.b16 %v653
        %v733 = vunpack.c.l.b16 %v654
        %v734 = vunpack.c.h.b16 %v654
        %v735 = vpack.c.b16 %v705, %v703
        %v736 = vpack.c.b16 %v706, %v704
        %v737 = vpack.c.b16 %v709, %v707
        %v738 = vpack.c.b16 %v710, %v708
        %v739 = vpack.c.b16 %v713, %v711
        %v740 = vpack.c.b16 %v714, %v712
        %v741 = vpack.c.b16 %v717, %v715
        %v742 = vpack.c.b16 %v718, %v716
        %v743 = vpack.c.b16 %v721, %v719
        %v744 = vpack.c.b16 %v722, %v720
        %v745 = vpack.c.b16 %v725, %v723
        %v746 = vpack.c.b16 %v726, %v724
        %v747 = vpack.c.b16 %v729, %v727
        %v748 = vpack.c.b16 %v730, %v728
        %v749 = vpack.c.b16 %v733, %v731
        %v750 = vpack.c.b16 %v734, %v732
        %v799 = vunpack.c.l.b16 %v655
        %v800 = vunpack.c.h.b16 %v655
        %v801 = vunpack.c.l.b16 %v656
        %v802 = vunpack.c.h.b16 %v656
        %v803 = vunpack.c.l.b16 %v657
        %v804 = vunpack.c.h.b16 %v657
        %v805 = vunpack.c.l.b16 %v658
        %v806 = vunpack.c.h.b16 %v658
        %v807 = vunpack.c.l.b16 %v659
        %v808 = vunpack.c.h.b16 %v659
        %v809 = vunpack.c.l.b16 %v660
        %v810 = vunpack.c.h.b16 %v660
        %v811 = vunpack.c.l.b16 %v661
        %v812 = vunpack.c.h.b16 %v661
        %v813 = vunpack.c.l.b16 %v662
        %v814 = vunpack.c.h.b16 %v662
        %v815 = vunpack.c.l.b16 %v663
        %v816 = vunpack.c.h.b16 %v663
        %v817 = vunpack.c.l.b16 %v664
        %v818 = vunpack.c.h.b16 %v664
        %v819 = vunpack.c.l.b16 %v665
        %v820 = vunpack.c.h.b16 %v665
        %v821 = vunpack.c.l.b16 %v666
        %v822 = vunpack.c.h.b16 %v666
        %v823 = vunpack.c.l.b16 %v667
        %v824 = vunpack.c.h.b16 %v667
        %v825 = vunpack.c.l.b16 %v668
        %v826 = vunpack.c.h.b16 %v668
        %v827 = vunpack.c.l.b16 %v669
        %v828 = vunpack.c.h.b16 %v669
        %v829 = vunpack.c.l.b16 %v670
        %v830 = vunpack.c.h.b16 %v670
        %v831 = vunpack.c.l.b16 %v671
        %v832 = vunpack.c.h.b16 %v671
        %v833 = vunpack.c.l.b16 %v672
        %v834 = vunpack.c.h.b16 %v672
        %v835 = vunpack.c.l.b16 %v673
        %v836 = vunpack.c.h.b16 %v673
        %v837 = vunpack.c.l.b16 %v674
        %v838 = vunpack.c.h.b16 %v674
        %v839 = vunpack.c.l.b16 %v675
        %v840 = vunpack.c.h.b16 %v675
        %v841 = vunpack.c.l.b16 %v676
        %v842 = vunpack.c.h.b16 %v676
        %v843 = vunpack.c.l.b16 %v677
        %v844 = vunpack.c.h.b16 %v677
        %v845 = vunpack.c.l.b16 %v678
        %v846 = vunpack.c.h.b16 %v678
        %v847 = vunpack.c.l.b16 %v679
        %v848 = vunpack.c.h.b16 %v679
        %v849 = vunpack.c.l.b16 %v680
        %v850 = vunpack.c.h.b16 %v680
        %v851 = vunpack.c.l.b16 %v681
        %v852 = vunpack.c.h.b16 %v681
        %v853 = vunpack.c.l.b16 %v682
        %v854 = vunpack.c.h.b16 %v682
        %v855 = vunpack.c.l.b16 %v683
        %v856 = vunpack.c.h.b16 %v683
        %v857 = vunpack.c.l.b16 %v684
        %v858 = vunpack.c.h.b16 %v684
        %v859 = vunpack.c.l.b16 %v685
        %v860 = vunpack.c.h.b16 %v685
        %v861 = vunpack.c.l.b16 %v686
        %v862 = vunpack.c.h.b16 %v686
        %v863 = vpack.c.b16 %v801, %v799
        %v864 = vpack.c.b16 %v802, %v800
        %v865 = vpack.c.b16 %v805, %v803
        %v866 = vpack.c.b16 %v806, %v804
        %v867 = vpack.c.b16 %v809, %v807
        %v868 = vpack.c.b16 %v810, %v808
        %v869 = vpack.c.b16 %v813, %v811
        %v870 = vpack.c.b16 %v814, %v812
        %v871 = vpack.c.b16 %v817, %v815
        %v872 = vpack.c.b16 %v818, %v816
        %v873 = vpack.c.b16 %v821, %v819
        %v874 = vpack.c.b16 %v822, %v820
        %v875 = vpack.c.b16 %v825, %v823
        %v876 = vpack.c.b16 %v826, %v824
        %v877 = vpack.c.b16 %v829, %v827
        %v878 = vpack.c.b16 %v830, %v828
        %v879 = vpack.c.b16 %v833, %v831
        %v880 = vpack.c.b16 %v834, %v832
        %v881 = vpack.c.b16 %v837, %v835
        %v882 = vpack.c.b16 %v838, %v836
        %v883 = vpack.c.b16 %v841, %v839
        %v884 = vpack.c.b16 %v842, %v840
        %v885 = vpack.c.b16 %v845, %v843
        %v886 = vpack.c.b16 %v846, %v844
        %v887 = vpack.c.b16 %v849, %v847
        %v888 = vpack.c.b16 %v850, %v848
        %v889 = vpack.c.b16 %v853, %v851
        %v890 = vpack.c.b16 %v854, %v852
        %v891 = vpack.c.b16 %v857, %v855
        %v892 = vpack.c.b16 %v858, %v856
        %v893 = vpack.c.b16 %v861, %v859
        %v894 = vpack.c.b16 %v862, %v860
        %927 = vmatprep.subr.bf16.mxu0 %v864
        %928 = vmatpush1.bf16.msra.mxu0 %v863
        %929 = vmatprep.subr.bf16.mxu0 %v866
        %930 = vmatpush1.bf16.msra.mxu0 %v865
        %931 = vmatprep.subr.bf16.mxu0 %v868
        %932 = vmatpush1.bf16.msra.mxu0 %v867
        %933 = vmatprep.subr.bf16.mxu0 %v870
        %934 = vmatpush1.bf16.msra.mxu0 %v869
        %935 = vmatprep.subr.bf16.mxu0 %v872
        %936 = vmatpush1.bf16.msra.mxu0 %v871
        %937 = vmatprep.subr.bf16.mxu0 %v874
        %938 = vmatpush1.bf16.msra.mxu0 %v873
        %939 = vmatprep.subr.bf16.mxu0 %v876
        %940 = vmatpush1.bf16.msra.mxu0 %v875
        %941 = vmatprep.subr.bf16.mxu0 %v878
        %942 = vmatpush1.bf16.msra.mxu0 %v877
        %943 = vmatprep.subr.bf16.mxu0 %v880
        %944 = vmatpush1.bf16.msra.mxu0 %v879
        %945 = vmatprep.subr.bf16.mxu0 %v882
        %946 = vmatpush1.bf16.msra.mxu0 %v881
        %947 = vmatprep.subr.bf16.mxu0 %v884
        %948 = vmatpush1.bf16.msra.mxu0 %v883
        %949 = vmatprep.subr.bf16.mxu0 %v886
        %950 = vmatpush1.bf16.msra.mxu0 %v885
        %951 = vmatprep.subr.bf16.mxu0 %v888
        %952 = vmatpush1.bf16.msra.mxu0 %v887
        %953 = vmatprep.subr.bf16.mxu0 %v890
        %954 = vmatpush1.bf16.msra.mxu0 %v889
        %955 = vmatprep.subr.bf16.mxu0 %v892
        %956 = vmatpush1.bf16.msra.mxu0 %v891
        %957 = vmatprep.subr.bf16.mxu0 %v894
        %958 = vmatpush1.bf16.msra.mxu0 %v893
        %959 = vmatprep.mubr.bf16.mxu0 %v736
        %960 = vmatmul.mubr.bf16.gmra.mrb[0].mxu0 %v735
        %v961 = vpop.f32.mrb[0].mxu0
        %v962 = vadd.f32 0.0, %v961
        %v963 = vpop.f32.mrb[0].mxu0
        %v964 = vadd.f32 0.0, %v963
        %v965 = vpop.f32.mrb[0].mxu0
        %v966 = vadd.f32 0.0, %v965
        %v967 = vpop.f32.mrb[0].mxu0
        %v968 = vadd.f32 0.0, %v967
        %969 = vmatprep.mubr.bf16.mxu0 %v738
        %970 = vmatmul.mubr.bf16.gmra.mrb[0].mxu0 %v737
        %v971 = vpop.f32.mrb[0].mxu0
        %v972 = vadd.f32 0.0, %v971
        %v973 = vpop.f32.mrb[0].mxu0
        %v974 = vadd.f32 0.0, %v973
        %v975 = vpop.f32.mrb[0].mxu0
        %v976 = vadd.f32 0.0, %v975
        %v977 = vpop.f32.mrb[0].mxu0
        %v978 = vadd.f32 0.0, %v977
        %979 = vmatprep.mubr.bf16.mxu0 %v740
        %980 = vmatmul.mubr.bf16.gmra.mrb[0].mxu0 %v739
        %v981 = vpop.f32.mrb[0].mxu0
        %v982 = vadd.f32 0.0, %v981
        %v983 = vpop.f32.mrb[0].mxu0
        %v984 = vadd.f32 0.0, %v983
        %v985 = vpop.f32.mrb[0].mxu0
        %v986 = vadd.f32 0.0, %v985
        %v987 = vpop.f32.mrb[0].mxu0
        %v988 = vadd.f32 0.0, %v987
        %989 = vmatprep.mubr.bf16.mxu0 %v742
        %990 = vmatmul.mubr.bf16.gmra.mrb[0].mxu0 %v741
        %v991 = vpop.f32.mrb[0].mxu0
        %v992 = vadd.f32 0.0, %v991
        %v993 = vpop.f32.mrb[0].mxu0
        %v994 = vadd.f32 0.0, %v993
        %v995 = vpop.f32.mrb[0].mxu0
        %v996 = vadd.f32 0.0, %v995
        %v997 = vpop.f32.mrb[0].mxu0
        %v998 = vadd.f32 0.0, %v997
        %999 = vmatprep.mubr.bf16.mxu0 %v744
        %1000 = vmatmul.mubr.bf16.gmra.mrb[0].mxu0 %v743
        %v1001 = vpop.f32.mrb[0].mxu0
        %v1002 = vadd.f32 0.0, %v1001
        %v1003 = vpop.f32.mrb[0].mxu0
        %v1004 = vadd.f32 0.0, %v1003
        %v1005 = vpop.f32.mrb[0].mxu0
        %v1006 = vadd.f32 0.0, %v1005
        %v1007 = vpop.f32.mrb[0].mxu0
        %v1008 = vadd.f32 0.0, %v1007
        %1009 = vmatprep.mubr.bf16.mxu0 %v746
        %1010 = vmatmul.mubr.bf16.gmra.mrb[0].mxu0 %v745
        %v1011 = vpop.f32.mrb[0].mxu0
        %v1012 = vadd.f32 0.0, %v1011
        %v1013 = vpop.f32.mrb[0].mxu0
        %v1014 = vadd.f32 0.0, %v1013
        %v1015 = vpop.f32.mrb[0].mxu0
        %v1016 = vadd.f32 0.0, %v1015
        %v1017 = vpop.f32.mrb[0].mxu0
        %v1018 = vadd.f32 0.0, %v1017
        %1019 = vmatprep.mubr.bf16.mxu0 %v748
        %1020 = vmatmul.mubr.bf16.gmra.mrb[0].mxu0 %v747
        %v1021 = vpop.f32.mrb[0].mxu0
        %v1022 = vadd.f32 0.0, %v1021
        %v1023 = vpop.f32.mrb[0].mxu0
        %v1024 = vadd.f32 0.0, %v1023
        %v1025 = vpop.f32.mrb[0].mxu0
        %v1026 = vadd.f32 0.0, %v1025
        %v1027 = vpop.f32.mrb[0].mxu0
        %v1028 = vadd.f32 0.0, %v1027
        %1029 = vmatprep.mubr.bf16.mxu0 %v750
        %1030 = vmatmul.mubr.bf16.gmra.mrb[0].mxu0 %v749
        %v1031 = vpop.f32.mrb[0].mxu0
        %v1032 = vadd.f32 0.0, %v1031
        %v1033 = vpop.f32.mrb[0].mxu0
        %v1034 = vadd.f32 0.0, %v1033
        %v1035 = vpop.f32.mrb[0].mxu0
        %v1036 = vadd.f32 0.0, %v1035
        %v1037 = vpop.f32.mrb[0].mxu0
        %v1038 = vadd.f32 0.0, %v1037
        %1039 = vdwg.mxu0
        %v1040 = vadd.f32 %v607, %v962
        %v1041 = vadd.f32 %v608, %v964
        %v1042 = vadd.f32 %v609, %v966
        %v1043 = vadd.f32 %v610, %v968
        %v1044 = vadd.f32 %v611, %v972
        %v1045 = vadd.f32 %v612, %v974
        %v1046 = vadd.f32 %v613, %v976
        %v1047 = vadd.f32 %v614, %v978
        %v1048 = vadd.f32 %v615, %v982
        %v1049 = vadd.f32 %v616, %v984
        %v1050 = vadd.f32 %v617, %v986
        %v1051 = vadd.f32 %v618, %v988
        %v1052 = vadd.f32 %v619, %v992
        %v1053 = vadd.f32 %v620, %v994
        %v1054 = vadd.f32 %v621, %v996
        %v1055 = vadd.f32 %v622, %v998
        %v1056 = vadd.f32 %v623, %v1002
        %v1057 = vadd.f32 %v624, %v1004
        %v1058 = vadd.f32 %v625, %v1006
        %v1059 = vadd.f32 %v626, %v1008
        %v1060 = vadd.f32 %v627, %v1012
        %v1061 = vadd.f32 %v628, %v1014
        %v1062 = vadd.f32 %v629, %v1016
        %v1063 = vadd.f32 %v630, %v1018
        %v1064 = vadd.f32 %v631, %v1022
        %v1065 = vadd.f32 %v632, %v1024
        %v1066 = vadd.f32 %v633, %v1026
        %v1067 = vadd.f32 %v634, %v1028
        %v1068 = vadd.f32 %v635, %v1032
        %v1069 = vadd.f32 %v636, %v1034
        %v1070 = vadd.f32 %v637, %v1036
        %v1071 = vadd.f32 %v638, %v1038
        %1072 = vst [vmem:[#allocation2] sm:$0xff] %v1040
        %1073 = vst [vmem:[#allocation2 + $0x8] sm:$0xff] %v1041
        %1074 = vst [vmem:[#allocation2 + $0x10] sm:$0xff] %v1042
        %1075 = vst [vmem:[#allocation2 + $0x18] sm:$0xff] %v1043
        %1076 = vst [vmem:[#allocation2 + $0x20] sm:$0xff] %v1044
        %1077 = vst [vmem:[#allocation2 + $0x28] sm:$0xff] %v1045
        %1078 = vst [vmem:[#allocation2 + $0x30] sm:$0xff] %v1046
        %1079 = vst [vmem:[#allocation2 + $0x38] sm:$0xff] %v1047
        %1080 = vst [vmem:[#allocation2 + $0x40] sm:$0xff] %v1048
        %1081 = vst [vmem:[#allocation2 + $0x48] sm:$0xff] %v1049
        %1082 = vst [vmem:[#allocation2 + $0x50] sm:$0xff] %v1050
        %1083 = vst [vmem:[#allocation2 + $0x58] sm:$0xff] %v1051
        %1084 = vst [vmem:[#allocation2 + $0x60] sm:$0xff] %v1052
        %1085 = vst [vmem:[#allocation2 + $0x68] sm:$0xff] %v1053
        %1086 = vst [vmem:[#allocation2 + $0x70] sm:$0xff] %v1054
        %1087 = vst [vmem:[#allocation2 + $0x78] sm:$0xff] %v1055
        %1088 = vst [vmem:[#allocation2 + $0x80] sm:$0xff] %v1056
        %1089 = vst [vmem:[#allocation2 + $0x88] sm:$0xff] %v1057
        %1090 = vst [vmem:[#allocation2 + $0x90] sm:$0xff] %v1058
        %1091 = vst [vmem:[#allocation2 + $0x98] sm:$0xff] %v1059
        %1092 = vst [vmem:[#allocation2 + $0xa0] sm:$0xff] %v1060
        %1093 = vst [vmem:[#allocation2 + $0xa8] sm:$0xff] %v1061
        %1094 = vst [vmem:[#allocation2 + $0xb0] sm:$0xff] %v1062
        %1095 = vst [vmem:[#allocation2 + $0xb8] sm:$0xff] %v1063
        %1096 = vst [vmem:[#allocation2 + $0xc0] sm:$0xff] %v1064
        %1097 = vst [vmem:[#allocation2 + $0xc8] sm:$0xff] %v1065
        %1098 = vst [vmem:[#allocation2 + $0xd0] sm:$0xff] %v1066
        %1099 = vst [vmem:[#allocation2 + $0xd8] sm:$0xff] %v1067
        %1100 = vst [vmem:[#allocation2 + $0xe0] sm:$0xff] %v1068
        %1101 = vst [vmem:[#allocation2 + $0xe8] sm:$0xff] %v1069
        %1102 = vst [vmem:[#allocation2 + $0xf0] sm:$0xff] %v1070
        %1103 = vst [vmem:[#allocation2 + $0xf8] sm:$0xff] %v1071
        // Predicated region
        $region117: #{multilayer_gcn_forward.5} parent=103 // pred_check
          %p1104 = pneg %p571
        $region118: #{multilayer_gcn_forward.5} parent=103 // pred_check_branch
          %1106 = sbr.rel (%p1104) target = $region120
        $region119: #{multilayer_gcn_forward.5} parent=103 // pred_region
          %v1107 = vld [vmem:[#allocation2] sm:$0xff]
          %v1108 = vld [vmem:[#allocation2 + $0x8] sm:$0xff]
          %v1109 = vld [vmem:[#allocation2 + $0x10] sm:$0xff]
          %v1110 = vld [vmem:[#allocation2 + $0x18] sm:$0xff]
          %v1111 = vld [vmem:[#allocation2 + $0x20] sm:$0xff]
          %v1112 = vld [vmem:[#allocation2 + $0x28] sm:$0xff]
          %v1113 = vld [vmem:[#allocation2 + $0x30] sm:$0xff]
          %v1114 = vld [vmem:[#allocation2 + $0x38] sm:$0xff]
          %v1115 = vld [vmem:[#allocation2 + $0x40] sm:$0xff]
          %v1116 = vld [vmem:[#allocation2 + $0x48] sm:$0xff]
          %v1117 = vld [vmem:[#allocation2 + $0x50] sm:$0xff]
          %v1118 = vld [vmem:[#allocation2 + $0x58] sm:$0xff]
          %v1119 = vld [vmem:[#allocation2 + $0x60] sm:$0xff]
          %v1120 = vld [vmem:[#allocation2 + $0x68] sm:$0xff]
          %v1121 = vld [vmem:[#allocation2 + $0x70] sm:$0xff]
          %v1122 = vld [vmem:[#allocation2 + $0x78] sm:$0xff]
          %v1123 = vld [vmem:[#allocation2 + $0x80] sm:$0xff]
          %v1124 = vld [vmem:[#allocation2 + $0x88] sm:$0xff]
          %v1125 = vld [vmem:[#allocation2 + $0x90] sm:$0xff]
          %v1126 = vld [vmem:[#allocation2 + $0x98] sm:$0xff]
          %v1127 = vld [vmem:[#allocation2 + $0xa0] sm:$0xff]
          %v1128 = vld [vmem:[#allocation2 + $0xa8] sm:$0xff]
          %v1129 = vld [vmem:[#allocation2 + $0xb0] sm:$0xff]
          %v1130 = vld [vmem:[#allocation2 + $0xb8] sm:$0xff]
          %v1131 = vld [vmem:[#allocation2 + $0xc0] sm:$0xff]
          %v1132 = vld [vmem:[#allocation2 + $0xc8] sm:$0xff]
          %v1133 = vld [vmem:[#allocation2 + $0xd0] sm:$0xff]
          %v1134 = vld [vmem:[#allocation2 + $0xd8] sm:$0xff]
          %v1135 = vld [vmem:[#allocation2 + $0xe0] sm:$0xff]
          %v1136 = vld [vmem:[#allocation2 + $0xe8] sm:$0xff]
          %v1137 = vld [vmem:[#allocation2 + $0xf0] sm:$0xff]
          %v1138 = vld [vmem:[#allocation2 + $0xf8] sm:$0xff]
          %v1139 = vld [vmem:[%s495] sm:$0xff]
          %v1140 = vld [vmem:[%s495 + $0x8] sm:$0xff]
          %v1141 = vld [vmem:[%s495 + $0x10] sm:$0xff]
          %v1142 = vld [vmem:[%s495 + $0x18] sm:$0xff]
          %v1143 = vld [vmem:[%s495 + $0x20] sm:$0xff]
          %v1144 = vld [vmem:[%s495 + $0x28] sm:$0xff]
          %v1145 = vld [vmem:[%s495 + $0x30] sm:$0xff]
          %v1146 = vld [vmem:[%s495 + $0x38] sm:$0xff]
          %v1147 = vld [vmem:[%s495 + $0x40] sm:$0xff]
          %v1148 = vld [vmem:[%s495 + $0x48] sm:$0xff]
          %v1149 = vld [vmem:[%s495 + $0x50] sm:$0xff]
          %v1150 = vld [vmem:[%s495 + $0x58] sm:$0xff]
          %v1151 = vld [vmem:[%s495 + $0x60] sm:$0xff]
          %v1152 = vld [vmem:[%s495 + $0x68] sm:$0xff]
          %v1153 = vld [vmem:[%s495 + $0x70] sm:$0xff]
          %v1154 = vld [vmem:[%s495 + $0x78] sm:$0xff]
          %v1155 = vunpack.c.l.bf16 %v1139
          %v1156 = vunpack.c.h.bf16 %v1139
          %v1157 = vunpack.c.l.bf16 %v1140
          %v1158 = vunpack.c.h.bf16 %v1140
          %v1159 = vunpack.c.l.bf16 %v1141
          %v1160 = vunpack.c.h.bf16 %v1141
          %v1161 = vunpack.c.l.bf16 %v1142
          %v1162 = vunpack.c.h.bf16 %v1142
          %v1163 = vunpack.c.l.bf16 %v1143
          %v1164 = vunpack.c.h.bf16 %v1143
          %v1165 = vunpack.c.l.bf16 %v1144
          %v1166 = vunpack.c.h.bf16 %v1144
          %v1167 = vunpack.c.l.bf16 %v1145
          %v1168 = vunpack.c.h.bf16 %v1145
          %v1169 = vunpack.c.l.bf16 %v1146
          %v1170 = vunpack.c.h.bf16 %v1146
          %v1171 = vunpack.c.l.bf16 %v1147
          %v1172 = vunpack.c.h.bf16 %v1147
          %v1173 = vunpack.c.l.bf16 %v1148
          %v1174 = vunpack.c.h.bf16 %v1148
          %v1175 = vunpack.c.l.bf16 %v1149
          %v1176 = vunpack.c.h.bf16 %v1149
          %v1177 = vunpack.c.l.bf16 %v1150
          %v1178 = vunpack.c.h.bf16 %v1150
          %v1179 = vunpack.c.l.bf16 %v1151
          %v1180 = vunpack.c.h.bf16 %v1151
          %v1181 = vunpack.c.l.bf16 %v1152
          %v1182 = vunpack.c.h.bf16 %v1152
          %v1183 = vunpack.c.l.bf16 %v1153
          %v1184 = vunpack.c.h.bf16 %v1153
          %v1185 = vunpack.c.l.bf16 %v1154
          %v1186 = vunpack.c.h.bf16 %v1154
          %v1187 = vadd.f32 %v1107, %v1155
          %v1188 = vadd.f32 %v1108, %v1156
          %v1189 = vadd.f32 %v1109, %v1157
          %v1190 = vadd.f32 %v1110, %v1158
          %v1191 = vadd.f32 %v1111, %v1159
          %v1192 = vadd.f32 %v1112, %v1160
          %v1193 = vadd.f32 %v1113, %v1161
          %v1194 = vadd.f32 %v1114, %v1162
          %v1195 = vadd.f32 %v1115, %v1163
          %v1196 = vadd.f32 %v1116, %v1164
          %v1197 = vadd.f32 %v1117, %v1165
          %v1198 = vadd.f32 %v1118, %v1166
          %v1199 = vadd.f32 %v1119, %v1167
          %v1200 = vadd.f32 %v1120, %v1168
          %v1201 = vadd.f32 %v1121, %v1169
          %v1202 = vadd.f32 %v1122, %v1170
          %v1203 = vadd.f32 %v1123, %v1171
          %v1204 = vadd.f32 %v1124, %v1172
          %v1205 = vadd.f32 %v1125, %v1173
          %v1206 = vadd.f32 %v1126, %v1174
          %v1207 = vadd.f32 %v1127, %v1175
          %v1208 = vadd.f32 %v1128, %v1176
          %v1209 = vadd.f32 %v1129, %v1177
          %v1210 = vadd.f32 %v1130, %v1178
          %v1211 = vadd.f32 %v1131, %v1179
          %v1212 = vadd.f32 %v1132, %v1180
          %v1213 = vadd.f32 %v1133, %v1181
          %v1214 = vadd.f32 %v1134, %v1182
          %v1215 = vadd.f32 %v1135, %v1183
          %v1216 = vadd.f32 %v1136, %v1184
          %v1217 = vadd.f32 %v1137, %v1185
          %v1218 = vadd.f32 %v1138, %v1186
          %v1219 = vld [vmem:[%s557] sm:$0x3]
          %v1221 = vlaneseq
          %v1222 = vshrl.u32 %v1221, 7
          %v1223 = vsub.s32 0, %v1222
          %v1224 = vrot.slane %v1219, %v1223
          %v1225 = vlaneseq
          %v1226 = vshrl.u32 %v1225, 7
          %v1227 = vsub.s32 1, %v1226
          %v1228 = vrot.slane %v1219, %v1227
          %v1231 = vadd.f32 %v1187, %v1224
          %v1232 = vadd.f32 %v1188, %v1228
          %v1233 = vadd.f32 %v1189, %v1224
          %v1234 = vadd.f32 %v1190, %v1228
          %v1235 = vadd.f32 %v1191, %v1224
          %v1236 = vadd.f32 %v1192, %v1228
          %v1237 = vadd.f32 %v1193, %v1224
          %v1238 = vadd.f32 %v1194, %v1228
          %v1239 = vadd.f32 %v1195, %v1224
          %v1240 = vadd.f32 %v1196, %v1228
          %v1241 = vadd.f32 %v1197, %v1224
          %v1242 = vadd.f32 %v1198, %v1228
          %v1243 = vadd.f32 %v1199, %v1224
          %v1244 = vadd.f32 %v1200, %v1228
          %v1245 = vadd.f32 %v1201, %v1224
          %v1246 = vadd.f32 %v1202, %v1228
          %v1247 = vadd.f32 %v1203, %v1224
          %v1248 = vadd.f32 %v1204, %v1228
          %v1249 = vadd.f32 %v1205, %v1224
          %v1250 = vadd.f32 %v1206, %v1228
          %v1251 = vadd.f32 %v1207, %v1224
          %v1252 = vadd.f32 %v1208, %v1228
          %v1253 = vadd.f32 %v1209, %v1224
          %v1254 = vadd.f32 %v1210, %v1228
          %v1255 = vadd.f32 %v1211, %v1224
          %v1256 = vadd.f32 %v1212, %v1228
          %v1257 = vadd.f32 %v1213, %v1224
          %v1258 = vadd.f32 %v1214, %v1228
          %v1259 = vadd.f32 %v1215, %v1224
          %v1260 = vadd.f32 %v1216, %v1228
          %v1261 = vadd.f32 %v1217, %v1224
          %v1262 = vadd.f32 %v1218, %v1228
          %v1263 = vmax.f32 %v1231, 0.0
          %v1264 = vmax.f32 %v1232, 0.0
          %v1265 = vmax.f32 %v1233, 0.0
          %v1266 = vmax.f32 %v1234, 0.0
          %v1267 = vmax.f32 %v1235, 0.0
          %v1268 = vmax.f32 %v1236, 0.0
          %v1269 = vmax.f32 %v1237, 0.0
          %v1270 = vmax.f32 %v1238, 0.0
          %v1271 = vmax.f32 %v1239, 0.0
          %v1272 = vmax.f32 %v1240, 0.0
          %v1273 = vmax.f32 %v1241, 0.0
          %v1274 = vmax.f32 %v1242, 0.0
          %v1275 = vmax.f32 %v1243, 0.0
          %v1276 = vmax.f32 %v1244, 0.0
          %v1277 = vmax.f32 %v1245, 0.0
          %v1278 = vmax.f32 %v1246, 0.0
          %v1279 = vmax.f32 %v1247, 0.0
          %v1280 = vmax.f32 %v1248, 0.0
          %v1281 = vmax.f32 %v1249, 0.0
          %v1282 = vmax.f32 %v1250, 0.0
          %v1283 = vmax.f32 %v1251, 0.0
          %v1284 = vmax.f32 %v1252, 0.0
          %v1285 = vmax.f32 %v1253, 0.0
          %v1286 = vmax.f32 %v1254, 0.0
          %v1287 = vmax.f32 %v1255, 0.0
          %v1288 = vmax.f32 %v1256, 0.0
          %v1289 = vmax.f32 %v1257, 0.0
          %v1290 = vmax.f32 %v1258, 0.0
          %v1291 = vmax.f32 %v1259, 0.0
          %v1292 = vmax.f32 %v1260, 0.0
          %v1293 = vmax.f32 %v1261, 0.0
          %v1294 = vmax.f32 %v1262, 0.0
          %v1295 = vpack.c.bf16 %v1265, %v1263
          %v1296 = vpack.c.bf16 %v1266, %v1264
          %v1297 = vpack.c.bf16 %v1269, %v1267
          %v1298 = vpack.c.bf16 %v1270, %v1268
          %v1299 = vpack.c.bf16 %v1273, %v1271
          %v1300 = vpack.c.bf16 %v1274, %v1272
          %v1301 = vpack.c.bf16 %v1277, %v1275
          %v1302 = vpack.c.bf16 %v1278, %v1276
          %v1303 = vpack.c.bf16 %v1281, %v1279
          %v1304 = vpack.c.bf16 %v1282, %v1280
          %v1305 = vpack.c.bf16 %v1285, %v1283
          %v1306 = vpack.c.bf16 %v1286, %v1284
          %v1307 = vpack.c.bf16 %v1289, %v1287
          %v1308 = vpack.c.bf16 %v1290, %v1288
          %v1309 = vpack.c.bf16 %v1293, %v1291
          %v1310 = vpack.c.bf16 %v1294, %v1292
          %v1327 = vunpack.c.l.b16 %v1295
          %v1328 = vunpack.c.l.b16 %v1296
          %v1329 = vunpack.c.h.b16 %v1295
          %v1330 = vunpack.c.h.b16 %v1296
          %v1331 = vunpack.c.l.b16 %v1297
          %v1332 = vunpack.c.l.b16 %v1298
          %v1333 = vunpack.c.h.b16 %v1297
          %v1334 = vunpack.c.h.b16 %v1298
          %v1335 = vunpack.c.l.b16 %v1299
          %v1336 = vunpack.c.l.b16 %v1300
          %v1337 = vunpack.c.h.b16 %v1299
          %v1338 = vunpack.c.h.b16 %v1300
          %v1339 = vunpack.c.l.b16 %v1301
          %v1340 = vunpack.c.l.b16 %v1302
          %v1341 = vunpack.c.h.b16 %v1301
          %v1342 = vunpack.c.h.b16 %v1302
          %v1343 = vunpack.c.l.b16 %v1303
          %v1344 = vunpack.c.l.b16 %v1304
          %v1345 = vunpack.c.h.b16 %v1303
          %v1346 = vunpack.c.h.b16 %v1304
          %v1347 = vunpack.c.l.b16 %v1305
          %v1348 = vunpack.c.l.b16 %v1306
          %v1349 = vunpack.c.h.b16 %v1305
          %v1350 = vunpack.c.h.b16 %v1306
          %v1351 = vunpack.c.l.b16 %v1307
          %v1352 = vunpack.c.l.b16 %v1308
          %v1353 = vunpack.c.h.b16 %v1307
          %v1354 = vunpack.c.h.b16 %v1308
          %v1355 = vunpack.c.l.b16 %v1309
          %v1356 = vunpack.c.l.b16 %v1310
          %v1357 = vunpack.c.h.b16 %v1309
          %v1358 = vunpack.c.h.b16 %v1310
          %v1359 = vpack.c.b16 %v1328, %v1327
          %v1360 = vpack.c.b16 %v1330, %v1329
          %v1361 = vpack.c.b16 %v1332, %v1331
          %v1362 = vpack.c.b16 %v1334, %v1333
          %v1363 = vpack.c.b16 %v1336, %v1335
          %v1364 = vpack.c.b16 %v1338, %v1337
          %v1365 = vpack.c.b16 %v1340, %v1339
          %v1366 = vpack.c.b16 %v1342, %v1341
          %v1367 = vpack.c.b16 %v1344, %v1343
          %v1368 = vpack.c.b16 %v1346, %v1345
          %v1369 = vpack.c.b16 %v1348, %v1347
          %v1370 = vpack.c.b16 %v1350, %v1349
          %v1371 = vpack.c.b16 %v1352, %v1351
          %v1372 = vpack.c.b16 %v1354, %v1353
          %v1373 = vpack.c.b16 %v1356, %v1355
          %v1374 = vpack.c.b16 %v1358, %v1357
          %1391 = vst [vmem:[%s568] sm:$0xff] %v1359
          %1392 = vst [vmem:[%s568 + $0x8] sm:$0xff] %v1360
          %1393 = vst [vmem:[%s568 + $0x10] sm:$0xff] %v1361
          %1394 = vst [vmem:[%s568 + $0x18] sm:$0xff] %v1362
          %1395 = vst [vmem:[%s568 + $0x20] sm:$0xff] %v1363
          %1396 = vst [vmem:[%s568 + $0x28] sm:$0xff] %v1364
          %1397 = vst [vmem:[%s568 + $0x30] sm:$0xff] %v1365
          %1398 = vst [vmem:[%s568 + $0x38] sm:$0xff] %v1366
          %1399 = vst [vmem:[%s568 + $0x40] sm:$0xff] %v1367
          %1400 = vst [vmem:[%s568 + $0x48] sm:$0xff] %v1368
          %1401 = vst [vmem:[%s568 + $0x50] sm:$0xff] %v1369
          %1402 = vst [vmem:[%s568 + $0x58] sm:$0xff] %v1370
          %1403 = vst [vmem:[%s568 + $0x60] sm:$0xff] %v1371
          %1404 = vst [vmem:[%s568 + $0x68] sm:$0xff] %v1372
          %1405 = vst [vmem:[%s568 + $0x70] sm:$0xff] %v1373
          %1406 = vst [vmem:[%s568 + $0x78] sm:$0xff] %v1374
        $region120: #{multilayer_gcn_forward.5} parent=103 // pred_fallthru
          _
        %s1407 = smul.u32 16, %s20
        %s1408 = smul.u32 2, %s21
        %p1409 = scmp.lt.s32.totalorder %s1407, 31
        %s1410 = scalar_select %p1409, %s1407, 31
        %p1411 = scmp.lt.s32.totalorder %s1408, 1
        %s1412 = scalar_select %p1411, %s1408, 1
        %s1413 = smul.addr %s1410, 2
        %s1414 = sadd.s32 %s1412, %s1413
        %s1415 = smul.addr %s1414, 4
        %s1416 = scalar_lea.vmem %s4, %s1415
        // Predicated region
        $region121: #{multilayer_gcn_forward.5} parent=103 // pred_check
          %p1417 = pneg %p166
        $region122: #{multilayer_gcn_forward.5} parent=103 // pred_check_branch
          %1419 = sbr.rel (%p1417) target = $region124
        $region123: #{multilayer_gcn_forward.5} parent=103 // pred_region
          %s1420 = smul.u32 16, %s20
          %s1421 = smul.u32 2, %s21
        $region124: #{multilayer_gcn_forward.5} parent=103 // pred_fallthru
          _
      $region104: #{multilayer_gcn_forward.5} parent=5 // pred_fallthru
        _
      %p1422 = scmp.le.s32.totalorder 2, %s10
      // Predicated region
      $region125: #{multilayer_gcn_forward.5} parent=5 // pred_check
        %p1423 = pneg %p1422
      $region126: #{multilayer_gcn_forward.5} parent=5 // pred_check_branch
        %1425 = sbr.rel (%p1423) target = $region128
      $region127: #{multilayer_gcn_forward.5} parent=5 // pred_region
        %s1426 = ssub.s32 %s10, 2
        // Predicated region
        $region129: #{multilayer_gcn_forward.5} parent=127 // pred_check
          %p1427 = pneg %p172
        $region130: #{multilayer_gcn_forward.5} parent=127 // pred_check_branch
          %1429 = sbr.rel (%p1427) target = $region132
        $region131: #{multilayer_gcn_forward.5} parent=127 // pred_region
          %s1430 = smul.u32 16, %s23
          %s1431 = smul.u32 2, %s24
          %p1432 = scmp.lt.s32.totalorder %s1430, 31
          %s1433 = scalar_select %p1432, %s1430, 31
          %p1434 = scmp.lt.s32.totalorder %s1431, 1
          %s1435 = scalar_select %p1434, %s1431, 1
          %s1436 = smul.addr %s1433, 2
          %s1437 = sadd.s32 %s1435, %s1436
          %s1438 = smul.addr %s1437, 4
          %s1439 = scalar_lea.vmem %s4, %s1438
        $region132: #{multilayer_gcn_forward.5} parent=127 // pred_fallthru
          _
      $region128: #{multilayer_gcn_forward.5} parent=5 // pred_fallthru
        _
    $region6: #{multilayer_gcn_forward.5} parent=1 // loop_footer
      %s14 = sadd.s32 1, %s10
    $region7: #{multilayer_gcn_forward.5} parent=1 // loop_footer_branch
      %9 = sbr.rel target = $region3
    $region8: #{multilayer_gcn_forward.5} parent=1 // loop_exit
      _

// kernel: multilayer_gcn_forward.6
$region0: #{multilayer_gcn_forward.6}
  #allocation0 [shape = 'u32[]', space=smem, size = 0x4, offset = 0x4, fixed_abs, tag = 'smem constant byte address 0x4 - core index']
  #allocation1 [shape = 'u32[144,128]{1,0:T(1,128)}', space=vmem, size = 0x12000, scoped, tag = 'internal scratch']
  %s0 = inlined_call_operand.vmem [shape: bf16[256,256], index: 0, kind: input, shape index: {}]
  %s1 = inlined_call_operand.vmem [shape: bf16[256,512], index: 1, kind: input, shape index: {}]
  %s2 = inlined_call_operand.vmem [shape: bf16[256,512], index: 2, kind: output, shape index: {}]
  %s3 = sld [smem:[#allocation0]]
  $region41: #{multilayer_gcn_forward.6} parent=0
    _
  %s5 = ssub.s32 1, %s3
  %s6 = scalar_select 0, %s5, %s3
  loop: start=0, step=1, limit=4
  $region2: #{multilayer_gcn_forward.6} parent=0 // loop_pre_header
    _
  $region3: #{multilayer_gcn_forward.6} parent=0 // loop_header
    %s8 = sphi 0, %s12
    %p9 = scmp.ge.s32.totalorder %s8, 4
    %s18 = sphi 0, %s20
    %s21 = sphi 0, %s18
    %s22 = sphi 0, %s21
    %s38 = sphi 0, %s22
    %s42 = sphi 0, %s42
    %s44 = sphi 0, %s42
    %s45 = sphi 0, %s44
    %s59 = sphi 0, %s45
    %s65 = sphi 0, %s67
    %s68 = sphi 0, %s65
    %s69 = sphi 0, %s68
    %s85 = sphi 0, %s69
  $region4: #{multilayer_gcn_forward.6} parent=0 // loop_header_branch
    %11 = sbr.rel (%p9) target = $region8
  $region5: #{multilayer_gcn_forward.6} parent=0 // loop_body
    %s13 = ssub.s32 %s8, 1
    %s14 = ssub.s32 %s8, 2
    %s15 = sadd.s32 %s8, 1
    %s16 = ssub.s32 %s8, %s15
    %p17 = scmp.eq.s32.totalorder %s16, 0
    %s19 = sadd.s32 %s18, 1
    %s20 = scalar_select %p17, %s18, %s19
    %p23 = pneg %p17
    %p24 = scmp.eq.s32.totalorder %s8, 1
    %p25 = por %p23, %p24
    %p26 = scmp.ne.s32.totalorder %s18, %s21
    %p27 = scmp.eq.s32.totalorder %s8, 0
    %p28 = por %p26, %p27
    %p29 = scmp.ne.s32.totalorder %s18, %s21
    %p30 = scmp.eq.s32.totalorder %s13, 1
    %p31 = por %p29, %p30
    %p32 = scmp.ne.s32.totalorder %s21, %s22
    %p33 = scmp.eq.s32.totalorder %s13, 0
    %p34 = por %p32, %p33
    %p35 = scmp.ne.s32.totalorder %s21, %s22
    %p36 = scmp.eq.s32.totalorder %s14, 1
    %p37 = por %p35, %p36
    %p39 = scmp.ne.s32.totalorder %s22, %s38
    %p40 = scmp.eq.s32.totalorder %s14, 0
    %p41 = por %p39, %p40
    %s43 = sadd.s32 %s42, 1
    %p46 = scmp.eq.s32.totalorder %s8, 1
    %p47 = scmp.ne.s32.totalorder %s42, %s44
    %p48 = scmp.eq.s32.totalorder %s8, 0
    %p49 = por %p47, %p48
    %p50 = scmp.ne.s32.totalorder %s42, %s44
    %p51 = scmp.eq.s32.totalorder %s13, 1
    %p52 = por %p50, %p51
    %p53 = scmp.ne.s32.totalorder %s44, %s45
    %p54 = scmp.eq.s32.totalorder %s13, 0
    %p55 = por %p53, %p54
    %p56 = scmp.ne.s32.totalorder %s44, %s45
    %p57 = scmp.eq.s32.totalorder %s14, 1
    %p58 = por %p56, %p57
    %p60 = scmp.ne.s32.totalorder %s45, %s59
    %p61 = scmp.eq.s32.totalorder %s14, 0
    %p62 = por %p60, %p61
    %s63 = ssub.s32 %s8, %s15
    %p64 = scmp.eq.s32.totalorder %s63, 0
    %s66 = sadd.s32 %s65, 1
    %s67 = scalar_select %p64, %s65, %s66
    %p70 = pneg %p64
    %p71 = scmp.eq.s32.totalorder %s8, 1
    %p72 = por %p70, %p71
    %p73 = scmp.ne.s32.totalorder %s65, %s68
    %p74 = scmp.eq.s32.totalorder %s8, 0
    %p75 = por %p73, %p74
    %p76 = scmp.ne.s32.totalorder %s65, %s68
    %p77 = scmp.eq.s32.totalorder %s13, 1
    %p78 = por %p76, %p77
    %p79 = scmp.ne.s32.totalorder %s68, %s69
    %p80 = scmp.eq.s32.totalorder %s13, 0
    %p81 = por %p79, %p80
    %p82 = scmp.ne.s32.totalorder %s68, %s69
    %p83 = scmp.eq.s32.totalorder %s14, 1
    %p84 = por %p82, %p83
    %p86 = scmp.ne.s32.totalorder %s69, %s85
    %p87 = scmp.eq.s32.totalorder %s14, 0
    %p88 = por %p86, %p87
    %p89 = scmp.le.s32.totalorder 1, %s8
    %p90 = scmp.lt.s32.totalorder %s8, 3
    %p91 = pnand %p89, %p90
    %p92 = pneg %p91
    // Predicated region
    $region9: #{multilayer_gcn_forward.6} parent=5 // pred_check
      _
    $region10: #{multilayer_gcn_forward.6} parent=5 // pred_check_branch
      %94 = sbr.rel (%p91) target = $region12
    $region11: #{multilayer_gcn_forward.6} parent=5 // pred_region
      %s95 = ssub.s32 %s8, 1
      // Predicated region
      $region13: #{multilayer_gcn_forward.6} parent=11 // pred_check
        %p96 = pneg %p55
      $region14: #{multilayer_gcn_forward.6} parent=11 // pred_check_branch
        %98 = sbr.rel (%p96) target = $region16
      $region15: #{multilayer_gcn_forward.6} parent=11 // pred_region
        _
      $region16: #{multilayer_gcn_forward.6} parent=11 // pred_fallthru
        _
    $region12: #{multilayer_gcn_forward.6} parent=5 // pred_fallthru
      _
    %p99 = scmp.lt.s32.totalorder %s8, 2
    // Predicated region
    $region17: #{multilayer_gcn_forward.6} parent=5 // pred_check
      %p100 = pneg %p99
    $region18: #{multilayer_gcn_forward.6} parent=5 // pred_check_branch
      %102 = sbr.rel (%p100) target = $region20
    $region19: #{multilayer_gcn_forward.6} parent=5 // pred_region
      // Predicated region
      $region21: #{multilayer_gcn_forward.6} parent=19 // pred_check
        %p103 = pneg %p28
      $region22: #{multilayer_gcn_forward.6} parent=19 // pred_check_branch
        %105 = sbr.rel (%p103) target = $region24
      $region23: #{multilayer_gcn_forward.6} parent=19 // pred_region
        %s106 = smul.u32 16, %s8
        %p107 = scmp.lt.s32.totalorder %s106, 31
        %s108 = scalar_select %p107, %s106, 31
        %s109 = smul.addr %s108, 2
        %s110 = smul.addr %s109, 4
        %s111 = scalar_lea.vmem %s0, %s110
        %s112 = smul.u32 16, %s8
      $region24: #{multilayer_gcn_forward.6} parent=19 // pred_fallthru
        _
    $region20: #{multilayer_gcn_forward.6} parent=5 // pred_fallthru
      _
    %p113 = scmp.le.s32.totalorder 1, %s8
    %p114 = scmp.lt.s32.totalorder %s8, 3
    %p115 = pnand %p113, %p114
    %p116 = pneg %p115
    // Predicated region
    $region25: #{multilayer_gcn_forward.6} parent=5 // pred_check
      _
    $region26: #{multilayer_gcn_forward.6} parent=5 // pred_check_branch
      %118 = sbr.rel (%p115) target = $region28
    $region27: #{multilayer_gcn_forward.6} parent=5 // pred_region
      %s119 = ssub.s32 %s8, 1
      %s120 = smul.u32 16, %s13
      %p121 = scmp.lt.s32.totalorder %s120, 31
      %s122 = scalar_select %p121, %s120, 31
      %s123 = smul.addr %s122, 2
      %s124 = smul.addr %s123, 4
      %s125 = scalar_lea.vmem %s0, %s124
      %p126 = pneg %p34
      %p127 = pneg %p31
      %p128 = pneg %p55
      %p129 = pneg %p52
      %p130 = pneg %p81
      %p131 = pneg %p78
      %s132 = smul.u32 16, %s13
      %p133 = scmp.lt.s32.totalorder %s132, 31
      %s134 = scalar_select %p133, %s132, 31
      %s135 = smul.addr %s134, 4
      %s136 = smul.addr %s135, 4
      %s137 = scalar_lea.vmem %s2, %s136
      %s138 = smul.u32 16, %s13
      %p139 = scmp.lt.s32.totalorder %s138, 31
      %s140 = scalar_select %p139, %s138, 31
      %s141 = smul.addr %s140, 2
      %s142 = smul.addr %s141, 4
      %s143 = scalar_lea.vmem %s0, %s142
      %s144 = smul.u32 16, %s13
      %s145 = smul.u32 16, %s13
      %p146 = scmp.lt.s32.totalorder %s145, 31
      %s147 = scalar_select %p146, %s145, 31
      %s148 = smul.addr %s147, 4
      %s149 = smul.addr %s148, 4
      %s150 = scalar_lea.vmem %s2, %s149
      %s151 = smul.u32 16, %s13
      %v152 = vld [vmem:[%s143] sm:$0xff]
      %v153 = vld [vmem:[%s143 + $0x8] sm:$0xff]
      %v154 = vld [vmem:[%s143 + $0x10] sm:$0xff]
      %v155 = vld [vmem:[%s143 + $0x18] sm:$0xff]
      %v156 = vld [vmem:[%s143 + $0x20] sm:$0xff]
      %v157 = vld [vmem:[%s143 + $0x28] sm:$0xff]
      %v158 = vld [vmem:[%s143 + $0x30] sm:$0xff]
      %v159 = vld [vmem:[%s143 + $0x38] sm:$0xff]
      %v160 = vld [vmem:[%s143 + $0x40] sm:$0xff]
      %v161 = vld [vmem:[%s143 + $0x48] sm:$0xff]
      %v162 = vld [vmem:[%s143 + $0x50] sm:$0xff]
      %v163 = vld [vmem:[%s143 + $0x58] sm:$0xff]
      %v164 = vld [vmem:[%s143 + $0x60] sm:$0xff]
      %v165 = vld [vmem:[%s143 + $0x68] sm:$0xff]
      %v166 = vld [vmem:[%s143 + $0x70] sm:$0xff]
      %v167 = vld [vmem:[%s143 + $0x78] sm:$0xff]
      %v168 = vld [vmem:[%s1] sm:$0xff]
      %v169 = vld [vmem:[%s1 + $0x8] sm:$0xff]
      %v170 = vld [vmem:[%s1 + $0x10] sm:$0xff]
      %v171 = vld [vmem:[%s1 + $0x18] sm:$0xff]
      %v172 = vld [vmem:[%s1 + $0x20] sm:$0xff]
      %v173 = vld [vmem:[%s1 + $0x28] sm:$0xff]
      %v174 = vld [vmem:[%s1 + $0x30] sm:$0xff]
      %v175 = vld [vmem:[%s1 + $0x38] sm:$0xff]
      %v176 = vld [vmem:[%s1 + $0x40] sm:$0xff]
      %v177 = vld [vmem:[%s1 + $0x48] sm:$0xff]
      %v178 = vld [vmem:[%s1 + $0x50] sm:$0xff]
      %v179 = vld [vmem:[%s1 + $0x58] sm:$0xff]
      %v180 = vld [vmem:[%s1 + $0x60] sm:$0xff]
      %v181 = vld [vmem:[%s1 + $0x68] sm:$0xff]
      %v182 = vld [vmem:[%s1 + $0x70] sm:$0xff]
      %v183 = vld [vmem:[%s1 + $0x78] sm:$0xff]
      %v184 = vld [vmem:[%s1 + $0x80] sm:$0xff]
      %v185 = vld [vmem:[%s1 + $0x88] sm:$0xff]
      %v186 = vld [vmem:[%s1 + $0x90] sm:$0xff]
      %v187 = vld [vmem:[%s1 + $0x98] sm:$0xff]
      %v188 = vld [vmem:[%s1 + $0xa0] sm:$0xff]
      %v189 = vld [vmem:[%s1 + $0xa8] sm:$0xff]
      %v190 = vld [vmem:[%s1 + $0xb0] sm:$0xff]
      %v191 = vld [vmem:[%s1 + $0xb8] sm:$0xff]
      %v192 = vld [vmem:[%s1 + $0xc0] sm:$0xff]
      %v193 = vld [vmem:[%s1 + $0xc8] sm:$0xff]
      %v194 = vld [vmem:[%s1 + $0xd0] sm:$0xff]
      %v195 = vld [vmem:[%s1 + $0xd8] sm:$0xff]
      %v196 = vld [vmem:[%s1 + $0xe0] sm:$0xff]
      %v197 = vld [vmem:[%s1 + $0xe8] sm:$0xff]
      %v198 = vld [vmem:[%s1 + $0xf0] sm:$0xff]
      %v199 = vld [vmem:[%s1 + $0xf8] sm:$0xff]
      %v200 = vld [vmem:[%s1 + $0x100] sm:$0xff]
      %v201 = vld [vmem:[%s1 + $0x108] sm:$0xff]
      %v202 = vld [vmem:[%s1 + $0x110] sm:$0xff]
      %v203 = vld [vmem:[%s1 + $0x118] sm:$0xff]
      %v204 = vld [vmem:[%s1 + $0x120] sm:$0xff]
      %v205 = vld [vmem:[%s1 + $0x128] sm:$0xff]
      %v206 = vld [vmem:[%s1 + $0x130] sm:$0xff]
      %v207 = vld [vmem:[%s1 + $0x138] sm:$0xff]
      %v208 = vld [vmem:[%s1 + $0x140] sm:$0xff]
      %v209 = vld [vmem:[%s1 + $0x148] sm:$0xff]
      %v210 = vld [vmem:[%s1 + $0x150] sm:$0xff]
      %v211 = vld [vmem:[%s1 + $0x158] sm:$0xff]
      %v212 = vld [vmem:[%s1 + $0x160] sm:$0xff]
      %v213 = vld [vmem:[%s1 + $0x168] sm:$0xff]
      %v214 = vld [vmem:[%s1 + $0x170] sm:$0xff]
      %v215 = vld [vmem:[%s1 + $0x178] sm:$0xff]
      %v216 = vld [vmem:[%s1 + $0x180] sm:$0xff]
      %v217 = vld [vmem:[%s1 + $0x188] sm:$0xff]
      %v218 = vld [vmem:[%s1 + $0x190] sm:$0xff]
      %v219 = vld [vmem:[%s1 + $0x198] sm:$0xff]
      %v220 = vld [vmem:[%s1 + $0x1a0] sm:$0xff]
      %v221 = vld [vmem:[%s1 + $0x1a8] sm:$0xff]
      %v222 = vld [vmem:[%s1 + $0x1b0] sm:$0xff]
      %v223 = vld [vmem:[%s1 + $0x1b8] sm:$0xff]
      %v224 = vld [vmem:[%s1 + $0x1c0] sm:$0xff]
      %v225 = vld [vmem:[%s1 + $0x1c8] sm:$0xff]
      %v226 = vld [vmem:[%s1 + $0x1d0] sm:$0xff]
      %v227 = vld [vmem:[%s1 + $0x1d8] sm:$0xff]
      %v228 = vld [vmem:[%s1 + $0x1e0] sm:$0xff]
      %v229 = vld [vmem:[%s1 + $0x1e8] sm:$0xff]
      %v230 = vld [vmem:[%s1 + $0x1f0] sm:$0xff]
      %v231 = vld [vmem:[%s1 + $0x1f8] sm:$0xff]
      %v248 = vunpack.c.l.b16 %v152
      %v249 = vunpack.c.h.b16 %v152
      %v250 = vunpack.c.l.b16 %v153
      %v251 = vunpack.c.h.b16 %v153
      %v252 = vunpack.c.l.b16 %v154
      %v253 = vunpack.c.h.b16 %v154
      %v254 = vunpack.c.l.b16 %v155
      %v255 = vunpack.c.h.b16 %v155
      %v256 = vunpack.c.l.b16 %v156
      %v257 = vunpack.c.h.b16 %v156
      %v258 = vunpack.c.l.b16 %v157
      %v259 = vunpack.c.h.b16 %v157
      %v260 = vunpack.c.l.b16 %v158
      %v261 = vunpack.c.h.b16 %v158
      %v262 = vunpack.c.l.b16 %v159
      %v263 = vunpack.c.h.b16 %v159
      %v264 = vunpack.c.l.b16 %v160
      %v265 = vunpack.c.h.b16 %v160
      %v266 = vunpack.c.l.b16 %v161
      %v267 = vunpack.c.h.b16 %v161
      %v268 = vunpack.c.l.b16 %v162
      %v269 = vunpack.c.h.b16 %v162
      %v270 = vunpack.c.l.b16 %v163
      %v271 = vunpack.c.h.b16 %v163
      %v272 = vunpack.c.l.b16 %v164
      %v273 = vunpack.c.h.b16 %v164
      %v274 = vunpack.c.l.b16 %v165
      %v275 = vunpack.c.h.b16 %v165
      %v276 = vunpack.c.l.b16 %v166
      %v277 = vunpack.c.h.b16 %v166
      %v278 = vunpack.c.l.b16 %v167
      %v279 = vunpack.c.h.b16 %v167
      %v280 = vpack.c.b16 %v250, %v248
      %v281 = vpack.c.b16 %v251, %v249
      %v282 = vpack.c.b16 %v254, %v252
      %v283 = vpack.c.b16 %v255, %v253
      %v284 = vpack.c.b16 %v258, %v256
      %v285 = vpack.c.b16 %v259, %v257
      %v286 = vpack.c.b16 %v262, %v260
      %v287 = vpack.c.b16 %v263, %v261
      %v288 = vpack.c.b16 %v266, %v264
      %v289 = vpack.c.b16 %v267, %v265
      %v290 = vpack.c.b16 %v270, %v268
      %v291 = vpack.c.b16 %v271, %v269
      %v292 = vpack.c.b16 %v274, %v272
      %v293 = vpack.c.b16 %v275, %v273
      %v294 = vpack.c.b16 %v278, %v276
      %v295 = vpack.c.b16 %v279, %v277
      %v376 = vunpack.c.l.b16 %v168
      %v377 = vunpack.c.h.b16 %v168
      %v378 = vunpack.c.l.b16 %v169
      %v379 = vunpack.c.h.b16 %v169
      %v380 = vunpack.c.l.b16 %v170
      %v381 = vunpack.c.h.b16 %v170
      %v382 = vunpack.c.l.b16 %v171
      %v383 = vunpack.c.h.b16 %v171
      %v384 = vunpack.c.l.b16 %v172
      %v385 = vunpack.c.h.b16 %v172
      %v386 = vunpack.c.l.b16 %v173
      %v387 = vunpack.c.h.b16 %v173
      %v388 = vunpack.c.l.b16 %v174
      %v389 = vunpack.c.h.b16 %v174
      %v390 = vunpack.c.l.b16 %v175
      %v391 = vunpack.c.h.b16 %v175
      %v392 = vunpack.c.l.b16 %v176
      %v393 = vunpack.c.h.b16 %v176
      %v394 = vunpack.c.l.b16 %v177
      %v395 = vunpack.c.h.b16 %v177
      %v396 = vunpack.c.l.b16 %v178
      %v397 = vunpack.c.h.b16 %v178
      %v398 = vunpack.c.l.b16 %v179
      %v399 = vunpack.c.h.b16 %v179
      %v400 = vunpack.c.l.b16 %v180
      %v401 = vunpack.c.h.b16 %v180
      %v402 = vunpack.c.l.b16 %v181
      %v403 = vunpack.c.h.b16 %v181
      %v404 = vunpack.c.l.b16 %v182
      %v405 = vunpack.c.h.b16 %v182
      %v406 = vunpack.c.l.b16 %v183
      %v407 = vunpack.c.h.b16 %v183
      %v408 = vunpack.c.l.b16 %v184
      %v409 = vunpack.c.h.b16 %v184
      %v410 = vunpack.c.l.b16 %v185
      %v411 = vunpack.c.h.b16 %v185
      %v412 = vunpack.c.l.b16 %v186
      %v413 = vunpack.c.h.b16 %v186
      %v414 = vunpack.c.l.b16 %v187
      %v415 = vunpack.c.h.b16 %v187
      %v416 = vunpack.c.l.b16 %v188
      %v417 = vunpack.c.h.b16 %v188
      %v418 = vunpack.c.l.b16 %v189
      %v419 = vunpack.c.h.b16 %v189
      %v420 = vunpack.c.l.b16 %v190
      %v421 = vunpack.c.h.b16 %v190
      %v422 = vunpack.c.l.b16 %v191
      %v423 = vunpack.c.h.b16 %v191
      %v424 = vunpack.c.l.b16 %v192
      %v425 = vunpack.c.h.b16 %v192
      %v426 = vunpack.c.l.b16 %v193
      %v427 = vunpack.c.h.b16 %v193
      %v428 = vunpack.c.l.b16 %v194
      %v429 = vunpack.c.h.b16 %v194
      %v430 = vunpack.c.l.b16 %v195
      %v431 = vunpack.c.h.b16 %v195
      %v432 = vunpack.c.l.b16 %v196
      %v433 = vunpack.c.h.b16 %v196
      %v434 = vunpack.c.l.b16 %v197
      %v435 = vunpack.c.h.b16 %v197
      %v436 = vunpack.c.l.b16 %v198
      %v437 = vunpack.c.h.b16 %v198
      %v438 = vunpack.c.l.b16 %v199
      %v439 = vunpack.c.h.b16 %v199
      %v440 = vunpack.c.l.b16 %v200
      %v441 = vunpack.c.h.b16 %v200
      %v442 = vunpack.c.l.b16 %v201
      %v443 = vunpack.c.h.b16 %v201
      %v444 = vunpack.c.l.b16 %v202
      %v445 = vunpack.c.h.b16 %v202
      %v446 = vunpack.c.l.b16 %v203
      %v447 = vunpack.c.h.b16 %v203
      %v448 = vunpack.c.l.b16 %v204
      %v449 = vunpack.c.h.b16 %v204
      %v450 = vunpack.c.l.b16 %v205
      %v451 = vunpack.c.h.b16 %v205
      %v452 = vunpack.c.l.b16 %v206
      %v453 = vunpack.c.h.b16 %v206
      %v454 = vunpack.c.l.b16 %v207
      %v455 = vunpack.c.h.b16 %v207
      %v456 = vunpack.c.l.b16 %v208
      %v457 = vunpack.c.h.b16 %v208
      %v458 = vunpack.c.l.b16 %v209
      %v459 = vunpack.c.h.b16 %v209
      %v460 = vunpack.c.l.b16 %v210
      %v461 = vunpack.c.h.b16 %v210
      %v462 = vunpack.c.l.b16 %v211
      %v463 = vunpack.c.h.b16 %v211
      %v464 = vunpack.c.l.b16 %v212
      %v465 = vunpack.c.h.b16 %v212
      %v466 = vunpack.c.l.b16 %v213
      %v467 = vunpack.c.h.b16 %v213
      %v468 = vunpack.c.l.b16 %v214
      %v469 = vunpack.c.h.b16 %v214
      %v470 = vunpack.c.l.b16 %v215
      %v471 = vunpack.c.h.b16 %v215
      %v472 = vunpack.c.l.b16 %v216
      %v473 = vunpack.c.h.b16 %v216
      %v474 = vunpack.c.l.b16 %v217
      %v475 = vunpack.c.h.b16 %v217
      %v476 = vunpack.c.l.b16 %v218
      %v477 = vunpack.c.h.b16 %v218
      %v478 = vunpack.c.l.b16 %v219
      %v479 = vunpack.c.h.b16 %v219
      %v480 = vunpack.c.l.b16 %v220
      %v481 = vunpack.c.h.b16 %v220
      %v482 = vunpack.c.l.b16 %v221
      %v483 = vunpack.c.h.b16 %v221
      %v484 = vunpack.c.l.b16 %v222
      %v485 = vunpack.c.h.b16 %v222
      %v486 = vunpack.c.l.b16 %v223
      %v487 = vunpack.c.h.b16 %v223
      %v488 = vunpack.c.l.b16 %v224
      %v489 = vunpack.c.h.b16 %v224
      %v490 = vunpack.c.l.b16 %v225
      %v491 = vunpack.c.h.b16 %v225
      %v492 = vunpack.c.l.b16 %v226
      %v493 = vunpack.c.h.b16 %v226
      %v494 = vunpack.c.l.b16 %v227
      %v495 = vunpack.c.h.b16 %v227
      %v496 = vunpack.c.l.b16 %v228
      %v497 = vunpack.c.h.b16 %v228
      %v498 = vunpack.c.l.b16 %v229
      %v499 = vunpack.c.h.b16 %v229
      %v500 = vunpack.c.l.b16 %v230
      %v501 = vunpack.c.h.b16 %v230
      %v502 = vunpack.c.l.b16 %v231
      %v503 = vunpack.c.h.b16 %v231
      %v504 = vpack.c.b16 %v380, %v376
      %v505 = vpack.c.b16 %v381, %v377
      %v506 = vpack.c.b16 %v382, %v378
      %v507 = vpack.c.b16 %v383, %v379
      %v508 = vpack.c.b16 %v388, %v384
      %v509 = vpack.c.b16 %v389, %v385
      %v510 = vpack.c.b16 %v390, %v386
      %v511 = vpack.c.b16 %v391, %v387
      %v512 = vpack.c.b16 %v396, %v392
      %v513 = vpack.c.b16 %v397, %v393
      %v514 = vpack.c.b16 %v398, %v394
      %v515 = vpack.c.b16 %v399, %v395
      %v516 = vpack.c.b16 %v404, %v400
      %v517 = vpack.c.b16 %v405, %v401
      %v518 = vpack.c.b16 %v406, %v402
      %v519 = vpack.c.b16 %v407, %v403
      %v520 = vpack.c.b16 %v412, %v408
      %v521 = vpack.c.b16 %v413, %v409
      %v522 = vpack.c.b16 %v414, %v410
      %v523 = vpack.c.b16 %v415, %v411
      %v524 = vpack.c.b16 %v420, %v416
      %v525 = vpack.c.b16 %v421, %v417
      %v526 = vpack.c.b16 %v422, %v418
      %v527 = vpack.c.b16 %v423, %v419
      %v528 = vpack.c.b16 %v428, %v424
      %v529 = vpack.c.b16 %v429, %v425
      %v530 = vpack.c.b16 %v430, %v426
      %v531 = vpack.c.b16 %v431, %v427
      %v532 = vpack.c.b16 %v436, %v432
      %v533 = vpack.c.b16 %v437, %v433
      %v534 = vpack.c.b16 %v438, %v434
      %v535 = vpack.c.b16 %v439, %v435
      %v536 = vpack.c.b16 %v444, %v440
      %v537 = vpack.c.b16 %v445, %v441
      %v538 = vpack.c.b16 %v446, %v442
      %v539 = vpack.c.b16 %v447, %v443
      %v540 = vpack.c.b16 %v452, %v448
      %v541 = vpack.c.b16 %v453, %v449
      %v542 = vpack.c.b16 %v454, %v450
      %v543 = vpack.c.b16 %v455, %v451
      %v544 = vpack.c.b16 %v460, %v456
      %v545 = vpack.c.b16 %v461, %v457
      %v546 = vpack.c.b16 %v462, %v458
      %v547 = vpack.c.b16 %v463, %v459
      %v548 = vpack.c.b16 %v468, %v464
      %v549 = vpack.c.b16 %v469, %v465
      %v550 = vpack.c.b16 %v470, %v466
      %v551 = vpack.c.b16 %v471, %v467
      %v552 = vpack.c.b16 %v476, %v472
      %v553 = vpack.c.b16 %v477, %v473
      %v554 = vpack.c.b16 %v478, %v474
      %v555 = vpack.c.b16 %v479, %v475
      %v556 = vpack.c.b16 %v484, %v480
      %v557 = vpack.c.b16 %v485, %v481
      %v558 = vpack.c.b16 %v486, %v482
      %v559 = vpack.c.b16 %v487, %v483
      %v560 = vpack.c.b16 %v492, %v488
      %v561 = vpack.c.b16 %v493, %v489
      %v562 = vpack.c.b16 %v494, %v490
      %v563 = vpack.c.b16 %v495, %v491
      %v564 = vpack.c.b16 %v500, %v496
      %v565 = vpack.c.b16 %v501, %v497
      %v566 = vpack.c.b16 %v502, %v498
      %v567 = vpack.c.b16 %v503, %v499
      %632 = vmatprep.subr.bf16.mxu0 %v505
      %633 = vmatpush1.bf16.msra.mxu0 %v504
      %634 = vmatprep.subr.bf16.mxu0 %v509
      %635 = vmatpush1.bf16.msra.mxu0 %v508
      %636 = vmatprep.subr.bf16.mxu0 %v513
      %637 = vmatpush1.bf16.msra.mxu0 %v512
      %638 = vmatprep.subr.bf16.mxu0 %v517
      %639 = vmatpush1.bf16.msra.mxu0 %v516
      %640 = vmatprep.subr.bf16.mxu0 %v521
      %641 = vmatpush1.bf16.msra.mxu0 %v520
      %642 = vmatprep.subr.bf16.mxu0 %v525
      %643 = vmatpush1.bf16.msra.mxu0 %v524
      %644 = vmatprep.subr.bf16.mxu0 %v529
      %645 = vmatpush1.bf16.msra.mxu0 %v528
      %646 = vmatprep.subr.bf16.mxu0 %v533
      %647 = vmatpush1.bf16.msra.mxu0 %v532
      %648 = vmatprep.subr.bf16.mxu0 %v537
      %649 = vmatpush1.bf16.msra.mxu0 %v536
      %650 = vmatprep.subr.bf16.mxu0 %v541
      %651 = vmatpush1.bf16.msra.mxu0 %v540
      %652 = vmatprep.subr.bf16.mxu0 %v545
      %653 = vmatpush1.bf16.msra.mxu0 %v544
      %654 = vmatprep.subr.bf16.mxu0 %v549
      %655 = vmatpush1.bf16.msra.mxu0 %v548
      %656 = vmatprep.subr.bf16.mxu0 %v553
      %657 = vmatpush1.bf16.msra.mxu0 %v552
      %658 = vmatprep.subr.bf16.mxu0 %v557
      %659 = vmatpush1.bf16.msra.mxu0 %v556
      %660 = vmatprep.subr.bf16.mxu0 %v561
      %661 = vmatpush1.bf16.msra.mxu0 %v560
      %662 = vmatprep.subr.bf16.mxu0 %v565
      %663 = vmatpush1.bf16.msra.mxu0 %v564
      %664 = vmatprep.mubr.bf16.mxu0 %v281
      %665 = vmatmul.mubr.bf16.gmra.mrb[0].mxu0 %v280
      %v666 = vpop.f32.mrb[0].mxu0
      %v667 = vadd.f32 0.0, %v666
      %v668 = vpop.f32.mrb[0].mxu0
      %v669 = vadd.f32 0.0, %v668
      %v670 = vpop.f32.mrb[0].mxu0
      %v671 = vadd.f32 0.0, %v670
      %v672 = vpop.f32.mrb[0].mxu0
      %v673 = vadd.f32 0.0, %v672
      %674 = vmatprep.mubr.bf16.mxu0 %v283
      %675 = vmatmul.mubr.bf16.gmra.mrb[0].mxu0 %v282
      %v676 = vpop.f32.mrb[0].mxu0
      %v677 = vadd.f32 0.0, %v676
      %v678 = vpop.f32.mrb[0].mxu0
      %v679 = vadd.f32 0.0, %v678
      %v680 = vpop.f32.mrb[0].mxu0
      %v681 = vadd.f32 0.0, %v680
      %v682 = vpop.f32.mrb[0].mxu0
      %v683 = vadd.f32 0.0, %v682
      %684 = vmatprep.mubr.bf16.mxu0 %v285
      %685 = vmatmul.mubr.bf16.gmra.mrb[0].mxu0 %v284
      %v686 = vpop.f32.mrb[0].mxu0
      %v687 = vadd.f32 0.0, %v686
      %v688 = vpop.f32.mrb[0].mxu0
      %v689 = vadd.f32 0.0, %v688
      %v690 = vpop.f32.mrb[0].mxu0
      %v691 = vadd.f32 0.0, %v690
      %v692 = vpop.f32.mrb[0].mxu0
      %v693 = vadd.f32 0.0, %v692
      %694 = vmatprep.mubr.bf16.mxu0 %v287
      %695 = vmatmul.mubr.bf16.gmra.mrb[0].mxu0 %v286
      %v696 = vpop.f32.mrb[0].mxu0
      %v697 = vadd.f32 0.0, %v696
      %v698 = vpop.f32.mrb[0].mxu0
      %v699 = vadd.f32 0.0, %v698
      %v700 = vpop.f32.mrb[0].mxu0
      %v701 = vadd.f32 0.0, %v700
      %v702 = vpop.f32.mrb[0].mxu0
      %v703 = vadd.f32 0.0, %v702
      %704 = vmatprep.mubr.bf16.mxu0 %v289
      %705 = vmatmul.mubr.bf16.gmra.mrb[0].mxu0 %v288
      %v706 = vpop.f32.mrb[0].mxu0
      %v707 = vadd.f32 0.0, %v706
      %v708 = vpop.f32.mrb[0].mxu0
      %v709 = vadd.f32 0.0, %v708
      %v710 = vpop.f32.mrb[0].mxu0
      %v711 = vadd.f32 0.0, %v710
      %v712 = vpop.f32.mrb[0].mxu0
      %v713 = vadd.f32 0.0, %v712
      %714 = vmatprep.mubr.bf16.mxu0 %v291
      %715 = vmatmul.mubr.bf16.gmra.mrb[0].mxu0 %v290
      %v716 = vpop.f32.mrb[0].mxu0
      %v717 = vadd.f32 0.0, %v716
      %v718 = vpop.f32.mrb[0].mxu0
      %v719 = vadd.f32 0.0, %v718
      %v720 = vpop.f32.mrb[0].mxu0
      %v721 = vadd.f32 0.0, %v720
      %v722 = vpop.f32.mrb[0].mxu0
      %v723 = vadd.f32 0.0, %v722
      %724 = vmatprep.mubr.bf16.mxu0 %v293
      %725 = vmatmul.mubr.bf16.gmra.mrb[0].mxu0 %v292
      %v726 = vpop.f32.mrb[0].mxu0
      %v727 = vadd.f32 0.0, %v726
      %v728 = vpop.f32.mrb[0].mxu0
      %v729 = vadd.f32 0.0, %v728
      %v730 = vpop.f32.mrb[0].mxu0
      %v731 = vadd.f32 0.0, %v730
      %v732 = vpop.f32.mrb[0].mxu0
      %v733 = vadd.f32 0.0, %v732
      %734 = vmatprep.mubr.bf16.mxu0 %v295
      %735 = vmatmul.mubr.bf16.gmra.mrb[0].mxu0 %v294
      %v736 = vpop.f32.mrb[0].mxu0
      %v737 = vadd.f32 0.0, %v736
      %v738 = vpop.f32.mrb[0].mxu0
      %v739 = vadd.f32 0.0, %v738
      %v740 = vpop.f32.mrb[0].mxu0
      %v741 = vadd.f32 0.0, %v740
      %v742 = vpop.f32.mrb[0].mxu0
      %v743 = vadd.f32 0.0, %v742
      %744 = vdwg.mxu0
      %745 = vmatprep.subr.bf16.mxu0 %v507
      %746 = vmatpush1.bf16.msra.mxu0 %v506
      %747 = vmatprep.subr.bf16.mxu0 %v511
      %748 = vmatpush1.bf16.msra.mxu0 %v510
      %749 = vmatprep.subr.bf16.mxu0 %v515
      %750 = vmatpush1.bf16.msra.mxu0 %v514
      %751 = vmatprep.subr.bf16.mxu0 %v519
      %752 = vmatpush1.bf16.msra.mxu0 %v518
      %753 = vmatprep.subr.bf16.mxu0 %v523
      %754 = vmatpush1.bf16.msra.mxu0 %v522
      %755 = vmatprep.subr.bf16.mxu0 %v527
      %756 = vmatpush1.bf16.msra.mxu0 %v526
      %757 = vmatprep.subr.bf16.mxu0 %v531
      %758 = vmatpush1.bf16.msra.mxu0 %v530
      %759 = vmatprep.subr.bf16.mxu0 %v535
      %760 = vmatpush1.bf16.msra.mxu0 %v534
      %761 = vmatprep.subr.bf16.mxu0 %v539
      %762 = vmatpush1.bf16.msra.mxu0 %v538
      %763 = vmatprep.subr.bf16.mxu0 %v543
      %764 = vmatpush1.bf16.msra.mxu0 %v542
      %765 = vmatprep.subr.bf16.mxu0 %v547
      %766 = vmatpush1.bf16.msra.mxu0 %v546
      %767 = vmatprep.subr.bf16.mxu0 %v551
      %768 = vmatpush1.bf16.msra.mxu0 %v550
      %769 = vmatprep.subr.bf16.mxu0 %v555
      %770 = vmatpush1.bf16.msra.mxu0 %v554
      %771 = vmatprep.subr.bf16.mxu0 %v559
      %772 = vmatpush1.bf16.msra.mxu0 %v558
      %773 = vmatprep.subr.bf16.mxu0 %v563
      %774 = vmatpush1.bf16.msra.mxu0 %v562
      %775 = vmatprep.subr.bf16.mxu0 %v567
      %776 = vmatpush1.bf16.msra.mxu0 %v566
      %777 = vmatprep.mubr.bf16.mxu0 %v281
      %778 = vmatmul.mubr.bf16.gmra.mrb[0].mxu0 %v280
      %v779 = vpop.f32.mrb[0].mxu0
      %v780 = vadd.f32 0.0, %v779
      %v781 = vpop.f32.mrb[0].mxu0
      %v782 = vadd.f32 0.0, %v781
      %v783 = vpop.f32.mrb[0].mxu0
      %v784 = vadd.f32 0.0, %v783
      %v785 = vpop.f32.mrb[0].mxu0
      %v786 = vadd.f32 0.0, %v785
      %787 = vmatprep.mubr.bf16.mxu0 %v283
      %788 = vmatmul.mubr.bf16.gmra.mrb[0].mxu0 %v282
      %v789 = vpop.f32.mrb[0].mxu0
      %v790 = vadd.f32 0.0, %v789
      %v791 = vpop.f32.mrb[0].mxu0
      %v792 = vadd.f32 0.0, %v791
      %v793 = vpop.f32.mrb[0].mxu0
      %v794 = vadd.f32 0.0, %v793
      %v795 = vpop.f32.mrb[0].mxu0
      %v796 = vadd.f32 0.0, %v795
      %797 = vmatprep.mubr.bf16.mxu0 %v285
      %798 = vmatmul.mubr.bf16.gmra.mrb[0].mxu0 %v284
      %v799 = vpop.f32.mrb[0].mxu0
      %v800 = vadd.f32 0.0, %v799
      %v801 = vpop.f32.mrb[0].mxu0
      %v802 = vadd.f32 0.0, %v801
      %v803 = vpop.f32.mrb[0].mxu0
      %v804 = vadd.f32 0.0, %v803
      %v805 = vpop.f32.mrb[0].mxu0
      %v806 = vadd.f32 0.0, %v805
      %807 = vmatprep.mubr.bf16.mxu0 %v287
      %808 = vmatmul.mubr.bf16.gmra.mrb[0].mxu0 %v286
      %v809 = vpop.f32.mrb[0].mxu0
      %v810 = vadd.f32 0.0, %v809
      %v811 = vpop.f32.mrb[0].mxu0
      %v812 = vadd.f32 0.0, %v811
      %v813 = vpop.f32.mrb[0].mxu0
      %v814 = vadd.f32 0.0, %v813
      %v815 = vpop.f32.mrb[0].mxu0
      %v816 = vadd.f32 0.0, %v815
      %817 = vmatprep.mubr.bf16.mxu0 %v289
      %818 = vmatmul.mubr.bf16.gmra.mrb[0].mxu0 %v288
      %v819 = vpop.f32.mrb[0].mxu0
      %v820 = vadd.f32 0.0, %v819
      %v821 = vpop.f32.mrb[0].mxu0
      %v822 = vadd.f32 0.0, %v821
      %v823 = vpop.f32.mrb[0].mxu0
      %v824 = vadd.f32 0.0, %v823
      %v825 = vpop.f32.mrb[0].mxu0
      %v826 = vadd.f32 0.0, %v825
      %827 = vmatprep.mubr.bf16.mxu0 %v291
      %828 = vmatmul.mubr.bf16.gmra.mrb[0].mxu0 %v290
      %v829 = vpop.f32.mrb[0].mxu0
      %v830 = vadd.f32 0.0, %v829
      %v831 = vpop.f32.mrb[0].mxu0
      %v832 = vadd.f32 0.0, %v831
      %v833 = vpop.f32.mrb[0].mxu0
      %v834 = vadd.f32 0.0, %v833
      %v835 = vpop.f32.mrb[0].mxu0
      %v836 = vadd.f32 0.0, %v835
      %837 = vmatprep.mubr.bf16.mxu0 %v293
      %838 = vmatmul.mubr.bf16.gmra.mrb[0].mxu0 %v292
      %v839 = vpop.f32.mrb[0].mxu0
      %v840 = vadd.f32 0.0, %v839
      %v841 = vpop.f32.mrb[0].mxu0
      %v842 = vadd.f32 0.0, %v841
      %v843 = vpop.f32.mrb[0].mxu0
      %v844 = vadd.f32 0.0, %v843
      %v845 = vpop.f32.mrb[0].mxu0
      %v846 = vadd.f32 0.0, %v845
      %847 = vmatprep.mubr.bf16.mxu0 %v295
      %848 = vmatmul.mubr.bf16.gmra.mrb[0].mxu0 %v294
      %v849 = vpop.f32.mrb[0].mxu0
      %v850 = vadd.f32 0.0, %v849
      %v851 = vpop.f32.mrb[0].mxu0
      %v852 = vadd.f32 0.0, %v851
      %v853 = vpop.f32.mrb[0].mxu0
      %v854 = vadd.f32 0.0, %v853
      %v855 = vpop.f32.mrb[0].mxu0
      %v856 = vadd.f32 0.0, %v855
      %857 = vdwg.mxu0
      %v858 = vpack.c.bf16 %v671, %v667
      %v859 = vpack.c.bf16 %v673, %v669
      %v860 = vpack.c.bf16 %v784, %v780
      %v861 = vpack.c.bf16 %v786, %v782
      %v862 = vpack.c.bf16 %v681, %v677
      %v863 = vpack.c.bf16 %v683, %v679
      %v864 = vpack.c.bf16 %v794, %v790
      %v865 = vpack.c.bf16 %v796, %v792
      %v866 = vpack.c.bf16 %v691, %v687
      %v867 = vpack.c.bf16 %v693, %v689
      %v868 = vpack.c.bf16 %v804, %v800
      %v869 = vpack.c.bf16 %v806, %v802
      %v870 = vpack.c.bf16 %v701, %v697
      %v871 = vpack.c.bf16 %v703, %v699
      %v872 = vpack.c.bf16 %v814, %v810
      %v873 = vpack.c.bf16 %v816, %v812
      %v874 = vpack.c.bf16 %v711, %v707
      %v875 = vpack.c.bf16 %v713, %v709
      %v876 = vpack.c.bf16 %v824, %v820
      %v877 = vpack.c.bf16 %v826, %v822
      %v878 = vpack.c.bf16 %v721, %v717
      %v879 = vpack.c.bf16 %v723, %v719
      %v880 = vpack.c.bf16 %v834, %v830
      %v881 = vpack.c.bf16 %v836, %v832
      %v882 = vpack.c.bf16 %v731, %v727
      %v883 = vpack.c.bf16 %v733, %v729
      %v884 = vpack.c.bf16 %v844, %v840
      %v885 = vpack.c.bf16 %v846, %v842
      %v886 = vpack.c.bf16 %v741, %v737
      %v887 = vpack.c.bf16 %v743, %v739
      %v888 = vpack.c.bf16 %v854, %v850
      %v889 = vpack.c.bf16 %v856, %v852
      %v922 = vunpack.c.l.b16 %v858
      %v923 = vunpack.c.l.b16 %v859
      %v924 = vunpack.c.l.b16 %v860
      %v925 = vunpack.c.l.b16 %v861
      %v926 = vunpack.c.h.b16 %v858
      %v927 = vunpack.c.h.b16 %v859
      %v928 = vunpack.c.h.b16 %v860
      %v929 = vunpack.c.h.b16 %v861
      %v930 = vunpack.c.l.b16 %v862
      %v931 = vunpack.c.l.b16 %v863
      %v932 = vunpack.c.l.b16 %v864
      %v933 = vunpack.c.l.b16 %v865
      %v934 = vunpack.c.h.b16 %v862
      %v935 = vunpack.c.h.b16 %v863
      %v936 = vunpack.c.h.b16 %v864
      %v937 = vunpack.c.h.b16 %v865
      %v938 = vunpack.c.l.b16 %v866
      %v939 = vunpack.c.l.b16 %v867
      %v940 = vunpack.c.l.b16 %v868
      %v941 = vunpack.c.l.b16 %v869
      %v942 = vunpack.c.h.b16 %v866
      %v943 = vunpack.c.h.b16 %v867
      %v944 = vunpack.c.h.b16 %v868
      %v945 = vunpack.c.h.b16 %v869
      %v946 = vunpack.c.l.b16 %v870
      %v947 = vunpack.c.l.b16 %v871
      %v948 = vunpack.c.l.b16 %v872
      %v949 = vunpack.c.l.b16 %v873
      %v950 = vunpack.c.h.b16 %v870
      %v951 = vunpack.c.h.b16 %v871
      %v952 = vunpack.c.h.b16 %v872
      %v953 = vunpack.c.h.b16 %v873
      %v954 = vunpack.c.l.b16 %v874
      %v955 = vunpack.c.l.b16 %v875
      %v956 = vunpack.c.l.b16 %v876
      %v957 = vunpack.c.l.b16 %v877
      %v958 = vunpack.c.h.b16 %v874
      %v959 = vunpack.c.h.b16 %v875
      %v960 = vunpack.c.h.b16 %v876
      %v961 = vunpack.c.h.b16 %v877
      %v962 = vunpack.c.l.b16 %v878
      %v963 = vunpack.c.l.b16 %v879
      %v964 = vunpack.c.l.b16 %v880
      %v965 = vunpack.c.l.b16 %v881
      %v966 = vunpack.c.h.b16 %v878
      %v967 = vunpack.c.h.b16 %v879
      %v968 = vunpack.c.h.b16 %v880
      %v969 = vunpack.c.h.b16 %v881
      %v970 = vunpack.c.l.b16 %v882
      %v971 = vunpack.c.l.b16 %v883
      %v972 = vunpack.c.l.b16 %v884
      %v973 = vunpack.c.l.b16 %v885
      %v974 = vunpack.c.h.b16 %v882
      %v975 = vunpack.c.h.b16 %v883
      %v976 = vunpack.c.h.b16 %v884
      %v977 = vunpack.c.h.b16 %v885
      %v978 = vunpack.c.l.b16 %v886
      %v979 = vunpack.c.l.b16 %v887
      %v980 = vunpack.c.l.b16 %v888
      %v981 = vunpack.c.l.b16 %v889
      %v982 = vunpack.c.h.b16 %v886
      %v983 = vunpack.c.h.b16 %v887
      %v984 = vunpack.c.h.b16 %v888
      %v985 = vunpack.c.h.b16 %v889
      %v986 = vpack.c.b16 %v923, %v922
      %v987 = vpack.c.b16 %v925, %v924
      %v988 = vpack.c.b16 %v927, %v926
      %v989 = vpack.c.b16 %v929, %v928
      %v990 = vpack.c.b16 %v931, %v930
      %v991 = vpack.c.b16 %v933, %v932
      %v992 = vpack.c.b16 %v935, %v934
      %v993 = vpack.c.b16 %v937, %v936
      %v994 = vpack.c.b16 %v939, %v938
      %v995 = vpack.c.b16 %v941, %v940
      %v996 = vpack.c.b16 %v943, %v942
      %v997 = vpack.c.b16 %v945, %v944
      %v998 = vpack.c.b16 %v947, %v946
      %v999 = vpack.c.b16 %v949, %v948
      %v1000 = vpack.c.b16 %v951, %v950
      %v1001 = vpack.c.b16 %v953, %v952
      %v1002 = vpack.c.b16 %v955, %v954
      %v1003 = vpack.c.b16 %v957, %v956
      %v1004 = vpack.c.b16 %v959, %v958
      %v1005 = vpack.c.b16 %v961, %v960
      %v1006 = vpack.c.b16 %v963, %v962
      %v1007 = vpack.c.b16 %v965, %v964
      %v1008 = vpack.c.b16 %v967, %v966
      %v1009 = vpack.c.b16 %v969, %v968
      %v1010 = vpack.c.b16 %v971, %v970
      %v1011 = vpack.c.b16 %v973, %v972
      %v1012 = vpack.c.b16 %v975, %v974
      %v1013 = vpack.c.b16 %v977, %v976
      %v1014 = vpack.c.b16 %v979, %v978
      %v1015 = vpack.c.b16 %v981, %v980
      %v1016 = vpack.c.b16 %v983, %v982
      %v1017 = vpack.c.b16 %v985, %v984
      %1050 = vst [vmem:[%s150] sm:$0xff] %v986
      %1051 = vst [vmem:[%s150 + $0x8] sm:$0xff] %v987
      %1052 = vst [vmem:[%s150 + $0x10] sm:$0xff] %v988
      %1053 = vst [vmem:[%s150 + $0x18] sm:$0xff] %v989
      %1054 = vst [vmem:[%s150 + $0x20] sm:$0xff] %v990
      %1055 = vst [vmem:[%s150 + $0x28] sm:$0xff] %v991
      %1056 = vst [vmem:[%s150 + $0x30] sm:$0xff] %v992
      %1057 = vst [vmem:[%s150 + $0x38] sm:$0xff] %v993
      %1058 = vst [vmem:[%s150 + $0x40] sm:$0xff] %v994
      %1059 = vst [vmem:[%s150 + $0x48] sm:$0xff] %v995
      %1060 = vst [vmem:[%s150 + $0x50] sm:$0xff] %v996
      %1061 = vst [vmem:[%s150 + $0x58] sm:$0xff] %v997
      %1062 = vst [vmem:[%s150 + $0x60] sm:$0xff] %v998
      %1063 = vst [vmem:[%s150 + $0x68] sm:$0xff] %v999
      %1064 = vst [vmem:[%s150 + $0x70] sm:$0xff] %v1000
      %1065 = vst [vmem:[%s150 + $0x78] sm:$0xff] %v1001
      %1066 = vst [vmem:[%s150 + $0x80] sm:$0xff] %v1002
      %1067 = vst [vmem:[%s150 + $0x88] sm:$0xff] %v1003
      %1068 = vst [vmem:[%s150 + $0x90] sm:$0xff] %v1004
      %1069 = vst [vmem:[%s150 + $0x98] sm:$0xff] %v1005
      %1070 = vst [vmem:[%s150 + $0xa0] sm:$0xff] %v1006
      %1071 = vst [vmem:[%s150 + $0xa8] sm:$0xff] %v1007
      %1072 = vst [vmem:[%s150 + $0xb0] sm:$0xff] %v1008
      %1073 = vst [vmem:[%s150 + $0xb8] sm:$0xff] %v1009
      %1074 = vst [vmem:[%s150 + $0xc0] sm:$0xff] %v1010
      %1075 = vst [vmem:[%s150 + $0xc8] sm:$0xff] %v1011
      %1076 = vst [vmem:[%s150 + $0xd0] sm:$0xff] %v1012
      %1077 = vst [vmem:[%s150 + $0xd8] sm:$0xff] %v1013
      %1078 = vst [vmem:[%s150 + $0xe0] sm:$0xff] %v1014
      %1079 = vst [vmem:[%s150 + $0xe8] sm:$0xff] %v1015
      %1080 = vst [vmem:[%s150 + $0xf0] sm:$0xff] %v1016
      %1081 = vst [vmem:[%s150 + $0xf8] sm:$0xff] %v1017
      %s1082 = smul.u32 16, %s13
      %p1083 = scmp.lt.s32.totalorder %s1082, 31
      %s1084 = scalar_select %p1083, %s1082, 31
      %s1085 = smul.addr %s1084, 4
      %s1086 = smul.addr %s1085, 4
      %s1087 = scalar_lea.vmem %s2, %s1086
      // Predicated region
      $region29: #{multilayer_gcn_forward.6} parent=27 // pred_check
        %p1088 = pneg %p78
      $region30: #{multilayer_gcn_forward.6} parent=27 // pred_check_branch
        %1090 = sbr.rel (%p1088) target = $region32
      $region31: #{multilayer_gcn_forward.6} parent=27 // pred_region
        %s1091 = smul.u32 16, %s13
      $region32: #{multilayer_gcn_forward.6} parent=27 // pred_fallthru
        _
    $region28: #{multilayer_gcn_forward.6} parent=5 // pred_fallthru
      _
    %p1092 = scmp.le.s32.totalorder 2, %s8
    // Predicated region
    $region33: #{multilayer_gcn_forward.6} parent=5 // pred_check
      %p1093 = pneg %p1092
    $region34: #{multilayer_gcn_forward.6} parent=5 // pred_check_branch
      %1095 = sbr.rel (%p1093) target = $region36
    $region35: #{multilayer_gcn_forward.6} parent=5 // pred_region
      %s1096 = ssub.s32 %s8, 2
      // Predicated region
      $region37: #{multilayer_gcn_forward.6} parent=35 // pred_check
        %p1097 = pneg %p84
      $region38: #{multilayer_gcn_forward.6} parent=35 // pred_check_branch
        %1099 = sbr.rel (%p1097) target = $region40
      $region39: #{multilayer_gcn_forward.6} parent=35 // pred_region
        %s1100 = smul.u32 16, %s14
        %p1101 = scmp.lt.s32.totalorder %s1100, 31
        %s1102 = scalar_select %p1101, %s1100, 31
        %s1103 = smul.addr %s1102, 4
        %s1104 = smul.addr %s1103, 4
        %s1105 = scalar_lea.vmem %s2, %s1104
      $region40: #{multilayer_gcn_forward.6} parent=35 // pred_fallthru
        _
    $region36: #{multilayer_gcn_forward.6} parent=5 // pred_fallthru
      _
  $region6: #{multilayer_gcn_forward.6} parent=0 // loop_footer
    %s12 = sadd.s32 1, %s8
  $region7: #{multilayer_gcn_forward.6} parent=0 // loop_footer_branch
    %7 = sbr.rel target = $region3
  $region8: #{multilayer_gcn_forward.6} parent=0 // loop_exit
    _

</llo_original>
